<compile_context>
chip_gen: v7x
topology: tpu7x:2x2x1
jax: 0.10.0
libtpu: 0.0.40
codegen_flags: <defaults>
</compile_context>

<pallas_src>
import functools

import jax
import jax.numpy as jnp
from jax.experimental import pallas as pl
from jax.experimental.pallas import tpu as pltpu


C_PAD = 128          # lane-dense padded channel width used between layers
BN_EPS = 1e-5


def _round_up(x, m):
    return (x + m - 1) // m * m


# ----------------------------------------------------------------------------
# Pallas kernels
# ----------------------------------------------------------------------------

def _conv_mm_kernel(a_ref, w_ref, scale_ref, shift_ref, o_ref, *, relu):
    """o = relu((A @ W) * scale + shift).  A, W are bf16 tiles; acc/epilogue f32."""
    acc = jnp.dot(a_ref[...], w_ref[...], preferred_element_type=jnp.float32)
    out = acc * scale_ref[...] + shift_ref[...]
    if relu:
        out = jnp.maximum(out, 0.0)
    o_ref[...] = out


def conv_matmul_bn(a, w, scale, shift, *, relu=True, tm=256):
    """(M, K)bf16 @ (K, N)bf16 with fused BN/bias/ReLU epilogue.  Single K block."""
    M, K = a.shape
    Kw, N = w.shape
    assert K == Kw and N % 128 == 0 and K % 8 == 0
    tm = min(tm, _round_up(M, 8))
    Mp = _round_up(M, tm)
    if Mp != M:
        a = jnp.pad(a, ((0, Mp - M), (0, 0)))

    out = pl.pallas_call(
        functools.partial(_conv_mm_kernel, relu=relu),
        out_shape=jax.ShapeDtypeStruct((Mp, N), jnp.float32),
        grid=(Mp // tm,),
        in_specs=[
            pl.BlockSpec((tm, K), lambda i: (i, 0)),   # A tile (rows of patches)
            pl.BlockSpec((K, N), lambda i: (0, 0)),    # full weight matrix
            pl.BlockSpec((1, N), lambda i: (0, 0)),    # folded BN scale
            pl.BlockSpec((1, N), lambda i: (0, 0)),    # folded BN shift (+bias)
        ],
        out_specs=pl.BlockSpec((tm, N), lambda i: (i, 0)),
        compiler_params=pltpu.CompilerParams(
            dimension_semantics=("parallel",)),
    )(a, w, scale, shift)
    return out if Mp == M else out[:M]


def _max4_kernel(a_ref, b_ref, c_ref, d_ref, o_ref):
    o_ref[...] = jnp.maximum(jnp.maximum(a_ref[...], b_ref[...]),
                             jnp.maximum(c_ref[...], d_ref[...]))


def maxpool_2x2(y):
    """2x2 / stride-2 max pool on NHWC via a 4-input elementwise-max kernel."""
    B, H, W, C = y.shape
    Hp, Wp = H // 2, W // 2
    M = B * Hp * Wp
    # The four views partition the input (non-overlapping windows): total read 1x.
    views = [y[:, dy::2, dx::2, :].reshape(M, C) for dy in (0, 1) for dx in (0, 1)]

    bm = min(512, _round_up(M, 8))
    Mp = _round_up(M, bm)
    if Mp != M:
        views = [jnp.pad(v, ((0, Mp - M), (0, 0))) for v in views]

    spec = pl.BlockSpec((bm, C), lambda i: (i, 0))
    out = pl.pallas_call(
        _max4_kernel,
        out_shape=jax.ShapeDtypeStruct((Mp, C), y.dtype),
        grid=(Mp // bm,),
        in_specs=[spec] * 4,
        out_specs=spec,
        compiler_params=pltpu.CompilerParams(
            dimension_semantics=("parallel",)),
    )(*views)
    if Mp != M:
        out = out[:M]
    return out.reshape(B, Hp, Wp, C)


# ----------------------------------------------------------------------------
# JAX glue: im2col + layer wrapper + full forward (Pallas path)
# ----------------------------------------------------------------------------

def _im2col(x, k):
    """Valid 5x5 / stride-1 patches.  x: (B, H, W, C) -> ((B*Ho*Wo, k*k*C), Ho, Wo)."""
    B, H, W, C = x.shape
    Ho, Wo = H - k + 1, W - k + 1
    cols = [x[:, di:di + Ho, dj:dj + Wo, :] for di in range(k) for dj in range(k)]
    a = jnp.concatenate(cols, axis=-1).reshape(B * Ho * Wo, k * k * C)
    return a, Ho, Wo


def _conv_layer(x, layer):
    """conv5x5 + folded BN + ReLU (Pallas matmul) followed by Pallas 2x2 maxpool."""
    B = x.shape[0]
    a, Ho, Wo = _im2col(x, 5)
    Kp = layer['w'].shape[0]
    if a.shape[1] != Kp:                       # layer1: K=25 -> pad to 128
        a = jnp.pad(a, ((0, 0), (0, Kp - a.shape[1])))
    out = conv_matmul_bn(a.astype(jnp.bfloat16), layer['w'],
                         layer['scale'], layer['shift'], relu=True)
    y = out.reshape(B, Ho, Wo, C_PAD)
    return maxpool_2x2(y)


def lenet_forward_pallas(x_nchw, packed):
    B = x_nchw.shape[0]
    # torch.mean(x, 1).view(B, 1, H, W)  ->  grayscale NHWC with C=1
    x = jnp.mean(x_nchw.astype(jnp.float32), axis=1)[..., None]
    x = _conv_layer(x, packed['layer1'])       # (B, 12, 12, 128)
    x = _conv_layer(x, packed['layer2'])       # (B,  4,  4, 128)
    feat = x[:, :, :, :48]                     # drop channel padding
    # PyTorch .view flattens NCHW order -> transpose before reshape.
    return jnp.transpose(feat, (0, 3, 1, 2)).reshape(B, 48 * 4 * 4)


# ----------------------------------------------------------------------------
# Parameters: deterministic init + one-time packing (pre-pad / pre-cast)
# ----------------------------------------------------------------------------

def init_params(key):
    ks = jax.random.split(key, 12)

    def conv_bn(kw, kb, kg, kbe, km, kv, kh, cin, cout):
        std = (2.0 / (kh * kh * cin)) ** 0.5
        return dict(
            w=jax.random.normal(kw, (kh, kh, cin, cout), jnp.float32) * std,  # HWIO
            b=0.05 * jax.random.normal(kb, (cout,), jnp.float32),
            gamma=1.0 + 0.1 * jax.random.normal(kg, (cout,), jnp.float32),
            beta=0.05 * jax.random.normal(kbe, (cout,), jnp.float32),
            mean=0.05 * jax.random.normal(km, (cout,), jnp.float32),
            var=jax.random.uniform(kv, (cout,), jnp.float32, minval=0.5, maxval=1.5),
        )

    return {'conv1': conv_bn(*ks[0:6], 5, 1, 32),
            'conv2': conv_bn(*ks[6:12], 5, 32, 48)}


def _fold_bn(p):
    s = p['gamma'] / jnp.sqrt(p['var'] + BN_EPS)
    sh = p['beta'] + (p['b'] - p['mean']) * s      # conv bias folded in as well
    return s, sh


def pack_params(params):
    """One-time weight packing: reshape to matmul layout, zero-pad K/N to
    MXU-friendly multiples, cast to bf16, fold BN+bias into (scale, shift)."""
    packed = {}

    # layer 1: cin = 1 (grayscale), K = 25 -> pad K to 128, cout 32 -> 128 lanes
    p = params['conv1']
    k, cin, cout = 5, 1, 32
    K = k * k * cin
    Kp = _round_up(K, 128)
    wmat = jnp.zeros((Kp, C_PAD), jnp.float32).at[:K, :cout].set(
        p['w'].reshape(K, cout))
    s, sh = _fold_bn(p)
    packed['layer1'] = dict(
        w=wmat.astype(jnp.bfloat16),
        scale=jnp.zeros((1, C_PAD), jnp.float32).at[0, :cout].set(s),
        shift=jnp.zeros((1, C_PAD), jnp.float32).at[0, :cout].set(sh))

    # layer 2: cin padded to 128 (matches layer-1 padded output), K = 25*128
    p = params['conv2']
    k, cin, cout = 5, 32, 48
    wfull = jnp.zeros((k, k, C_PAD, C_PAD), jnp.float32).at[:, :, :cin, :cout].set(p['w'])
    K2 = k * k * C_PAD
    s, sh = _fold_bn(p)
    packed['layer2'] = dict(
        w=wfull.reshape(K2, C_PAD).astype(jnp.bfloat16),
        scale=jnp.zeros((1, C_PAD), jnp.float32).at[0, :cout].set(s),
        shift=jnp.zeros((1, C_PAD), jnp.float32).at[0, :cout].set(sh))
    return packed


# ----------------------------------------------------------------------------
# Pure-JAX f32 reference (mirrors the PyTorch module, for a correctness check)
# ----------------------------------------------------------------------------

def _ref_layer(x, w, b, gamma, beta, mean, var):
    y = jax.lax.conv_general_dilated(
        x, w, window_strides=(1, 1), padding='VALID',
        dimension_numbers=('NHWC', 'HWIO', 'NHWC'),
        precision=jax.lax.Precision.HIGHEST)
    y = y + b[None, None, None, :]
    y = (y - mean) * (gamma / jnp.sqrt(var + BN_EPS)) + beta
    y = jnp.maximum(y, 0.0)
    return jax.lax.reduce_window(y, -jnp.inf, jax.lax.max,
                                 (1, 2, 2, 1), (1, 2, 2, 1), 'VALID')


def lenet_forward_ref(x_nchw, params):
    B = x_nchw.shape[0]
    x = jnp.mean(x_nchw.astype(jnp.float32), axis=1)[..., None]
    x = _ref_layer(x, **params['conv1'])
    x = _ref_layer(x, **params['conv2'])
    return jnp.transpose(x, (0, 3, 1, 2)).reshape(B, -1)


# ----------------------------------------------------------------------------
if __name__ == "__main__":
    key = jax.random.PRNGKey(0)
    kp, kx = jax.random.split(key)

    params = init_params(kp)
    packed = pack_params(params)

    # 28x28 spatial is implied by the module's hard-coded 48*4*4 flatten.
    x = jax.random.normal(kx, (2, 3, 28, 28), jnp.float32)

    fwd = jax.jit(lenet_forward_pallas)
    feat = jax.block_until_ready(fwd(x, packed))
    assert feat.shape == (2, 48 * 4 * 4), feat.shape

    ref = jax.block_until_ready(jax.jit(lenet_forward_ref)(x, params))
    ref_scale = max(float(jnp.max(jnp.abs(ref))), 1.0)
    err = float(jnp.max(jnp.abs(feat - ref)))
    if err > 2e-2 * ref_scale:     # bf16 MXU inputs vs f32 reference
        raise AssertionError(f"Pallas/ref mismatch: max_err={err}, scale={ref_scale}")

    print("KERNEL_OK")
</pallas_src>

<mosaic_0001>
module attributes {stable_mosaic.version = 11 : i64} {
  func.func @_conv_mm_kernel(%arg0: i32, %arg1: memref<256x128xbf16, #tpu.memory_space<vmem>>, %arg2: memref<128x128xbf16, #tpu.memory_space<vmem>>, %arg3: memref<1x128xf32, #tpu.memory_space<vmem>>, %arg4: memref<1x128xf32, #tpu.memory_space<vmem>>, %arg5: memref<256x128xf32, #tpu.memory_space<vmem>>) attributes {dimension_semantics = [#tpu.dimension_semantics<parallel>], iteration_bounds = array<i64: 5>, scalar_prefetch = 0 : i64, scratch_operands = 0 : i64, tpu.core_type = #tpu.core_type<tc>, window_params = [{transform_indices = @transform_0, window_bounds = array<i64: 256, 128>}, {pipeline_mode = #tpu.pipeline_mode<synchronous>, transform_indices = @transform_1, window_bounds = array<i64: 128, 128>}, {pipeline_mode = #tpu.pipeline_mode<synchronous>, transform_indices = @transform_2, window_bounds = array<i64: 1, 128>}, {pipeline_mode = #tpu.pipeline_mode<synchronous>, transform_indices = @transform_3, window_bounds = array<i64: 1, 128>}, {transform_indices = @transform_4, window_bounds = array<i64: 256, 128>}]} {
    %c0 = arith.constant 0 : index
    %c0_0 = arith.constant 0 : index
    %0 = vector.load %arg1[%c0, %c0_0] : memref<256x128xbf16, #tpu.memory_space<vmem>>, vector<256x128xbf16>
    %c0_1 = arith.constant 0 : index
    %c0_2 = arith.constant 0 : index
    %1 = vector.load %arg2[%c0_1, %c0_2] : memref<128x128xbf16, #tpu.memory_space<vmem>>, vector<128x128xbf16>
    %cst = arith.constant dense<0.000000e+00> : vector<256x128xf32>
    %2 = tpu.matmul %0, %1, %cst {dimension_numbers = #tpu.dot_dimension_numbers<[1], [0], [0], [1], [0, 0, 1, 1], [], []>} : vector<256x128xbf16>, vector<128x128xbf16>, vector<256x128xf32> -> vector<256x128xf32>
    %c0_3 = arith.constant 0 : index
    %c0_4 = arith.constant 0 : index
    %3 = vector.load %arg3[%c0_3, %c0_4] : memref<1x128xf32, #tpu.memory_space<vmem>>, vector<1x128xf32>
    %4 = vector.broadcast %3 : vector<1x128xf32> to vector<256x128xf32>
    %5 = arith.mulf %2, %4 : vector<256x128xf32>
    %c0_5 = arith.constant 0 : index
    %c0_6 = arith.constant 0 : index
    %6 = vector.load %arg4[%c0_5, %c0_6] : memref<1x128xf32, #tpu.memory_space<vmem>>, vector<1x128xf32>
    %7 = vector.broadcast %6 : vector<1x128xf32> to vector<256x128xf32>
    %8 = arith.addf %5, %7 : vector<256x128xf32>
    %cst_7 = arith.constant 0.000000e+00 : f32
    %9 = vector.broadcast %cst_7 : f32 to vector<256x128xf32>
    %10 = arith.maximumf %8, %9 : vector<256x128xf32>
    %c0_8 = arith.constant 0 : index
    %c0_9 = arith.constant 0 : index
    %11 = vector.load %arg5[%c0_8, %c0_9] : memref<256x128xf32, #tpu.memory_space<vmem>>, vector<256x128xf32>
    tpu.vector_store %arg5[%c0_8, %c0_9], %10 {strides = array<i32>} : memref<256x128xf32, #tpu.memory_space<vmem>>, vector<256x128xf32>,
    return
  }
  func.func @transform_0(%arg0: i32) -> (i32, i32) {
    %c0_i32 = arith.constant 0 : i32
    %c0_i32_0 = arith.constant 0 : i32
    return %arg0, %c0_i32 : i32, i32
  }
  func.func @transform_1(%arg0: i32) -> (i32, i32) {
    %c0_i32 = arith.constant 0 : i32
    %c0_i32_0 = arith.constant 0 : i32
    %c0_i32_1 = arith.constant 0 : i32
    return %c0_i32, %c0_i32_0 : i32, i32
  }
  func.func @transform_2(%arg0: i32) -> (i32, i32) {
    %c0_i32 = arith.constant 0 : i32
    %c0_i32_0 = arith.constant 0 : i32
    %c0_i32_1 = arith.constant 0 : i32
    return %c0_i32, %c0_i32_0 : i32, i32
  }
  func.func @transform_3(%arg0: i32) -> (i32, i32) {
    %c0_i32 = arith.constant 0 : i32
    %c0_i32_0 = arith.constant 0 : i32
    %c0_i32_1 = arith.constant 0 : i32
    return %c0_i32, %c0_i32_0 : i32, i32
  }
  func.func @transform_4(%arg0: i32) -> (i32, i32) {
    %c0_i32 = arith.constant 0 : i32
    %c0_i32_0 = arith.constant 0 : i32
    return %arg0, %c0_i32 : i32, i32
  }
}

module attributes {stable_mosaic.version = 11 : i64} {
  func.func @_max4_kernel(%arg0: i32, %arg1: memref<288x128xf32, #tpu.memory_space<vmem>>, %arg2: memref<288x128xf32, #tpu.memory_space<vmem>>, %arg3: memref<288x128xf32, #tpu.memory_space<vmem>>, %arg4: memref<288x128xf32, #tpu.memory_space<vmem>>, %arg5: memref<288x128xf32, #tpu.memory_space<vmem>>) attributes {dimension_semantics = [#tpu.dimension_semantics<parallel>], iteration_bounds = array<i64: 1>, scalar_prefetch = 0 : i64, scratch_operands = 0 : i64, tpu.core_type = #tpu.core_type<tc>, window_params = [{transform_indices = @transform_0, window_bounds = array<i64: 288, 128>}, {transform_indices = @transform_1, window_bounds = array<i64: 288, 128>}, {transform_indices = @transform_2, window_bounds = array<i64: 288, 128>}, {transform_indices = @transform_3, window_bounds = array<i64: 288, 128>}, {transform_indices = @transform_4, window_bounds = array<i64: 288, 128>}]} {
    %c0 = arith.constant 0 : index
    %c0_0 = arith.constant 0 : index
    %0 = vector.load %arg1[%c0, %c0_0] : memref<288x128xf32, #tpu.memory_space<vmem>>, vector<288x128xf32>
    %c0_1 = arith.constant 0 : index
    %c0_2 = arith.constant 0 : index
    %1 = vector.load %arg2[%c0_1, %c0_2] : memref<288x128xf32, #tpu.memory_space<vmem>>, vector<288x128xf32>
    %2 = arith.maximumf %0, %1 : vector<288x128xf32>
    %c0_3 = arith.constant 0 : index
    %c0_4 = arith.constant 0 : index
    %3 = vector.load %arg3[%c0_3, %c0_4] : memref<288x128xf32, #tpu.memory_space<vmem>>, vector<288x128xf32>
    %c0_5 = arith.constant 0 : index
    %c0_6 = arith.constant 0 : index
    %4 = vector.load %arg4[%c0_5, %c0_6] : memref<288x128xf32, #tpu.memory_space<vmem>>, vector<288x128xf32>
    %5 = arith.maximumf %3, %4 : vector<288x128xf32>
    %6 = arith.maximumf %2, %5 : vector<288x128xf32>
    %c0_7 = arith.constant 0 : index
    %c0_8 = arith.constant 0 : index
    %7 = vector.load %arg5[%c0_7, %c0_8] : memref<288x128xf32, #tpu.memory_space<vmem>>, vector<288x128xf32>
    tpu.vector_store %arg5[%c0_7, %c0_8], %6 {strides = array<i32>} : memref<288x128xf32, #tpu.memory_space<vmem>>, vector<288x128xf32>,
    return
  }
  func.func @transform_0(%arg0: i32) -> (i32, i32) {
    %c0_i32 = arith.constant 0 : i32
    %c0_i32_0 = arith.constant 0 : i32
    return %arg0, %c0_i32 : i32, i32
  }
  func.func @transform_1(%arg0: i32) -> (i32, i32) {
    %c0_i32 = arith.constant 0 : i32
    %c0_i32_0 = arith.constant 0 : i32
    return %arg0, %c0_i32 : i32, i32
  }
  func.func @transform_2(%arg0: i32) -> (i32, i32) {
    %c0_i32 = arith.constant 0 : i32
    %c0_i32_0 = arith.constant 0 : i32
    return %arg0, %c0_i32 : i32, i32
  }
  func.func @transform_3(%arg0: i32) -> (i32, i32) {
    %c0_i32 = arith.constant 0 : i32
    %c0_i32_0 = arith.constant 0 : i32
    return %arg0, %c0_i32 : i32, i32
  }
  func.func @transform_4(%arg0: i32) -> (i32, i32) {
    %c0_i32 = arith.constant 0 : i32
    %c0_i32_0 = arith.constant 0 : i32
    return %arg0, %c0_i32 : i32, i32
  }
}

module attributes {stable_mosaic.version = 11 : i64} {
  func.func @_max4_kernel(%arg0: i32, %arg1: memref<32x128xf32, #tpu.memory_space<vmem>>, %arg2: memref<32x128xf32, #tpu.memory_space<vmem>>, %arg3: memref<32x128xf32, #tpu.memory_space<vmem>>, %arg4: memref<32x128xf32, #tpu.memory_space<vmem>>, %arg5: memref<32x128xf32, #tpu.memory_space<vmem>>) attributes {dimension_semantics = [#tpu.dimension_semantics<parallel>], iteration_bounds = array<i64: 1>, scalar_prefetch = 0 : i64, scratch_operands = 0 : i64, tpu.core_type = #tpu.core_type<tc>, window_params = [{transform_indices = @transform_0, window_bounds = array<i64: 32, 128>}, {transform_indices = @transform_1, window_bounds = array<i64: 32, 128>}, {transform_indices = @transform_2, window_bounds = array<i64: 32, 128>}, {transform_indices = @transform_3, window_bounds = array<i64: 32, 128>}, {transform_indices = @transform_4, window_bounds = array<i64: 32, 128>}]} {
    %c0 = arith.constant 0 : index
    %c0_0 = arith.constant 0 : index
    %0 = vector.load %arg1[%c0, %c0_0] : memref<32x128xf32, #tpu.memory_space<vmem>>, vector<32x128xf32>
    %c0_1 = arith.constant 0 : index
    %c0_2 = arith.constant 0 : index
    %1 = vector.load %arg2[%c0_1, %c0_2] : memref<32x128xf32, #tpu.memory_space<vmem>>, vector<32x128xf32>
    %2 = arith.maximumf %0, %1 : vector<32x128xf32>
    %c0_3 = arith.constant 0 : index
    %c0_4 = arith.constant 0 : index
    %3 = vector.load %arg3[%c0_3, %c0_4] : memref<32x128xf32, #tpu.memory_space<vmem>>, vector<32x128xf32>
    %c0_5 = arith.constant 0 : index
    %c0_6 = arith.constant 0 : index
    %4 = vector.load %arg4[%c0_5, %c0_6] : memref<32x128xf32, #tpu.memory_space<vmem>>, vector<32x128xf32>
    %5 = arith.maximumf %3, %4 : vector<32x128xf32>
    %6 = arith.maximumf %2, %5 : vector<32x128xf32>
    %c0_7 = arith.constant 0 : index
    %c0_8 = arith.constant 0 : index
    %7 = vector.load %arg5[%c0_7, %c0_8] : memref<32x128xf32, #tpu.memory_space<vmem>>, vector<32x128xf32>
    tpu.vector_store %arg5[%c0_7, %c0_8], %6 {strides = array<i32>} : memref<32x128xf32, #tpu.memory_space<vmem>>, vector<32x128xf32>,
    return
  }
  func.func @transform_0(%arg0: i32) -> (i32, i32) {
    %c0_i32 = arith.constant 0 : i32
    %c0_i32_0 = arith.constant 0 : i32
    return %arg0, %c0_i32 : i32, i32
  }
  func.func @transform_1(%arg0: i32) -> (i32, i32) {
    %c0_i32 = arith.constant 0 : i32
    %c0_i32_0 = arith.constant 0 : i32
    return %arg0, %c0_i32 : i32, i32
  }
  func.func @transform_2(%arg0: i32) -> (i32, i32) {
    %c0_i32 = arith.constant 0 : i32
    %c0_i32_0 = arith.constant 0 : i32
    return %arg0, %c0_i32 : i32, i32
  }
  func.func @transform_3(%arg0: i32) -> (i32, i32) {
    %c0_i32 = arith.constant 0 : i32
    %c0_i32_0 = arith.constant 0 : i32
    return %arg0, %c0_i32 : i32, i32
  }
  func.func @transform_4(%arg0: i32) -> (i32, i32) {
    %c0_i32 = arith.constant 0 : i32
    %c0_i32_0 = arith.constant 0 : i32
    return %arg0, %c0_i32 : i32, i32
  }
}

module attributes {stable_mosaic.version = 11 : i64} {
  func.func @_conv_mm_kernel(%arg0: i32, %arg1: memref<128x3200xbf16, #tpu.memory_space<vmem>>, %arg2: memref<3200x128xbf16, #tpu.memory_space<vmem>>, %arg3: memref<1x128xf32, #tpu.memory_space<vmem>>, %arg4: memref<1x128xf32, #tpu.memory_space<vmem>>, %arg5: memref<128x128xf32, #tpu.memory_space<vmem>>) attributes {dimension_semantics = [#tpu.dimension_semantics<parallel>], iteration_bounds = array<i64: 1>, scalar_prefetch = 0 : i64, scratch_operands = 0 : i64, tpu.core_type = #tpu.core_type<tc>, window_params = [{transform_indices = @transform_0, window_bounds = array<i64: 128, 3200>}, {pipeline_mode = #tpu.pipeline_mode<synchronous>, transform_indices = @transform_1, window_bounds = array<i64: 3200, 128>}, {pipeline_mode = #tpu.pipeline_mode<synchronous>, transform_indices = @transform_2, window_bounds = array<i64: 1, 128>}, {pipeline_mode = #tpu.pipeline_mode<synchronous>, transform_indices = @transform_3, window_bounds = array<i64: 1, 128>}, {transform_indices = @transform_4, window_bounds = array<i64: 128, 128>}]} {
    %c0 = arith.constant 0 : index
    %c0_0 = arith.constant 0 : index
    %0 = vector.load %arg1[%c0, %c0_0] : memref<128x3200xbf16, #tpu.memory_space<vmem>>, vector<128x3200xbf16>
    %c0_1 = arith.constant 0 : index
    %c0_2 = arith.constant 0 : index
    %1 = vector.load %arg2[%c0_1, %c0_2] : memref<3200x128xbf16, #tpu.memory_space<vmem>>, vector<3200x128xbf16>
    %cst = arith.constant dense<0.000000e+00> : vector<128x128xf32>
    %2 = tpu.matmul %0, %1, %cst {dimension_numbers = #tpu.dot_dimension_numbers<[1], [0], [0], [1], [0, 0, 1, 1], [], []>} : vector<128x3200xbf16>, vector<3200x128xbf16>, vector<128x128xf32> -> vector<128x128xf32>
    %c0_3 = arith.constant 0 : index
    %c0_4 = arith.constant 0 : index
    %3 = vector.load %arg3[%c0_3, %c0_4] : memref<1x128xf32, #tpu.memory_space<vmem>>, vector<1x128xf32>
    %4 = vector.broadcast %3 : vector<1x128xf32> to vector<128x128xf32>
    %5 = arith.mulf %2, %4 : vector<128x128xf32>
    %c0_5 = arith.constant 0 : index
    %c0_6 = arith.constant 0 : index
    %6 = vector.load %arg4[%c0_5, %c0_6] : memref<1x128xf32, #tpu.memory_space<vmem>>, vector<1x128xf32>
    %7 = vector.broadcast %6 : vector<1x128xf32> to vector<128x128xf32>
    %8 = arith.addf %5, %7 : vector<128x128xf32>
    %cst_7 = arith.constant 0.000000e+00 : f32
    %9 = vector.broadcast %cst_7 : f32 to vector<128x128xf32>
    %10 = arith.maximumf %8, %9 : vector<128x128xf32>
    %c0_8 = arith.constant 0 : index
    %c0_9 = arith.constant 0 : index
    %11 = vector.load %arg5[%c0_8, %c0_9] : memref<128x128xf32, #tpu.memory_space<vmem>>, vector<128x128xf32>
    tpu.vector_store %arg5[%c0_8, %c0_9], %10 {strides = array<i32>} : memref<128x128xf32, #tpu.memory_space<vmem>>, vector<128x128xf32>,
    return
  }
  func.func @transform_0(%arg0: i32) -> (i32, i32) {
    %c0_i32 = arith.constant 0 : i32
    %c0_i32_0 = arith.constant 0 : i32
    return %arg0, %c0_i32 : i32, i32
  }
  func.func @transform_1(%arg0: i32) -> (i32, i32) {
    %c0_i32 = arith.constant 0 : i32
    %c0_i32_0 = arith.constant 0 : i32
    %c0_i32_1 = arith.constant 0 : i32
    return %c0_i32, %c0_i32_0 : i32, i32
  }
  func.func @transform_2(%arg0: i32) -> (i32, i32) {
    %c0_i32 = arith.constant 0 : i32
    %c0_i32_0 = arith.constant 0 : i32
    %c0_i32_1 = arith.constant 0 : i32
    return %c0_i32, %c0_i32_0 : i32, i32
  }
  func.func @transform_3(%arg0: i32) -> (i32, i32) {
    %c0_i32 = arith.constant 0 : i32
    %c0_i32_0 = arith.constant 0 : i32
    %c0_i32_1 = arith.constant 0 : i32
    return %c0_i32, %c0_i32_0 : i32, i32
  }
  func.func @transform_4(%arg0: i32) -> (i32, i32) {
    %c0_i32 = arith.constant 0 : i32
    %c0_i32_0 = arith.constant 0 : i32
    return %arg0, %c0_i32 : i32, i32
  }
}

</mosaic_0001>

<llo_original>
// kernel: lenet_forward_pallas.4
$region0: #{lenet_forward_pallas.4}
  #allocation0 [shape = 'u32[]', space=smem, size = 0x4, offset = 0x4, fixed_abs, tag = 'smem constant byte address 0x4 - core index']
  #allocation1 [shape = 'u32[144,128]{1,0:T(1,128)}', space=vmem, size = 0x12000, scoped, tag = 'internal scratch']
  %s0 = inlined_call_operand.vmem [shape: bf16[1280,128], index: 0, kind: input, shape index: {}]
  %s1 = inlined_call_operand.vmem [shape: bf16[128,128], index: 1, kind: input, shape index: {}]
  %s2 = inlined_call_operand.vmem [shape: f32[1,128], index: 2, kind: input, shape index: {}]
  %s3 = inlined_call_operand.vmem [shape: f32[1,128], index: 3, kind: input, shape index: {}]
  %s4 = inlined_call_operand.vmem [shape: f32[1280,128], index: 4, kind: output, shape index: {}]
  %s5 = sld [smem:[#allocation0]]
  $region49: #{lenet_forward_pallas.4} parent=0
    _
  %s7 = ssub.s32 1, %s5
  %s8 = scalar_select 0, %s7, %s5
  loop: start=0, step=1, limit=7
  $region2: #{lenet_forward_pallas.4} parent=0 // loop_pre_header
    _
  $region3: #{lenet_forward_pallas.4} parent=0 // loop_header
    %s10 = sphi 0, %s14
    %p11 = scmp.ge.s32.totalorder %s10, 7
    %s20 = sphi 0, %s22
    %s23 = sphi 0, %s20
    %s24 = sphi 0, %s23
    %s40 = sphi 0, %s24
    %s44 = sphi 0, %s44
    %s46 = sphi 0, %s44
    %s47 = sphi 0, %s46
    %s61 = sphi 0, %s47
    %s65 = sphi 0, %s65
    %s67 = sphi 0, %s65
    %s68 = sphi 0, %s67
    %s82 = sphi 0, %s68
    %s86 = sphi 0, %s86
    %s88 = sphi 0, %s86
    %s89 = sphi 0, %s88
    %s103 = sphi 0, %s89
    %s109 = sphi 0, %s111
    %s112 = sphi 0, %s109
    %s113 = sphi 0, %s112
    %s129 = sphi 0, %s113
  $region4: #{lenet_forward_pallas.4} parent=0 // loop_header_branch
    %13 = sbr.rel (%p11) target = $region8
  $region5: #{lenet_forward_pallas.4} parent=0 // loop_body
    %s15 = ssub.s32 %s10, 1
    %s16 = ssub.s32 %s10, 2
    %s17 = sadd.s32 %s10, 1
    %s18 = ssub.s32 %s10, %s17
    %p19 = scmp.eq.s32.totalorder %s18, 0
    %s21 = sadd.s32 %s20, 1
    %s22 = scalar_select %p19, %s20, %s21
    %p25 = pneg %p19
    %p26 = scmp.eq.s32.totalorder %s10, 4
    %p27 = por %p25, %p26
    %p28 = scmp.ne.s32.totalorder %s20, %s23
    %p29 = scmp.eq.s32.totalorder %s10, 0
    %p30 = por %p28, %p29
    %p31 = scmp.ne.s32.totalorder %s20, %s23
    %p32 = scmp.eq.s32.totalorder %s15, 4
    %p33 = por %p31, %p32
    %p34 = scmp.ne.s32.totalorder %s23, %s24
    %p35 = scmp.eq.s32.totalorder %s15, 0
    %p36 = por %p34, %p35
    %p37 = scmp.ne.s32.totalorder %s23, %s24
    %p38 = scmp.eq.s32.totalorder %s16, 4
    %p39 = por %p37, %p38
    %p41 = scmp.ne.s32.totalorder %s24, %s40
    %p42 = scmp.eq.s32.totalorder %s16, 0
    %p43 = por %p41, %p42
    %s45 = sadd.s32 %s44, 1
    %p48 = scmp.eq.s32.totalorder %s10, 4
    %p49 = scmp.ne.s32.totalorder %s44, %s46
    %p50 = scmp.eq.s32.totalorder %s10, 0
    %p51 = por %p49, %p50
    %p52 = scmp.ne.s32.totalorder %s44, %s46
    %p53 = scmp.eq.s32.totalorder %s15, 4
    %p54 = por %p52, %p53
    %p55 = scmp.ne.s32.totalorder %s46, %s47
    %p56 = scmp.eq.s32.totalorder %s15, 0
    %p57 = por %p55, %p56
    %p58 = scmp.ne.s32.totalorder %s46, %s47
    %p59 = scmp.eq.s32.totalorder %s16, 4
    %p60 = por %p58, %p59
    %p62 = scmp.ne.s32.totalorder %s47, %s61
    %p63 = scmp.eq.s32.totalorder %s16, 0
    %p64 = por %p62, %p63
    %s66 = sadd.s32 %s65, 1
    %p69 = scmp.eq.s32.totalorder %s10, 4
    %p70 = scmp.ne.s32.totalorder %s65, %s67
    %p71 = scmp.eq.s32.totalorder %s10, 0
    %p72 = por %p70, %p71
    %p73 = scmp.ne.s32.totalorder %s65, %s67
    %p74 = scmp.eq.s32.totalorder %s15, 4
    %p75 = por %p73, %p74
    %p76 = scmp.ne.s32.totalorder %s67, %s68
    %p77 = scmp.eq.s32.totalorder %s15, 0
    %p78 = por %p76, %p77
    %p79 = scmp.ne.s32.totalorder %s67, %s68
    %p80 = scmp.eq.s32.totalorder %s16, 4
    %p81 = por %p79, %p80
    %p83 = scmp.ne.s32.totalorder %s68, %s82
    %p84 = scmp.eq.s32.totalorder %s16, 0
    %p85 = por %p83, %p84
    %s87 = sadd.s32 %s86, 1
    %p90 = scmp.eq.s32.totalorder %s10, 4
    %p91 = scmp.ne.s32.totalorder %s86, %s88
    %p92 = scmp.eq.s32.totalorder %s10, 0
    %p93 = por %p91, %p92
    %p94 = scmp.ne.s32.totalorder %s86, %s88
    %p95 = scmp.eq.s32.totalorder %s15, 4
    %p96 = por %p94, %p95
    %p97 = scmp.ne.s32.totalorder %s88, %s89
    %p98 = scmp.eq.s32.totalorder %s15, 0
    %p99 = por %p97, %p98
    %p100 = scmp.ne.s32.totalorder %s88, %s89
    %p101 = scmp.eq.s32.totalorder %s16, 4
    %p102 = por %p100, %p101
    %p104 = scmp.ne.s32.totalorder %s89, %s103
    %p105 = scmp.eq.s32.totalorder %s16, 0
    %p106 = por %p104, %p105
    %s107 = ssub.s32 %s10, %s17
    %p108 = scmp.eq.s32.totalorder %s107, 0
    %s110 = sadd.s32 %s109, 1
    %s111 = scalar_select %p108, %s109, %s110
    %p114 = pneg %p108
    %p115 = scmp.eq.s32.totalorder %s10, 4
    %p116 = por %p114, %p115
    %p117 = scmp.ne.s32.totalorder %s109, %s112
    %p118 = scmp.eq.s32.totalorder %s10, 0
    %p119 = por %p117, %p118
    %p120 = scmp.ne.s32.totalorder %s109, %s112
    %p121 = scmp.eq.s32.totalorder %s15, 4
    %p122 = por %p120, %p121
    %p123 = scmp.ne.s32.totalorder %s112, %s113
    %p124 = scmp.eq.s32.totalorder %s15, 0
    %p125 = por %p123, %p124
    %p126 = scmp.ne.s32.totalorder %s112, %s113
    %p127 = scmp.eq.s32.totalorder %s16, 4
    %p128 = por %p126, %p127
    %p130 = scmp.ne.s32.totalorder %s113, %s129
    %p131 = scmp.eq.s32.totalorder %s16, 0
    %p132 = por %p130, %p131
    %p133 = scmp.le.s32.totalorder 1, %s10
    %p134 = scmp.lt.s32.totalorder %s10, 6
    %p135 = pnand %p133, %p134
    %p136 = pneg %p135
    // Predicated region
    $region9: #{lenet_forward_pallas.4} parent=5 // pred_check
      _
    $region10: #{lenet_forward_pallas.4} parent=5 // pred_check_branch
      %138 = sbr.rel (%p135) target = $region12
    $region11: #{lenet_forward_pallas.4} parent=5 // pred_region
      %s139 = ssub.s32 %s10, 1
      // Predicated region
      $region13: #{lenet_forward_pallas.4} parent=11 // pred_check
        %p140 = pneg %p57
      $region14: #{lenet_forward_pallas.4} parent=11 // pred_check_branch
        %142 = sbr.rel (%p140) target = $region16
      $region15: #{lenet_forward_pallas.4} parent=11 // pred_region
        _
      $region16: #{lenet_forward_pallas.4} parent=11 // pred_fallthru
        _
      // Predicated region
      $region17: #{lenet_forward_pallas.4} parent=11 // pred_check
        %p143 = pneg %p78
      $region18: #{lenet_forward_pallas.4} parent=11 // pred_check_branch
        %145 = sbr.rel (%p143) target = $region20
      $region19: #{lenet_forward_pallas.4} parent=11 // pred_region
        _
      $region20: #{lenet_forward_pallas.4} parent=11 // pred_fallthru
        _
      // Predicated region
      $region21: #{lenet_forward_pallas.4} parent=11 // pred_check
        %p146 = pneg %p99
      $region22: #{lenet_forward_pallas.4} parent=11 // pred_check_branch
        %148 = sbr.rel (%p146) target = $region24
      $region23: #{lenet_forward_pallas.4} parent=11 // pred_region
        _
      $region24: #{lenet_forward_pallas.4} parent=11 // pred_fallthru
        _
    $region12: #{lenet_forward_pallas.4} parent=5 // pred_fallthru
      _
    %p149 = scmp.lt.s32.totalorder %s10, 5
    // Predicated region
    $region25: #{lenet_forward_pallas.4} parent=5 // pred_check
      %p150 = pneg %p149
    $region26: #{lenet_forward_pallas.4} parent=5 // pred_check_branch
      %152 = sbr.rel (%p150) target = $region28
    $region27: #{lenet_forward_pallas.4} parent=5 // pred_region
      // Predicated region
      $region29: #{lenet_forward_pallas.4} parent=27 // pred_check
        %p153 = pneg %p30
      $region30: #{lenet_forward_pallas.4} parent=27 // pred_check_branch
        %155 = sbr.rel (%p153) target = $region32
      $region31: #{lenet_forward_pallas.4} parent=27 // pred_region
        %s156 = smul.u32 32, %s10
        %p157 = scmp.lt.s32.totalorder %s156, 159
        %s158 = scalar_select %p157, %s156, 159
        %s159 = smul.addr %s158, 4
        %s160 = scalar_lea.vmem %s0, %s159
        %s161 = smul.u32 32, %s10
      $region32: #{lenet_forward_pallas.4} parent=27 // pred_fallthru
        _
    $region28: #{lenet_forward_pallas.4} parent=5 // pred_fallthru
      _
    %p162 = scmp.le.s32.totalorder 1, %s10
    %p163 = scmp.lt.s32.totalorder %s10, 6
    %p164 = pnand %p162, %p163
    %p165 = pneg %p164
    // Predicated region
    $region33: #{lenet_forward_pallas.4} parent=5 // pred_check
      _
    $region34: #{lenet_forward_pallas.4} parent=5 // pred_check_branch
      %167 = sbr.rel (%p164) target = $region36
    $region35: #{lenet_forward_pallas.4} parent=5 // pred_region
      %s168 = ssub.s32 %s10, 1
      %s169 = smul.u32 32, %s15
      %p170 = scmp.lt.s32.totalorder %s169, 159
      %s171 = scalar_select %p170, %s169, 159
      %s172 = smul.addr %s171, 4
      %s173 = scalar_lea.vmem %s0, %s172
      %p174 = pneg %p36
      %p175 = pneg %p33
      %p176 = pneg %p57
      %p177 = pneg %p54
      %p178 = pneg %p78
      %p179 = pneg %p75
      %p180 = pneg %p99
      %p181 = pneg %p96
      %p182 = pneg %p125
      %p183 = pneg %p122
      %s184 = smul.u32 32, %s15
      %p185 = scmp.lt.s32.totalorder %s184, 159
      %s186 = scalar_select %p185, %s184, 159
      %s187 = smul.addr %s186, 8
      %s188 = scalar_lea.vmem %s4, %s187
      %s189 = smul.u32 32, %s15
      %p190 = scmp.lt.s32.totalorder %s189, 159
      %s191 = scalar_select %p190, %s189, 159
      %s192 = smul.addr %s191, 4
      %s193 = scalar_lea.vmem %s0, %s192
      %s194 = smul.u32 32, %s15
      %s195 = smul.u32 32, %s15
      %p196 = scmp.lt.s32.totalorder %s195, 159
      %s197 = scalar_select %p196, %s195, 159
      %s198 = smul.addr %s197, 8
      %s199 = scalar_lea.vmem %s4, %s198
      %s200 = smul.u32 32, %s15
      %v202 = vld [vmem:[%s193] sm:$0xf]
      %v203 = vld [vmem:[%s193 + $0x4] sm:$0xf]
      %v204 = vld [vmem:[%s193 + $0x8] sm:$0xf]
      %v205 = vld [vmem:[%s193 + $0xc] sm:$0xf]
      %v206 = vld [vmem:[%s193 + $0x10] sm:$0xf]
      %v207 = vld [vmem:[%s193 + $0x14] sm:$0xf]
      %v208 = vld [vmem:[%s193 + $0x18] sm:$0xf]
      %v209 = vld [vmem:[%s193 + $0x1c] sm:$0xf]
      %v210 = vld [vmem:[%s193 + $0x20] sm:$0xf]
      %v211 = vld [vmem:[%s193 + $0x24] sm:$0xf]
      %v212 = vld [vmem:[%s193 + $0x28] sm:$0xf]
      %v213 = vld [vmem:[%s193 + $0x2c] sm:$0xf]
      %v214 = vld [vmem:[%s193 + $0x30] sm:$0xf]
      %v215 = vld [vmem:[%s193 + $0x34] sm:$0xf]
      %v216 = vld [vmem:[%s193 + $0x38] sm:$0xf]
      %v217 = vld [vmem:[%s193 + $0x3c] sm:$0xf]
      %v218 = vld [vmem:[%s193 + $0x40] sm:$0xf]
      %v219 = vld [vmem:[%s193 + $0x44] sm:$0xf]
      %v220 = vld [vmem:[%s193 + $0x48] sm:$0xf]
      %v221 = vld [vmem:[%s193 + $0x4c] sm:$0xf]
      %v222 = vld [vmem:[%s193 + $0x50] sm:$0xf]
      %v223 = vld [vmem:[%s193 + $0x54] sm:$0xf]
      %v224 = vld [vmem:[%s193 + $0x58] sm:$0xf]
      %v225 = vld [vmem:[%s193 + $0x5c] sm:$0xf]
      %v226 = vld [vmem:[%s193 + $0x60] sm:$0xf]
      %v227 = vld [vmem:[%s193 + $0x64] sm:$0xf]
      %v228 = vld [vmem:[%s193 + $0x68] sm:$0xf]
      %v229 = vld [vmem:[%s193 + $0x6c] sm:$0xf]
      %v230 = vld [vmem:[%s193 + $0x70] sm:$0xf]
      %v231 = vld [vmem:[%s193 + $0x74] sm:$0xf]
      %v232 = vld [vmem:[%s193 + $0x78] sm:$0xf]
      %v233 = vld [vmem:[%s193 + $0x7c] sm:$0xf]
      %v234 = vld [vmem:[%s1] sm:$0xf]
      %v235 = vld [vmem:[%s1 + $0x4] sm:$0xf]
      %v236 = vld [vmem:[%s1 + $0x8] sm:$0xf]
      %v237 = vld [vmem:[%s1 + $0xc] sm:$0xf]
      %v238 = vld [vmem:[%s1 + $0x10] sm:$0xf]
      %v239 = vld [vmem:[%s1 + $0x14] sm:$0xf]
      %v240 = vld [vmem:[%s1 + $0x18] sm:$0xf]
      %v241 = vld [vmem:[%s1 + $0x1c] sm:$0xf]
      %v242 = vld [vmem:[%s1 + $0x20] sm:$0xf]
      %v243 = vld [vmem:[%s1 + $0x24] sm:$0xf]
      %v244 = vld [vmem:[%s1 + $0x28] sm:$0xf]
      %v245 = vld [vmem:[%s1 + $0x2c] sm:$0xf]
      %v246 = vld [vmem:[%s1 + $0x30] sm:$0xf]
      %v247 = vld [vmem:[%s1 + $0x34] sm:$0xf]
      %v248 = vld [vmem:[%s1 + $0x38] sm:$0xf]
      %v249 = vld [vmem:[%s1 + $0x3c] sm:$0xf]
      %v282 = vunpack.c.l.b16 %v202
      %v283 = vunpack.c.l.b16 %v203
      %v284 = vunpack.c.l.b16 %v204
      %v285 = vunpack.c.l.b16 %v205
      %v286 = vunpack.c.l.b16 %v206
      %v287 = vunpack.c.l.b16 %v207
      %v288 = vunpack.c.l.b16 %v208
      %v289 = vunpack.c.l.b16 %v209
      %v290 = vunpack.c.l.b16 %v210
      %v291 = vunpack.c.l.b16 %v211
      %v292 = vunpack.c.l.b16 %v212
      %v293 = vunpack.c.l.b16 %v213
      %v294 = vunpack.c.l.b16 %v214
      %v295 = vunpack.c.l.b16 %v215
      %v296 = vunpack.c.l.b16 %v216
      %v297 = vunpack.c.l.b16 %v217
      %v298 = vunpack.c.l.b16 %v218
      %v299 = vunpack.c.l.b16 %v219
      %v300 = vunpack.c.l.b16 %v220
      %v301 = vunpack.c.l.b16 %v221
      %v302 = vunpack.c.l.b16 %v222
      %v303 = vunpack.c.l.b16 %v223
      %v304 = vunpack.c.l.b16 %v224
      %v305 = vunpack.c.l.b16 %v225
      %v306 = vunpack.c.l.b16 %v226
      %v307 = vunpack.c.l.b16 %v227
      %v308 = vunpack.c.l.b16 %v228
      %v309 = vunpack.c.l.b16 %v229
      %v310 = vunpack.c.l.b16 %v230
      %v311 = vunpack.c.l.b16 %v231
      %v312 = vunpack.c.l.b16 %v232
      %v313 = vunpack.c.l.b16 %v233
      %v314 = vpack.c.b16 %v283, %v282
      %v315 = vpack.c.b16 %v285, %v284
      %v316 = vpack.c.b16 %v287, %v286
      %v317 = vpack.c.b16 %v289, %v288
      %v318 = vpack.c.b16 %v291, %v290
      %v319 = vpack.c.b16 %v293, %v292
      %v320 = vpack.c.b16 %v295, %v294
      %v321 = vpack.c.b16 %v297, %v296
      %v322 = vpack.c.b16 %v299, %v298
      %v323 = vpack.c.b16 %v301, %v300
      %v324 = vpack.c.b16 %v303, %v302
      %v325 = vpack.c.b16 %v305, %v304
      %v326 = vpack.c.b16 %v307, %v306
      %v327 = vpack.c.b16 %v309, %v308
      %v328 = vpack.c.b16 %v311, %v310
      %v329 = vpack.c.b16 %v313, %v312
      %v362 = vunpack.c.l.b16 %v234
      %v363 = vunpack.c.l.b16 %v235
      %v364 = vunpack.c.l.b16 %v236
      %v365 = vunpack.c.l.b16 %v237
      %v366 = vunpack.c.l.b16 %v238
      %v367 = vunpack.c.l.b16 %v239
      %v368 = vunpack.c.l.b16 %v240
      %v369 = vunpack.c.l.b16 %v241
      %v370 = vunpack.c.l.b16 %v242
      %v371 = vunpack.c.l.b16 %v243
      %v372 = vunpack.c.l.b16 %v244
      %v373 = vunpack.c.l.b16 %v245
      %v374 = vunpack.c.l.b16 %v246
      %v375 = vunpack.c.l.b16 %v247
      %v376 = vunpack.c.l.b16 %v248
      %v377 = vunpack.c.l.b16 %v249
      %v378 = vpack.c.b16 %v363, %v362
      %v379 = vpack.c.b16 %v365, %v364
      %v380 = vpack.c.b16 %v367, %v366
      %v381 = vpack.c.b16 %v369, %v368
      %v382 = vpack.c.b16 %v371, %v370
      %v383 = vpack.c.b16 %v373, %v372
      %v384 = vpack.c.b16 %v375, %v374
      %v385 = vpack.c.b16 %v377, %v376
      %394 = vmatprep.subr.bf16.mxu0 0
      %395 = vmatpush1.bf16.msra.mxu0 %v378
      %396 = vmatprep.subr.bf16.mxu0 0
      %397 = vmatpush1.bf16.msra.mxu0 %v379
      %398 = vmatprep.subr.bf16.mxu0 0
      %399 = vmatpush1.bf16.msra.mxu0 %v380
      %400 = vmatprep.subr.bf16.mxu0 0
      %401 = vmatpush1.bf16.msra.mxu0 %v381
      %402 = vmatprep.subr.bf16.mxu0 0
      %403 = vmatpush1.bf16.msra.mxu0 %v382
      %404 = vmatprep.subr.bf16.mxu0 0
      %405 = vmatpush1.bf16.msra.mxu0 %v383
      %406 = vmatprep.subr.bf16.mxu0 0
      %407 = vmatpush1.bf16.msra.mxu0 %v384
      %408 = vmatprep.subr.bf16.mxu0 0
      %409 = vmatpush1.bf16.msra.mxu0 %v385
      %410 = vmatprep.subr.bf16.mxu0 0
      %411 = vmatpush1.bf16.msra.mxu0 0
      %412 = vmatprep.subr.bf16.mxu0 0
      %413 = vmatpush1.bf16.msra.mxu0 0
      %414 = vmatprep.subr.bf16.mxu0 0
      %415 = vmatpush1.bf16.msra.mxu0 0
      %416 = vmatprep.subr.bf16.mxu0 0
      %417 = vmatpush1.bf16.msra.mxu0 0
      %418 = vmatprep.subr.bf16.mxu0 0
      %419 = vmatpush1.bf16.msra.mxu0 0
      %420 = vmatprep.subr.bf16.mxu0 0
      %421 = vmatpush1.bf16.msra.mxu0 0
      %422 = vmatprep.subr.bf16.mxu0 0
      %423 = vmatpush1.bf16.msra.mxu0 0
      %424 = vmatprep.subr.bf16.mxu0 0
      %425 = vmatpush1.bf16.msra.mxu0 0
      %426 = vmatprep.mubr.bf16.mxu0 0
      %427 = vmatmul.mubr.bf16.gmra.mrb[0].mxu0 %v314
      %v428 = vpop.f32.mrb[0].mxu0
      %v429 = vadd.f32 0.0, %v428
      %v430 = vpop.f32.mrb[0].mxu0
      %v431 = vpop.f32.mrb[0].mxu0
      %v432 = vadd.f32 0.0, %v431
      %v433 = vpop.f32.mrb[0].mxu0
      %434 = vmatprep.mubr.bf16.mxu0 0
      %435 = vmatmul.mubr.bf16.gmra.mrb[0].mxu0 %v315
      %v436 = vpop.f32.mrb[0].mxu0
      %v437 = vadd.f32 0.0, %v436
      %v438 = vpop.f32.mrb[0].mxu0
      %v439 = vpop.f32.mrb[0].mxu0
      %v440 = vadd.f32 0.0, %v439
      %v441 = vpop.f32.mrb[0].mxu0
      %442 = vmatprep.mubr.bf16.mxu0 0
      %443 = vmatmul.mubr.bf16.gmra.mrb[0].mxu0 %v316
      %v444 = vpop.f32.mrb[0].mxu0
      %v445 = vadd.f32 0.0, %v444
      %v446 = vpop.f32.mrb[0].mxu0
      %v447 = vpop.f32.mrb[0].mxu0
      %v448 = vadd.f32 0.0, %v447
      %v449 = vpop.f32.mrb[0].mxu0
      %450 = vmatprep.mubr.bf16.mxu0 0
      %451 = vmatmul.mubr.bf16.gmra.mrb[0].mxu0 %v317
      %v452 = vpop.f32.mrb[0].mxu0
      %v453 = vadd.f32 0.0, %v452
      %v454 = vpop.f32.mrb[0].mxu0
      %v455 = vpop.f32.mrb[0].mxu0
      %v456 = vadd.f32 0.0, %v455
      %v457 = vpop.f32.mrb[0].mxu0
      %458 = vmatprep.mubr.bf16.mxu0 0
      %459 = vmatmul.mubr.bf16.gmra.mrb[0].mxu0 %v318
      %v460 = vpop.f32.mrb[0].mxu0
      %v461 = vadd.f32 0.0, %v460
      %v462 = vpop.f32.mrb[0].mxu0
      %v463 = vpop.f32.mrb[0].mxu0
      %v464 = vadd.f32 0.0, %v463
      %v465 = vpop.f32.mrb[0].mxu0
      %466 = vmatprep.mubr.bf16.mxu0 0
      %467 = vmatmul.mubr.bf16.gmra.mrb[0].mxu0 %v319
      %v468 = vpop.f32.mrb[0].mxu0
      %v469 = vadd.f32 0.0, %v468
      %v470 = vpop.f32.mrb[0].mxu0
      %v471 = vpop.f32.mrb[0].mxu0
      %v472 = vadd.f32 0.0, %v471
      %v473 = vpop.f32.mrb[0].mxu0
      %474 = vmatprep.mubr.bf16.mxu0 0
      %475 = vmatmul.mubr.bf16.gmra.mrb[0].mxu0 %v320
      %v476 = vpop.f32.mrb[0].mxu0
      %v477 = vadd.f32 0.0, %v476
      %v478 = vpop.f32.mrb[0].mxu0
      %v479 = vpop.f32.mrb[0].mxu0
      %v480 = vadd.f32 0.0, %v479
      %v481 = vpop.f32.mrb[0].mxu0
      %482 = vmatprep.mubr.bf16.mxu0 0
      %483 = vmatmul.mubr.bf16.gmra.mrb[0].mxu0 %v321
      %v484 = vpop.f32.mrb[0].mxu0
      %v485 = vadd.f32 0.0, %v484
      %v486 = vpop.f32.mrb[0].mxu0
      %v487 = vpop.f32.mrb[0].mxu0
      %v488 = vadd.f32 0.0, %v487
      %v489 = vpop.f32.mrb[0].mxu0
      %490 = vmatprep.mubr.bf16.mxu0 0
      %491 = vmatmul.mubr.bf16.gmra.mrb[0].mxu0 %v322
      %v492 = vpop.f32.mrb[0].mxu0
      %v493 = vadd.f32 0.0, %v492
      %v494 = vpop.f32.mrb[0].mxu0
      %v495 = vpop.f32.mrb[0].mxu0
      %v496 = vadd.f32 0.0, %v495
      %v497 = vpop.f32.mrb[0].mxu0
      %498 = vmatprep.mubr.bf16.mxu0 0
      %499 = vmatmul.mubr.bf16.gmra.mrb[0].mxu0 %v323
      %v500 = vpop.f32.mrb[0].mxu0
      %v501 = vadd.f32 0.0, %v500
      %v502 = vpop.f32.mrb[0].mxu0
      %v503 = vpop.f32.mrb[0].mxu0
      %v504 = vadd.f32 0.0, %v503
      %v505 = vpop.f32.mrb[0].mxu0
      %506 = vmatprep.mubr.bf16.mxu0 0
      %507 = vmatmul.mubr.bf16.gmra.mrb[0].mxu0 %v324
      %v508 = vpop.f32.mrb[0].mxu0
      %v509 = vadd.f32 0.0, %v508
      %v510 = vpop.f32.mrb[0].mxu0
      %v511 = vpop.f32.mrb[0].mxu0
      %v512 = vadd.f32 0.0, %v511
      %v513 = vpop.f32.mrb[0].mxu0
      %514 = vmatprep.mubr.bf16.mxu0 0
      %515 = vmatmul.mubr.bf16.gmra.mrb[0].mxu0 %v325
      %v516 = vpop.f32.mrb[0].mxu0
      %v517 = vadd.f32 0.0, %v516
      %v518 = vpop.f32.mrb[0].mxu0
      %v519 = vpop.f32.mrb[0].mxu0
      %v520 = vadd.f32 0.0, %v519
      %v521 = vpop.f32.mrb[0].mxu0
      %522 = vmatprep.mubr.bf16.mxu0 0
      %523 = vmatmul.mubr.bf16.gmra.mrb[0].mxu0 %v326
      %v524 = vpop.f32.mrb[0].mxu0
      %v525 = vadd.f32 0.0, %v524
      %v526 = vpop.f32.mrb[0].mxu0
      %v527 = vpop.f32.mrb[0].mxu0
      %v528 = vadd.f32 0.0, %v527
      %v529 = vpop.f32.mrb[0].mxu0
      %530 = vmatprep.mubr.bf16.mxu0 0
      %531 = vmatmul.mubr.bf16.gmra.mrb[0].mxu0 %v327
      %v532 = vpop.f32.mrb[0].mxu0
      %v533 = vadd.f32 0.0, %v532
      %v534 = vpop.f32.mrb[0].mxu0
      %v535 = vpop.f32.mrb[0].mxu0
      %v536 = vadd.f32 0.0, %v535
      %v537 = vpop.f32.mrb[0].mxu0
      %538 = vmatprep.mubr.bf16.mxu0 0
      %539 = vmatmul.mubr.bf16.gmra.mrb[0].mxu0 %v328
      %v540 = vpop.f32.mrb[0].mxu0
      %v541 = vadd.f32 0.0, %v540
      %v542 = vpop.f32.mrb[0].mxu0
      %v543 = vpop.f32.mrb[0].mxu0
      %v544 = vadd.f32 0.0, %v543
      %v545 = vpop.f32.mrb[0].mxu0
      %546 = vmatprep.mubr.bf16.mxu0 0
      %547 = vmatmul.mubr.bf16.gmra.mrb[0].mxu0 %v329
      %v548 = vpop.f32.mrb[0].mxu0
      %v549 = vadd.f32 0.0, %v548
      %v550 = vpop.f32.mrb[0].mxu0
      %v551 = vpop.f32.mrb[0].mxu0
      %v552 = vadd.f32 0.0, %v551
      %v553 = vpop.f32.mrb[0].mxu0
      %554 = vdwg.mxu0
      %v555 = vld [vmem:[%s2] sm:$0x1]
      %v557 = vlaneseq
      %v558 = vshrl.u32 %v557, 7
      %v559 = vsub.s32 0, %v558
      %v560 = vrot.slane %v555, %v559
      %v562 = vmul.f32 %v429, %v560
      %v563 = vmul.f32 %v432, %v560
      %v564 = vmul.f32 %v437, %v560
      %v565 = vmul.f32 %v440, %v560
      %v566 = vmul.f32 %v445, %v560
      %v567 = vmul.f32 %v448, %v560
      %v568 = vmul.f32 %v453, %v560
      %v569 = vmul.f32 %v456, %v560
      %v570 = vmul.f32 %v461, %v560
      %v571 = vmul.f32 %v464, %v560
      %v572 = vmul.f32 %v469, %v560
      %v573 = vmul.f32 %v472, %v560
      %v574 = vmul.f32 %v477, %v560
      %v575 = vmul.f32 %v480, %v560
      %v576 = vmul.f32 %v485, %v560
      %v577 = vmul.f32 %v488, %v560
      %v578 = vmul.f32 %v493, %v560
      %v579 = vmul.f32 %v496, %v560
      %v580 = vmul.f32 %v501, %v560
      %v581 = vmul.f32 %v504, %v560
      %v582 = vmul.f32 %v509, %v560
      %v583 = vmul.f32 %v512, %v560
      %v584 = vmul.f32 %v517, %v560
      %v585 = vmul.f32 %v520, %v560
      %v586 = vmul.f32 %v525, %v560
      %v587 = vmul.f32 %v528, %v560
      %v588 = vmul.f32 %v533, %v560
      %v589 = vmul.f32 %v536, %v560
      %v590 = vmul.f32 %v541, %v560
      %v591 = vmul.f32 %v544, %v560
      %v592 = vmul.f32 %v549, %v560
      %v593 = vmul.f32 %v552, %v560
      %v594 = vld [vmem:[%s3] sm:$0x1]
      %v596 = vlaneseq
      %v597 = vshrl.u32 %v596, 7
      %v598 = vsub.s32 0, %v597
      %v599 = vrot.slane %v594, %v598
      %v601 = vadd.f32 %v562, %v599
      %v602 = vadd.f32 %v563, %v599
      %v603 = vadd.f32 %v564, %v599
      %v604 = vadd.f32 %v565, %v599
      %v605 = vadd.f32 %v566, %v599
      %v606 = vadd.f32 %v567, %v599
      %v607 = vadd.f32 %v568, %v599
      %v608 = vadd.f32 %v569, %v599
      %v609 = vadd.f32 %v570, %v599
      %v610 = vadd.f32 %v571, %v599
      %v611 = vadd.f32 %v572, %v599
      %v612 = vadd.f32 %v573, %v599
      %v613 = vadd.f32 %v574, %v599
      %v614 = vadd.f32 %v575, %v599
      %v615 = vadd.f32 %v576, %v599
      %v616 = vadd.f32 %v577, %v599
      %v617 = vadd.f32 %v578, %v599
      %v618 = vadd.f32 %v579, %v599
      %v619 = vadd.f32 %v580, %v599
      %v620 = vadd.f32 %v581, %v599
      %v621 = vadd.f32 %v582, %v599
      %v622 = vadd.f32 %v583, %v599
      %v623 = vadd.f32 %v584, %v599
      %v624 = vadd.f32 %v585, %v599
      %v625 = vadd.f32 %v586, %v599
      %v626 = vadd.f32 %v587, %v599
      %v627 = vadd.f32 %v588, %v599
      %v628 = vadd.f32 %v589, %v599
      %v629 = vadd.f32 %v590, %v599
      %v630 = vadd.f32 %v591, %v599
      %v631 = vadd.f32 %v592, %v599
      %v632 = vadd.f32 %v593, %v599
      %v633 = vmax.f32 %v601, 0.0
      %v634 = vmax.f32 %v602, 0.0
      %v635 = vmax.f32 %v603, 0.0
      %v636 = vmax.f32 %v604, 0.0
      %v637 = vmax.f32 %v605, 0.0
      %v638 = vmax.f32 %v606, 0.0
      %v639 = vmax.f32 %v607, 0.0
      %v640 = vmax.f32 %v608, 0.0
      %v641 = vmax.f32 %v609, 0.0
      %v642 = vmax.f32 %v610, 0.0
      %v643 = vmax.f32 %v611, 0.0
      %v644 = vmax.f32 %v612, 0.0
      %v645 = vmax.f32 %v613, 0.0
      %v646 = vmax.f32 %v614, 0.0
      %v647 = vmax.f32 %v615, 0.0
      %v648 = vmax.f32 %v616, 0.0
      %v649 = vmax.f32 %v617, 0.0
      %v650 = vmax.f32 %v618, 0.0
      %v651 = vmax.f32 %v619, 0.0
      %v652 = vmax.f32 %v620, 0.0
      %v653 = vmax.f32 %v621, 0.0
      %v654 = vmax.f32 %v622, 0.0
      %v655 = vmax.f32 %v623, 0.0
      %v656 = vmax.f32 %v624, 0.0
      %v657 = vmax.f32 %v625, 0.0
      %v658 = vmax.f32 %v626, 0.0
      %v659 = vmax.f32 %v627, 0.0
      %v660 = vmax.f32 %v628, 0.0
      %v661 = vmax.f32 %v629, 0.0
      %v662 = vmax.f32 %v630, 0.0
      %v663 = vmax.f32 %v631, 0.0
      %v664 = vmax.f32 %v632, 0.0
      %665 = vst [vmem:[%s199] sm:$0xff] %v633
      %666 = vst [vmem:[%s199 + $0x8] sm:$0xff] %v634
      %667 = vst [vmem:[%s199 + $0x10] sm:$0xff] %v635
      %668 = vst [vmem:[%s199 + $0x18] sm:$0xff] %v636
      %669 = vst [vmem:[%s199 + $0x20] sm:$0xff] %v637
      %670 = vst [vmem:[%s199 + $0x28] sm:$0xff] %v638
      %671 = vst [vmem:[%s199 + $0x30] sm:$0xff] %v639
      %672 = vst [vmem:[%s199 + $0x38] sm:$0xff] %v640
      %673 = vst [vmem:[%s199 + $0x40] sm:$0xff] %v641
      %674 = vst [vmem:[%s199 + $0x48] sm:$0xff] %v642
      %675 = vst [vmem:[%s199 + $0x50] sm:$0xff] %v643
      %676 = vst [vmem:[%s199 + $0x58] sm:$0xff] %v644
      %677 = vst [vmem:[%s199 + $0x60] sm:$0xff] %v645
      %678 = vst [vmem:[%s199 + $0x68] sm:$0xff] %v646
      %679 = vst [vmem:[%s199 + $0x70] sm:$0xff] %v647
      %680 = vst [vmem:[%s199 + $0x78] sm:$0xff] %v648
      %681 = vst [vmem:[%s199 + $0x80] sm:$0xff] %v649
      %682 = vst [vmem:[%s199 + $0x88] sm:$0xff] %v650
      %683 = vst [vmem:[%s199 + $0x90] sm:$0xff] %v651
      %684 = vst [vmem:[%s199 + $0x98] sm:$0xff] %v652
      %685 = vst [vmem:[%s199 + $0xa0] sm:$0xff] %v653
      %686 = vst [vmem:[%s199 + $0xa8] sm:$0xff] %v654
      %687 = vst [vmem:[%s199 + $0xb0] sm:$0xff] %v655
      %688 = vst [vmem:[%s199 + $0xb8] sm:$0xff] %v656
      %689 = vst [vmem:[%s199 + $0xc0] sm:$0xff] %v657
      %690 = vst [vmem:[%s199 + $0xc8] sm:$0xff] %v658
      %691 = vst [vmem:[%s199 + $0xd0] sm:$0xff] %v659
      %692 = vst [vmem:[%s199 + $0xd8] sm:$0xff] %v660
      %693 = vst [vmem:[%s199 + $0xe0] sm:$0xff] %v661
      %694 = vst [vmem:[%s199 + $0xe8] sm:$0xff] %v662
      %695 = vst [vmem:[%s199 + $0xf0] sm:$0xff] %v663
      %696 = vst [vmem:[%s199 + $0xf8] sm:$0xff] %v664
      %s697 = smul.u32 32, %s15
      %p698 = scmp.lt.s32.totalorder %s697, 159
      %s699 = scalar_select %p698, %s697, 159
      %s700 = smul.addr %s699, 8
      %s701 = scalar_lea.vmem %s4, %s700
      // Predicated region
      $region37: #{lenet_forward_pallas.4} parent=35 // pred_check
        %p702 = pneg %p122
      $region38: #{lenet_forward_pallas.4} parent=35 // pred_check_branch
        %704 = sbr.rel (%p702) target = $region40
      $region39: #{lenet_forward_pallas.4} parent=35 // pred_region
        %s705 = smul.u32 32, %s15
      $region40: #{lenet_forward_pallas.4} parent=35 // pred_fallthru
        _
    $region36: #{lenet_forward_pallas.4} parent=5 // pred_fallthru
      _
    %p706 = scmp.le.s32.totalorder 2, %s10
    // Predicated region
    $region41: #{lenet_forward_pallas.4} parent=5 // pred_check
      %p707 = pneg %p706
    $region42: #{lenet_forward_pallas.4} parent=5 // pred_check_branch
      %709 = sbr.rel (%p707) target = $region44
    $region43: #{lenet_forward_pallas.4} parent=5 // pred_region
      %s710 = ssub.s32 %s10, 2
      // Predicated region
      $region45: #{lenet_forward_pallas.4} parent=43 // pred_check
        %p711 = pneg %p128
      $region46: #{lenet_forward_pallas.4} parent=43 // pred_check_branch
        %713 = sbr.rel (%p711) target = $region48
      $region47: #{lenet_forward_pallas.4} parent=43 // pred_region
        %s714 = smul.u32 32, %s16
        %p715 = scmp.lt.s32.totalorder %s714, 159
        %s716 = scalar_select %p715, %s714, 159
        %s717 = smul.addr %s716, 8
        %s718 = scalar_lea.vmem %s4, %s717
      $region48: #{lenet_forward_pallas.4} parent=43 // pred_fallthru
        _
    $region44: #{lenet_forward_pallas.4} parent=5 // pred_fallthru
      _
  $region6: #{lenet_forward_pallas.4} parent=0 // loop_footer
    %s14 = sadd.s32 1, %s10
  $region7: #{lenet_forward_pallas.4} parent=0 // loop_footer_branch
    %9 = sbr.rel target = $region3
  $region8: #{lenet_forward_pallas.4} parent=0 // loop_exit
    _

// kernel: lenet_forward_pallas.5
$region0: #{lenet_forward_pallas.5}
  #allocation0 [shape = 'u32[]', space=smem, size = 0x4, offset = 0x4, fixed_abs, tag = 'smem constant byte address 0x4 - core index']
  #allocation1 [shape = 'u32[144,128]{1,0:T(1,128)}', space=vmem, size = 0x12000, scoped, tag = 'internal scratch']
  %s0 = inlined_call_operand.vmem [shape: f32[288,128], index: 0, kind: input, shape index: {}]
  %s1 = inlined_call_operand.vmem [shape: f32[288,128], index: 1, kind: input, shape index: {}]
  %s2 = inlined_call_operand.vmem [shape: f32[288,128], index: 2, kind: input, shape index: {}]
  %s3 = inlined_call_operand.vmem [shape: f32[288,128], index: 3, kind: input, shape index: {}]
  %s4 = inlined_call_operand.vmem [shape: f32[288,128], index: 4, kind: output, shape index: {}]
  %s5 = sld [smem:[#allocation0]]
  $region26: #{lenet_forward_pallas.5} parent=0
    _
  %s7 = ssub.s32 1, %s5
  %s8 = scalar_select 0, %s7, %s5
  // Predicated region
  $region2: #{lenet_forward_pallas.5} parent=0 // pred_check
    _
  $region3: #{lenet_forward_pallas.5} parent=0 // pred_check_branch
    %10 = sbr.rel (0) target = $region5
  $region4: #{lenet_forward_pallas.5} parent=0 // pred_region
    _
  $region5: #{lenet_forward_pallas.5} parent=0 // pred_fallthru
    _
  // Predicated region
  $region6: #{lenet_forward_pallas.5} parent=0 // pred_check
    _
  $region7: #{lenet_forward_pallas.5} parent=0 // pred_check_branch
    %12 = sbr.rel (0) target = $region9
  $region8: #{lenet_forward_pallas.5} parent=0 // pred_region
    _
  $region9: #{lenet_forward_pallas.5} parent=0 // pred_fallthru
    _
  // Predicated region
  $region10: #{lenet_forward_pallas.5} parent=0 // pred_check
    _
  $region11: #{lenet_forward_pallas.5} parent=0 // pred_check_branch
    %14 = sbr.rel (0) target = $region13
  $region12: #{lenet_forward_pallas.5} parent=0 // pred_region
    _
  $region13: #{lenet_forward_pallas.5} parent=0 // pred_fallthru
    _
  // Predicated region
  $region14: #{lenet_forward_pallas.5} parent=0 // pred_check
    _
  $region15: #{lenet_forward_pallas.5} parent=0 // pred_check_branch
    %16 = sbr.rel (0) target = $region17
  $region16: #{lenet_forward_pallas.5} parent=0 // pred_region
    _
  $region17: #{lenet_forward_pallas.5} parent=0 // pred_fallthru
    _
  %v17 = vld [vmem:[%s0] sm:$0xff]
  %v18 = vld [vmem:[%s0 + $0x8] sm:$0xff]
  %v19 = vld [vmem:[%s0 + $0x10] sm:$0xff]
  %v20 = vld [vmem:[%s0 + $0x18] sm:$0xff]
  %v21 = vld [vmem:[%s0 + $0x20] sm:$0xff]
  %v22 = vld [vmem:[%s0 + $0x28] sm:$0xff]
  %v23 = vld [vmem:[%s0 + $0x30] sm:$0xff]
  %v24 = vld [vmem:[%s0 + $0x38] sm:$0xff]
  %v25 = vld [vmem:[%s0 + $0x40] sm:$0xff]
  %v26 = vld [vmem:[%s0 + $0x48] sm:$0xff]
  %v27 = vld [vmem:[%s0 + $0x50] sm:$0xff]
  %v28 = vld [vmem:[%s0 + $0x58] sm:$0xff]
  %v29 = vld [vmem:[%s0 + $0x60] sm:$0xff]
  %v30 = vld [vmem:[%s0 + $0x68] sm:$0xff]
  %v31 = vld [vmem:[%s0 + $0x70] sm:$0xff]
  %v32 = vld [vmem:[%s0 + $0x78] sm:$0xff]
  %v33 = vld [vmem:[%s0 + $0x80] sm:$0xff]
  %v34 = vld [vmem:[%s0 + $0x88] sm:$0xff]
  %v35 = vld [vmem:[%s0 + $0x90] sm:$0xff]
  %v36 = vld [vmem:[%s0 + $0x98] sm:$0xff]
  %v37 = vld [vmem:[%s0 + $0xa0] sm:$0xff]
  %v38 = vld [vmem:[%s0 + $0xa8] sm:$0xff]
  %v39 = vld [vmem:[%s0 + $0xb0] sm:$0xff]
  %v40 = vld [vmem:[%s0 + $0xb8] sm:$0xff]
  %v41 = vld [vmem:[%s0 + $0xc0] sm:$0xff]
  %v42 = vld [vmem:[%s0 + $0xc8] sm:$0xff]
  %v43 = vld [vmem:[%s0 + $0xd0] sm:$0xff]
  %v44 = vld [vmem:[%s0 + $0xd8] sm:$0xff]
  %v45 = vld [vmem:[%s0 + $0xe0] sm:$0xff]
  %v46 = vld [vmem:[%s0 + $0xe8] sm:$0xff]
  %v47 = vld [vmem:[%s0 + $0xf0] sm:$0xff]
  %v48 = vld [vmem:[%s0 + $0xf8] sm:$0xff]
  %v49 = vld [vmem:[%s0 + $0x100] sm:$0xff]
  %v50 = vld [vmem:[%s0 + $0x108] sm:$0xff]
  %v51 = vld [vmem:[%s0 + $0x110] sm:$0xff]
  %v52 = vld [vmem:[%s0 + $0x118] sm:$0xff]
  %v53 = vld [vmem:[%s1] sm:$0xff]
  %v54 = vld [vmem:[%s1 + $0x8] sm:$0xff]
  %v55 = vld [vmem:[%s1 + $0x10] sm:$0xff]
  %v56 = vld [vmem:[%s1 + $0x18] sm:$0xff]
  %v57 = vld [vmem:[%s1 + $0x20] sm:$0xff]
  %v58 = vld [vmem:[%s1 + $0x28] sm:$0xff]
  %v59 = vld [vmem:[%s1 + $0x30] sm:$0xff]
  %v60 = vld [vmem:[%s1 + $0x38] sm:$0xff]
  %v61 = vld [vmem:[%s1 + $0x40] sm:$0xff]
  %v62 = vld [vmem:[%s1 + $0x48] sm:$0xff]
  %v63 = vld [vmem:[%s1 + $0x50] sm:$0xff]
  %v64 = vld [vmem:[%s1 + $0x58] sm:$0xff]
  %v65 = vld [vmem:[%s1 + $0x60] sm:$0xff]
  %v66 = vld [vmem:[%s1 + $0x68] sm:$0xff]
  %v67 = vld [vmem:[%s1 + $0x70] sm:$0xff]
  %v68 = vld [vmem:[%s1 + $0x78] sm:$0xff]
  %v69 = vld [vmem:[%s1 + $0x80] sm:$0xff]
  %v70 = vld [vmem:[%s1 + $0x88] sm:$0xff]
  %v71 = vld [vmem:[%s1 + $0x90] sm:$0xff]
  %v72 = vld [vmem:[%s1 + $0x98] sm:$0xff]
  %v73 = vld [vmem:[%s1 + $0xa0] sm:$0xff]
  %v74 = vld [vmem:[%s1 + $0xa8] sm:$0xff]
  %v75 = vld [vmem:[%s1 + $0xb0] sm:$0xff]
  %v76 = vld [vmem:[%s1 + $0xb8] sm:$0xff]
  %v77 = vld [vmem:[%s1 + $0xc0] sm:$0xff]
  %v78 = vld [vmem:[%s1 + $0xc8] sm:$0xff]
  %v79 = vld [vmem:[%s1 + $0xd0] sm:$0xff]
  %v80 = vld [vmem:[%s1 + $0xd8] sm:$0xff]
  %v81 = vld [vmem:[%s1 + $0xe0] sm:$0xff]
  %v82 = vld [vmem:[%s1 + $0xe8] sm:$0xff]
  %v83 = vld [vmem:[%s1 + $0xf0] sm:$0xff]
  %v84 = vld [vmem:[%s1 + $0xf8] sm:$0xff]
  %v85 = vld [vmem:[%s1 + $0x100] sm:$0xff]
  %v86 = vld [vmem:[%s1 + $0x108] sm:$0xff]
  %v87 = vld [vmem:[%s1 + $0x110] sm:$0xff]
  %v88 = vld [vmem:[%s1 + $0x118] sm:$0xff]
  %v89 = vmax.f32 %v17, %v53
  %v90 = vmax.f32 %v18, %v54
  %v91 = vmax.f32 %v19, %v55
  %v92 = vmax.f32 %v20, %v56
  %v93 = vmax.f32 %v21, %v57
  %v94 = vmax.f32 %v22, %v58
  %v95 = vmax.f32 %v23, %v59
  %v96 = vmax.f32 %v24, %v60
  %v97 = vmax.f32 %v25, %v61
  %v98 = vmax.f32 %v26, %v62
  %v99 = vmax.f32 %v27, %v63
  %v100 = vmax.f32 %v28, %v64
  %v101 = vmax.f32 %v29, %v65
  %v102 = vmax.f32 %v30, %v66
  %v103 = vmax.f32 %v31, %v67
  %v104 = vmax.f32 %v32, %v68
  %v105 = vmax.f32 %v33, %v69
  %v106 = vmax.f32 %v34, %v70
  %v107 = vmax.f32 %v35, %v71
  %v108 = vmax.f32 %v36, %v72
  %v109 = vmax.f32 %v37, %v73
  %v110 = vmax.f32 %v38, %v74
  %v111 = vmax.f32 %v39, %v75
  %v112 = vmax.f32 %v40, %v76
  %v113 = vmax.f32 %v41, %v77
  %v114 = vmax.f32 %v42, %v78
  %v115 = vmax.f32 %v43, %v79
  %v116 = vmax.f32 %v44, %v80
  %v117 = vmax.f32 %v45, %v81
  %v118 = vmax.f32 %v46, %v82
  %v119 = vmax.f32 %v47, %v83
  %v120 = vmax.f32 %v48, %v84
  %v121 = vmax.f32 %v49, %v85
  %v122 = vmax.f32 %v50, %v86
  %v123 = vmax.f32 %v51, %v87
  %v124 = vmax.f32 %v52, %v88
  %v125 = vld [vmem:[%s2] sm:$0xff]
  %v126 = vld [vmem:[%s2 + $0x8] sm:$0xff]
  %v127 = vld [vmem:[%s2 + $0x10] sm:$0xff]
  %v128 = vld [vmem:[%s2 + $0x18] sm:$0xff]
  %v129 = vld [vmem:[%s2 + $0x20] sm:$0xff]
  %v130 = vld [vmem:[%s2 + $0x28] sm:$0xff]
  %v131 = vld [vmem:[%s2 + $0x30] sm:$0xff]
  %v132 = vld [vmem:[%s2 + $0x38] sm:$0xff]
  %v133 = vld [vmem:[%s2 + $0x40] sm:$0xff]
  %v134 = vld [vmem:[%s2 + $0x48] sm:$0xff]
  %v135 = vld [vmem:[%s2 + $0x50] sm:$0xff]
  %v136 = vld [vmem:[%s2 + $0x58] sm:$0xff]
  %v137 = vld [vmem:[%s2 + $0x60] sm:$0xff]
  %v138 = vld [vmem:[%s2 + $0x68] sm:$0xff]
  %v139 = vld [vmem:[%s2 + $0x70] sm:$0xff]
  %v140 = vld [vmem:[%s2 + $0x78] sm:$0xff]
  %v141 = vld [vmem:[%s2 + $0x80] sm:$0xff]
  %v142 = vld [vmem:[%s2 + $0x88] sm:$0xff]
  %v143 = vld [vmem:[%s2 + $0x90] sm:$0xff]
  %v144 = vld [vmem:[%s2 + $0x98] sm:$0xff]
  %v145 = vld [vmem:[%s2 + $0xa0] sm:$0xff]
  %v146 = vld [vmem:[%s2 + $0xa8] sm:$0xff]
  %v147 = vld [vmem:[%s2 + $0xb0] sm:$0xff]
  %v148 = vld [vmem:[%s2 + $0xb8] sm:$0xff]
  %v149 = vld [vmem:[%s2 + $0xc0] sm:$0xff]
  %v150 = vld [vmem:[%s2 + $0xc8] sm:$0xff]
  %v151 = vld [vmem:[%s2 + $0xd0] sm:$0xff]
  %v152 = vld [vmem:[%s2 + $0xd8] sm:$0xff]
  %v153 = vld [vmem:[%s2 + $0xe0] sm:$0xff]
  %v154 = vld [vmem:[%s2 + $0xe8] sm:$0xff]
  %v155 = vld [vmem:[%s2 + $0xf0] sm:$0xff]
  %v156 = vld [vmem:[%s2 + $0xf8] sm:$0xff]
  %v157 = vld [vmem:[%s2 + $0x100] sm:$0xff]
  %v158 = vld [vmem:[%s2 + $0x108] sm:$0xff]
  %v159 = vld [vmem:[%s2 + $0x110] sm:$0xff]
  %v160 = vld [vmem:[%s2 + $0x118] sm:$0xff]
  %v161 = vld [vmem:[%s3] sm:$0xff]
  %v162 = vld [vmem:[%s3 + $0x8] sm:$0xff]
  %v163 = vld [vmem:[%s3 + $0x10] sm:$0xff]
  %v164 = vld [vmem:[%s3 + $0x18] sm:$0xff]
  %v165 = vld [vmem:[%s3 + $0x20] sm:$0xff]
  %v166 = vld [vmem:[%s3 + $0x28] sm:$0xff]
  %v167 = vld [vmem:[%s3 + $0x30] sm:$0xff]
  %v168 = vld [vmem:[%s3 + $0x38] sm:$0xff]
  %v169 = vld [vmem:[%s3 + $0x40] sm:$0xff]
  %v170 = vld [vmem:[%s3 + $0x48] sm:$0xff]
  %v171 = vld [vmem:[%s3 + $0x50] sm:$0xff]
  %v172 = vld [vmem:[%s3 + $0x58] sm:$0xff]
  %v173 = vld [vmem:[%s3 + $0x60] sm:$0xff]
  %v174 = vld [vmem:[%s3 + $0x68] sm:$0xff]
  %v175 = vld [vmem:[%s3 + $0x70] sm:$0xff]
  %v176 = vld [vmem:[%s3 + $0x78] sm:$0xff]
  %v177 = vld [vmem:[%s3 + $0x80] sm:$0xff]
  %v178 = vld [vmem:[%s3 + $0x88] sm:$0xff]
  %v179 = vld [vmem:[%s3 + $0x90] sm:$0xff]
  %v180 = vld [vmem:[%s3 + $0x98] sm:$0xff]
  %v181 = vld [vmem:[%s3 + $0xa0] sm:$0xff]
  %v182 = vld [vmem:[%s3 + $0xa8] sm:$0xff]
  %v183 = vld [vmem:[%s3 + $0xb0] sm:$0xff]
  %v184 = vld [vmem:[%s3 + $0xb8] sm:$0xff]
  %v185 = vld [vmem:[%s3 + $0xc0] sm:$0xff]
  %v186 = vld [vmem:[%s3 + $0xc8] sm:$0xff]
  %v187 = vld [vmem:[%s3 + $0xd0] sm:$0xff]
  %v188 = vld [vmem:[%s3 + $0xd8] sm:$0xff]
  %v189 = vld [vmem:[%s3 + $0xe0] sm:$0xff]
  %v190 = vld [vmem:[%s3 + $0xe8] sm:$0xff]
  %v191 = vld [vmem:[%s3 + $0xf0] sm:$0xff]
  %v192 = vld [vmem:[%s3 + $0xf8] sm:$0xff]
  %v193 = vld [vmem:[%s3 + $0x100] sm:$0xff]
  %v194 = vld [vmem:[%s3 + $0x108] sm:$0xff]
  %v195 = vld [vmem:[%s3 + $0x110] sm:$0xff]
  %v196 = vld [vmem:[%s3 + $0x118] sm:$0xff]
  %v197 = vmax.f32 %v125, %v161
  %v198 = vmax.f32 %v126, %v162
  %v199 = vmax.f32 %v127, %v163
  %v200 = vmax.f32 %v128, %v164
  %v201 = vmax.f32 %v129, %v165
  %v202 = vmax.f32 %v130, %v166
  %v203 = vmax.f32 %v131, %v167
  %v204 = vmax.f32 %v132, %v168
  %v205 = vmax.f32 %v133, %v169
  %v206 = vmax.f32 %v134, %v170
  %v207 = vmax.f32 %v135, %v171
  %v208 = vmax.f32 %v136, %v172
  %v209 = vmax.f32 %v137, %v173
  %v210 = vmax.f32 %v138, %v174
  %v211 = vmax.f32 %v139, %v175
  %v212 = vmax.f32 %v140, %v176
  %v213 = vmax.f32 %v141, %v177
  %v214 = vmax.f32 %v142, %v178
  %v215 = vmax.f32 %v143, %v179
  %v216 = vmax.f32 %v144, %v180
  %v217 = vmax.f32 %v145, %v181
  %v218 = vmax.f32 %v146, %v182
  %v219 = vmax.f32 %v147, %v183
  %v220 = vmax.f32 %v148, %v184
  %v221 = vmax.f32 %v149, %v185
  %v222 = vmax.f32 %v150, %v186
  %v223 = vmax.f32 %v151, %v187
  %v224 = vmax.f32 %v152, %v188
  %v225 = vmax.f32 %v153, %v189
  %v226 = vmax.f32 %v154, %v190
  %v227 = vmax.f32 %v155, %v191
  %v228 = vmax.f32 %v156, %v192
  %v229 = vmax.f32 %v157, %v193
  %v230 = vmax.f32 %v158, %v194
  %v231 = vmax.f32 %v159, %v195
  %v232 = vmax.f32 %v160, %v196
  %v233 = vmax.f32 %v89, %v197
  %v234 = vmax.f32 %v90, %v198
  %v235 = vmax.f32 %v91, %v199
  %v236 = vmax.f32 %v92, %v200
  %v237 = vmax.f32 %v93, %v201
  %v238 = vmax.f32 %v94, %v202
  %v239 = vmax.f32 %v95, %v203
  %v240 = vmax.f32 %v96, %v204
  %v241 = vmax.f32 %v97, %v205
  %v242 = vmax.f32 %v98, %v206
  %v243 = vmax.f32 %v99, %v207
  %v244 = vmax.f32 %v100, %v208
  %v245 = vmax.f32 %v101, %v209
  %v246 = vmax.f32 %v102, %v210
  %v247 = vmax.f32 %v103, %v211
  %v248 = vmax.f32 %v104, %v212
  %v249 = vmax.f32 %v105, %v213
  %v250 = vmax.f32 %v106, %v214
  %v251 = vmax.f32 %v107, %v215
  %v252 = vmax.f32 %v108, %v216
  %v253 = vmax.f32 %v109, %v217
  %v254 = vmax.f32 %v110, %v218
  %v255 = vmax.f32 %v111, %v219
  %v256 = vmax.f32 %v112, %v220
  %v257 = vmax.f32 %v113, %v221
  %v258 = vmax.f32 %v114, %v222
  %v259 = vmax.f32 %v115, %v223
  %v260 = vmax.f32 %v116, %v224
  %v261 = vmax.f32 %v117, %v225
  %v262 = vmax.f32 %v118, %v226
  %v263 = vmax.f32 %v119, %v227
  %v264 = vmax.f32 %v120, %v228
  %v265 = vmax.f32 %v121, %v229
  %v266 = vmax.f32 %v122, %v230
  %v267 = vmax.f32 %v123, %v231
  %v268 = vmax.f32 %v124, %v232
  %269 = vst [vmem:[%s4] sm:$0xff] %v233
  %270 = vst [vmem:[%s4 + $0x8] sm:$0xff] %v234
  %271 = vst [vmem:[%s4 + $0x10] sm:$0xff] %v235
  %272 = vst [vmem:[%s4 + $0x18] sm:$0xff] %v236
  %273 = vst [vmem:[%s4 + $0x20] sm:$0xff] %v237
  %274 = vst [vmem:[%s4 + $0x28] sm:$0xff] %v238
  %275 = vst [vmem:[%s4 + $0x30] sm:$0xff] %v239
  %276 = vst [vmem:[%s4 + $0x38] sm:$0xff] %v240
  %277 = vst [vmem:[%s4 + $0x40] sm:$0xff] %v241
  %278 = vst [vmem:[%s4 + $0x48] sm:$0xff] %v242
  %279 = vst [vmem:[%s4 + $0x50] sm:$0xff] %v243
  %280 = vst [vmem:[%s4 + $0x58] sm:$0xff] %v244
  %281 = vst [vmem:[%s4 + $0x60] sm:$0xff] %v245
  %282 = vst [vmem:[%s4 + $0x68] sm:$0xff] %v246
  %283 = vst [vmem:[%s4 + $0x70] sm:$0xff] %v247
  %284 = vst [vmem:[%s4 + $0x78] sm:$0xff] %v248
  %285 = vst [vmem:[%s4 + $0x80] sm:$0xff] %v249
  %286 = vst [vmem:[%s4 + $0x88] sm:$0xff] %v250
  %287 = vst [vmem:[%s4 + $0x90] sm:$0xff] %v251
  %288 = vst [vmem:[%s4 + $0x98] sm:$0xff] %v252
  %289 = vst [vmem:[%s4 + $0xa0] sm:$0xff] %v253
  %290 = vst [vmem:[%s4 + $0xa8] sm:$0xff] %v254
  %291 = vst [vmem:[%s4 + $0xb0] sm:$0xff] %v255
  %292 = vst [vmem:[%s4 + $0xb8] sm:$0xff] %v256
  %293 = vst [vmem:[%s4 + $0xc0] sm:$0xff] %v257
  %294 = vst [vmem:[%s4 + $0xc8] sm:$0xff] %v258
  %295 = vst [vmem:[%s4 + $0xd0] sm:$0xff] %v259
  %296 = vst [vmem:[%s4 + $0xd8] sm:$0xff] %v260
  %297 = vst [vmem:[%s4 + $0xe0] sm:$0xff] %v261
  %298 = vst [vmem:[%s4 + $0xe8] sm:$0xff] %v262
  %299 = vst [vmem:[%s4 + $0xf0] sm:$0xff] %v263
  %300 = vst [vmem:[%s4 + $0xf8] sm:$0xff] %v264
  %301 = vst [vmem:[%s4 + $0x100] sm:$0xff] %v265
  %302 = vst [vmem:[%s4 + $0x108] sm:$0xff] %v266
  %303 = vst [vmem:[%s4 + $0x110] sm:$0xff] %v267
  %304 = vst [vmem:[%s4 + $0x118] sm:$0xff] %v268
  // Predicated region
  $region18: #{lenet_forward_pallas.5} parent=0 // pred_check
    _
  $region19: #{lenet_forward_pallas.5} parent=0 // pred_check_branch
    %306 = sbr.rel (0) target = $region21
  $region20: #{lenet_forward_pallas.5} parent=0 // pred_region
    _
  $region21: #{lenet_forward_pallas.5} parent=0 // pred_fallthru
    _
  // Predicated region
  $region22: #{lenet_forward_pallas.5} parent=0 // pred_check
    _
  $region23: #{lenet_forward_pallas.5} parent=0 // pred_check_branch
    %308 = sbr.rel (0) target = $region25
  $region24: #{lenet_forward_pallas.5} parent=0 // pred_region
    _
  $region25: #{lenet_forward_pallas.5} parent=0 // pred_fallthru
    _

// kernel: lenet_forward_pallas.7
$region0: #{lenet_forward_pallas.7}
  #allocation0 [shape = 'u32[]', space=smem, size = 0x4, offset = 0x4, fixed_abs, tag = 'smem constant byte address 0x4 - core index']
  #allocation1 [shape = 'u32[144,128]{1,0:T(1,128)}', space=vmem, size = 0x12000, scoped, tag = 'internal scratch']
  %s0 = inlined_call_operand.vmem [shape: f32[32,128], index: 0, kind: input, shape index: {}]
  %s1 = inlined_call_operand.vmem [shape: f32[32,128], index: 1, kind: input, shape index: {}]
  %s2 = inlined_call_operand.vmem [shape: f32[32,128], index: 2, kind: input, shape index: {}]
  %s3 = inlined_call_operand.vmem [shape: f32[32,128], index: 3, kind: input, shape index: {}]
  %s4 = inlined_call_operand.vmem [shape: f32[32,128], index: 4, kind: output, shape index: {}]
  %s5 = sld [smem:[#allocation0]]
  $region26: #{lenet_forward_pallas.7} parent=0
    _
  %s7 = ssub.s32 1, %s5
  %s8 = scalar_select 0, %s7, %s5
  // Predicated region
  $region2: #{lenet_forward_pallas.7} parent=0 // pred_check
    _
  $region3: #{lenet_forward_pallas.7} parent=0 // pred_check_branch
    %10 = sbr.rel (0) target = $region5
  $region4: #{lenet_forward_pallas.7} parent=0 // pred_region
    _
  $region5: #{lenet_forward_pallas.7} parent=0 // pred_fallthru
    _
  // Predicated region
  $region6: #{lenet_forward_pallas.7} parent=0 // pred_check
    _
  $region7: #{lenet_forward_pallas.7} parent=0 // pred_check_branch
    %12 = sbr.rel (0) target = $region9
  $region8: #{lenet_forward_pallas.7} parent=0 // pred_region
    _
  $region9: #{lenet_forward_pallas.7} parent=0 // pred_fallthru
    _
  // Predicated region
  $region10: #{lenet_forward_pallas.7} parent=0 // pred_check
    _
  $region11: #{lenet_forward_pallas.7} parent=0 // pred_check_branch
    %14 = sbr.rel (0) target = $region13
  $region12: #{lenet_forward_pallas.7} parent=0 // pred_region
    _
  $region13: #{lenet_forward_pallas.7} parent=0 // pred_fallthru
    _
  // Predicated region
  $region14: #{lenet_forward_pallas.7} parent=0 // pred_check
    _
  $region15: #{lenet_forward_pallas.7} parent=0 // pred_check_branch
    %16 = sbr.rel (0) target = $region17
  $region16: #{lenet_forward_pallas.7} parent=0 // pred_region
    _
  $region17: #{lenet_forward_pallas.7} parent=0 // pred_fallthru
    _
  %v17 = vld [vmem:[%s0] sm:$0xff]
  %v18 = vld [vmem:[%s0 + $0x8] sm:$0xff]
  %v19 = vld [vmem:[%s0 + $0x10] sm:$0xff]
  %v20 = vld [vmem:[%s0 + $0x18] sm:$0xff]
  %v21 = vld [vmem:[%s1] sm:$0xff]
  %v22 = vld [vmem:[%s1 + $0x8] sm:$0xff]
  %v23 = vld [vmem:[%s1 + $0x10] sm:$0xff]
  %v24 = vld [vmem:[%s1 + $0x18] sm:$0xff]
  %v25 = vmax.f32 %v17, %v21
  %v26 = vmax.f32 %v18, %v22
  %v27 = vmax.f32 %v19, %v23
  %v28 = vmax.f32 %v20, %v24
  %v29 = vld [vmem:[%s2] sm:$0xff]
  %v30 = vld [vmem:[%s2 + $0x8] sm:$0xff]
  %v31 = vld [vmem:[%s2 + $0x10] sm:$0xff]
  %v32 = vld [vmem:[%s2 + $0x18] sm:$0xff]
  %v33 = vld [vmem:[%s3] sm:$0xff]
  %v34 = vld [vmem:[%s3 + $0x8] sm:$0xff]
  %v35 = vld [vmem:[%s3 + $0x10] sm:$0xff]
  %v36 = vld [vmem:[%s3 + $0x18] sm:$0xff]
  %v37 = vmax.f32 %v29, %v33
  %v38 = vmax.f32 %v30, %v34
  %v39 = vmax.f32 %v31, %v35
  %v40 = vmax.f32 %v32, %v36
  %v41 = vmax.f32 %v25, %v37
  %v42 = vmax.f32 %v26, %v38
  %v43 = vmax.f32 %v27, %v39
  %v44 = vmax.f32 %v28, %v40
  %45 = vst [vmem:[%s4] sm:$0xff] %v41
  %46 = vst [vmem:[%s4 + $0x8] sm:$0xff] %v42
  %47 = vst [vmem:[%s4 + $0x10] sm:$0xff] %v43
  %48 = vst [vmem:[%s4 + $0x18] sm:$0xff] %v44
  // Predicated region
  $region18: #{lenet_forward_pallas.7} parent=0 // pred_check
    _
  $region19: #{lenet_forward_pallas.7} parent=0 // pred_check_branch
    %50 = sbr.rel (0) target = $region21
  $region20: #{lenet_forward_pallas.7} parent=0 // pred_region
    _
  $region21: #{lenet_forward_pallas.7} parent=0 // pred_fallthru
    _
  // Predicated region
  $region22: #{lenet_forward_pallas.7} parent=0 // pred_check
    _
  $region23: #{lenet_forward_pallas.7} parent=0 // pred_check_branch
    %52 = sbr.rel (0) target = $region25
  $region24: #{lenet_forward_pallas.7} parent=0 // pred_region
    _
  $region25: #{lenet_forward_pallas.7} parent=0 // pred_fallthru
    _

// kernel: lenet_forward_pallas.6
$region0: #{lenet_forward_pallas.6}
  #allocation0 [shape = 'u32[]', space=smem, size = 0x4, offset = 0x4, fixed_abs, tag = 'smem constant byte address 0x4 - core index']
  #allocation1 [shape = 'u32[144,128]{1,0:T(1,128)}', space=vmem, size = 0x12000, scoped, tag = 'internal scratch']
  %s0 = inlined_call_operand.vmem [shape: bf16[128,3200], index: 0, kind: input, shape index: {}]
  %s1 = inlined_call_operand.vmem [shape: bf16[3200,128], index: 1, kind: input, shape index: {}]
  %s2 = inlined_call_operand.vmem [shape: f32[1,128], index: 2, kind: input, shape index: {}]
  %s3 = inlined_call_operand.vmem [shape: f32[1,128], index: 3, kind: input, shape index: {}]
  %s4 = inlined_call_operand.vmem [shape: f32[128,128], index: 4, kind: output, shape index: {}]
  %s5 = sld [smem:[#allocation0]]
  $region26: #{lenet_forward_pallas.6} parent=0
    _
  %s7 = ssub.s32 1, %s5
  %s8 = scalar_select 0, %s7, %s5
  // Predicated region
  $region2: #{lenet_forward_pallas.6} parent=0 // pred_check
    _
  $region3: #{lenet_forward_pallas.6} parent=0 // pred_check_branch
    %10 = sbr.rel (0) target = $region5
  $region4: #{lenet_forward_pallas.6} parent=0 // pred_region
    _
  $region5: #{lenet_forward_pallas.6} parent=0 // pred_fallthru
    _
  // Predicated region
  $region6: #{lenet_forward_pallas.6} parent=0 // pred_check
    _
  $region7: #{lenet_forward_pallas.6} parent=0 // pred_check_branch
    %12 = sbr.rel (0) target = $region9
  $region8: #{lenet_forward_pallas.6} parent=0 // pred_region
    _
  $region9: #{lenet_forward_pallas.6} parent=0 // pred_fallthru
    _
  // Predicated region
  $region10: #{lenet_forward_pallas.6} parent=0 // pred_check
    _
  $region11: #{lenet_forward_pallas.6} parent=0 // pred_check_branch
    %14 = sbr.rel (0) target = $region13
  $region12: #{lenet_forward_pallas.6} parent=0 // pred_region
    _
  $region13: #{lenet_forward_pallas.6} parent=0 // pred_fallthru
    _
  // Predicated region
  $region14: #{lenet_forward_pallas.6} parent=0 // pred_check
    _
  $region15: #{lenet_forward_pallas.6} parent=0 // pred_check_branch
    %16 = sbr.rel (0) target = $region17
  $region16: #{lenet_forward_pallas.6} parent=0 // pred_region
    _
  $region17: #{lenet_forward_pallas.6} parent=0 // pred_fallthru
    _
  %v18 = vld [vmem:[%s0] sm:$0xff]
  %v19 = vld [vmem:[%s0 + $0x8] sm:$0xff]
  %v20 = vld [vmem:[%s0 + $0x10] sm:$0xff]
  %v21 = vld [vmem:[%s0 + $0x18] sm:$0xff]
  %v22 = vld [vmem:[%s0 + $0x20] sm:$0xff]
  %v23 = vld [vmem:[%s0 + $0x28] sm:$0xff]
  %v24 = vld [vmem:[%s0 + $0x30] sm:$0xff]
  %v25 = vld [vmem:[%s0 + $0x38] sm:$0xff]
  %v26 = vld [vmem:[%s0 + $0x40] sm:$0xff]
  %v27 = vld [vmem:[%s0 + $0x48] sm:$0xff]
  %v28 = vld [vmem:[%s0 + $0x50] sm:$0xff]
  %v29 = vld [vmem:[%s0 + $0x58] sm:$0xff]
  %v30 = vld [vmem:[%s0 + $0x60] sm:$0xf]
  %v31 = vld [vmem:[%s0 + $0x64] sm:$0xff]
  %v32 = vld [vmem:[%s0 + $0x6c] sm:$0xff]
  %v33 = vld [vmem:[%s0 + $0x74] sm:$0xff]
  %v34 = vld [vmem:[%s0 + $0x7c] sm:$0xff]
  %v35 = vld [vmem:[%s0 + $0x84] sm:$0xff]
  %v36 = vld [vmem:[%s0 + $0x8c] sm:$0xff]
  %v37 = vld [vmem:[%s0 + $0x94] sm:$0xff]
  %v38 = vld [vmem:[%s0 + $0x9c] sm:$0xff]
  %v39 = vld [vmem:[%s0 + $0xa4] sm:$0xff]
  %v40 = vld [vmem:[%s0 + $0xac] sm:$0xff]
  %v41 = vld [vmem:[%s0 + $0xb4] sm:$0xff]
  %v42 = vld [vmem:[%s0 + $0xbc] sm:$0xff]
  %v43 = vld [vmem:[%s0 + $0xc4] sm:$0xf]
  %v44 = vld [vmem:[%s0 + $0xc8] sm:$0xff]
  %v45 = vld [vmem:[%s0 + $0xd0] sm:$0xff]
  %v46 = vld [vmem:[%s0 + $0xd8] sm:$0xff]
  %v47 = vld [vmem:[%s0 + $0xe0] sm:$0xff]
  %v48 = vld [vmem:[%s0 + $0xe8] sm:$0xff]
  %v49 = vld [vmem:[%s0 + $0xf0] sm:$0xff]
  %v50 = vld [vmem:[%s0 + $0xf8] sm:$0xff]
  %v51 = vld [vmem:[%s0 + $0x100] sm:$0xff]
  %v52 = vld [vmem:[%s0 + $0x108] sm:$0xff]
  %v53 = vld [vmem:[%s0 + $0x110] sm:$0xff]
  %v54 = vld [vmem:[%s0 + $0x118] sm:$0xff]
  %v55 = vld [vmem:[%s0 + $0x120] sm:$0xff]
  %v56 = vld [vmem:[%s0 + $0x128] sm:$0xf]
  %v57 = vld [vmem:[%s0 + $0x12c] sm:$0xff]
  %v58 = vld [vmem:[%s0 + $0x134] sm:$0xff]
  %v59 = vld [vmem:[%s0 + $0x13c] sm:$0xff]
  %v60 = vld [vmem:[%s0 + $0x144] sm:$0xff]
  %v61 = vld [vmem:[%s0 + $0x14c] sm:$0xff]
  %v62 = vld [vmem:[%s0 + $0x154] sm:$0xff]
  %v63 = vld [vmem:[%s0 + $0x15c] sm:$0xff]
  %v64 = vld [vmem:[%s0 + $0x164] sm:$0xff]
  %v65 = vld [vmem:[%s0 + $0x16c] sm:$0xff]
  %v66 = vld [vmem:[%s0 + $0x174] sm:$0xff]
  %v67 = vld [vmem:[%s0 + $0x17c] sm:$0xff]
  %v68 = vld [vmem:[%s0 + $0x184] sm:$0xff]
  %v69 = vld [vmem:[%s0 + $0x18c] sm:$0xf]
  %v70 = vld [vmem:[%s0 + $0x190] sm:$0xff]
  %v71 = vld [vmem:[%s0 + $0x198] sm:$0xff]
  %v72 = vld [vmem:[%s0 + $0x1a0] sm:$0xff]
  %v73 = vld [vmem:[%s0 + $0x1a8] sm:$0xff]
  %v74 = vld [vmem:[%s0 + $0x1b0] sm:$0xff]
  %v75 = vld [vmem:[%s0 + $0x1b8] sm:$0xff]
  %v76 = vld [vmem:[%s0 + $0x1c0] sm:$0xff]
  %v77 = vld [vmem:[%s0 + $0x1c8] sm:$0xff]
  %v78 = vld [vmem:[%s0 + $0x1d0] sm:$0xff]
  %v79 = vld [vmem:[%s0 + $0x1d8] sm:$0xff]
  %v80 = vld [vmem:[%s0 + $0x1e0] sm:$0xff]
  %v81 = vld [vmem:[%s0 + $0x1e8] sm:$0xff]
  %v82 = vld [vmem:[%s0 + $0x1f0] sm:$0xf]
  %v83 = vld [vmem:[%s0 + $0x1f4] sm:$0xff]
  %v84 = vld [vmem:[%s0 + $0x1fc] sm:$0xff]
  %v85 = vld [vmem:[%s0 + $0x204] sm:$0xff]
  %v86 = vld [vmem:[%s0 + $0x20c] sm:$0xff]
  %v87 = vld [vmem:[%s0 + $0x214] sm:$0xff]
  %v88 = vld [vmem:[%s0 + $0x21c] sm:$0xff]
  %v89 = vld [vmem:[%s0 + $0x224] sm:$0xff]
  %v90 = vld [vmem:[%s0 + $0x22c] sm:$0xff]
  %v91 = vld [vmem:[%s0 + $0x234] sm:$0xff]
  %v92 = vld [vmem:[%s0 + $0x23c] sm:$0xff]
  %v93 = vld [vmem:[%s0 + $0x244] sm:$0xff]
  %v94 = vld [vmem:[%s0 + $0x24c] sm:$0xff]
  %v95 = vld [vmem:[%s0 + $0x254] sm:$0xf]
  %v96 = vld [vmem:[%s0 + $0x258] sm:$0xff]
  %v97 = vld [vmem:[%s0 + $0x260] sm:$0xff]
  %v98 = vld [vmem:[%s0 + $0x268] sm:$0xff]
  %v99 = vld [vmem:[%s0 + $0x270] sm:$0xff]
  %v100 = vld [vmem:[%s0 + $0x278] sm:$0xff]
  %v101 = vld [vmem:[%s0 + $0x280] sm:$0xff]
  %v102 = vld [vmem:[%s0 + $0x288] sm:$0xff]
  %v103 = vld [vmem:[%s0 + $0x290] sm:$0xff]
  %v104 = vld [vmem:[%s0 + $0x298] sm:$0xff]
  %v105 = vld [vmem:[%s0 + $0x2a0] sm:$0xff]
  %v106 = vld [vmem:[%s0 + $0x2a8] sm:$0xff]
  %v107 = vld [vmem:[%s0 + $0x2b0] sm:$0xff]
  %v108 = vld [vmem:[%s0 + $0x2b8] sm:$0xf]
  %v109 = vld [vmem:[%s0 + $0x2bc] sm:$0xff]
  %v110 = vld [vmem:[%s0 + $0x2c4] sm:$0xff]
  %v111 = vld [vmem:[%s0 + $0x2cc] sm:$0xff]
  %v112 = vld [vmem:[%s0 + $0x2d4] sm:$0xff]
  %v113 = vld [vmem:[%s0 + $0x2dc] sm:$0xff]
  %v114 = vld [vmem:[%s0 + $0x2e4] sm:$0xff]
  %v115 = vld [vmem:[%s0 + $0x2ec] sm:$0xff]
  %v116 = vld [vmem:[%s0 + $0x2f4] sm:$0xff]
  %v117 = vld [vmem:[%s0 + $0x2fc] sm:$0xff]
  %v118 = vld [vmem:[%s0 + $0x304] sm:$0xff]
  %v119 = vld [vmem:[%s0 + $0x30c] sm:$0xff]
  %v120 = vld [vmem:[%s0 + $0x314] sm:$0xff]
  %v121 = vld [vmem:[%s0 + $0x31c] sm:$0xf]
  %v122 = vld [vmem:[%s0 + $0x320] sm:$0xff]
  %v123 = vld [vmem:[%s0 + $0x328] sm:$0xff]
  %v124 = vld [vmem:[%s0 + $0x330] sm:$0xff]
  %v125 = vld [vmem:[%s0 + $0x338] sm:$0xff]
  %v126 = vld [vmem:[%s0 + $0x340] sm:$0xff]
  %v127 = vld [vmem:[%s0 + $0x348] sm:$0xff]
  %v128 = vld [vmem:[%s0 + $0x350] sm:$0xff]
  %v129 = vld [vmem:[%s0 + $0x358] sm:$0xff]
  %v130 = vld [vmem:[%s0 + $0x360] sm:$0xff]
  %v131 = vld [vmem:[%s0 + $0x368] sm:$0xff]
  %v132 = vld [vmem:[%s0 + $0x370] sm:$0xff]
  %v133 = vld [vmem:[%s0 + $0x378] sm:$0xff]
  %v134 = vld [vmem:[%s0 + $0x380] sm:$0xf]
  %v135 = vld [vmem:[%s0 + $0x384] sm:$0xff]
  %v136 = vld [vmem:[%s0 + $0x38c] sm:$0xff]
  %v137 = vld [vmem:[%s0 + $0x394] sm:$0xff]
  %v138 = vld [vmem:[%s0 + $0x39c] sm:$0xff]
  %v139 = vld [vmem:[%s0 + $0x3a4] sm:$0xff]
  %v140 = vld [vmem:[%s0 + $0x3ac] sm:$0xff]
  %v141 = vld [vmem:[%s0 + $0x3b4] sm:$0xff]
  %v142 = vld [vmem:[%s0 + $0x3bc] sm:$0xff]
  %v143 = vld [vmem:[%s0 + $0x3c4] sm:$0xff]
  %v144 = vld [vmem:[%s0 + $0x3cc] sm:$0xff]
  %v145 = vld [vmem:[%s0 + $0x3d4] sm:$0xff]
  %v146 = vld [vmem:[%s0 + $0x3dc] sm:$0xff]
  %v147 = vld [vmem:[%s0 + $0x3e4] sm:$0xf]
  %v148 = vld [vmem:[%s0 + $0x3e8] sm:$0xff]
  %v149 = vld [vmem:[%s0 + $0x3f0] sm:$0xff]
  %v150 = vld [vmem:[%s0 + $0x3f8] sm:$0xff]
  %v151 = vld [vmem:[%s0 + $0x400] sm:$0xff]
  %v152 = vld [vmem:[%s0 + $0x408] sm:$0xff]
  %v153 = vld [vmem:[%s0 + $0x410] sm:$0xff]
  %v154 = vld [vmem:[%s0 + $0x418] sm:$0xff]
  %v155 = vld [vmem:[%s0 + $0x420] sm:$0xff]
  %v156 = vld [vmem:[%s0 + $0x428] sm:$0xff]
  %v157 = vld [vmem:[%s0 + $0x430] sm:$0xff]
  %v158 = vld [vmem:[%s0 + $0x438] sm:$0xff]
  %v159 = vld [vmem:[%s0 + $0x440] sm:$0xff]
  %v160 = vld [vmem:[%s0 + $0x448] sm:$0xf]
  %v161 = vld [vmem:[%s0 + $0x44c] sm:$0xff]
  %v162 = vld [vmem:[%s0 + $0x454] sm:$0xff]
  %v163 = vld [vmem:[%s0 + $0x45c] sm:$0xff]
  %v164 = vld [vmem:[%s0 + $0x464] sm:$0xff]
  %v165 = vld [vmem:[%s0 + $0x46c] sm:$0xff]
  %v166 = vld [vmem:[%s0 + $0x474] sm:$0xff]
  %v167 = vld [vmem:[%s0 + $0x47c] sm:$0xff]
  %v168 = vld [vmem:[%s0 + $0x484] sm:$0xff]
  %v169 = vld [vmem:[%s0 + $0x48c] sm:$0xff]
  %v170 = vld [vmem:[%s0 + $0x494] sm:$0xff]
  %v171 = vld [vmem:[%s0 + $0x49c] sm:$0xff]
  %v172 = vld [vmem:[%s0 + $0x4a4] sm:$0xff]
  %v173 = vld [vmem:[%s0 + $0x4ac] sm:$0xf]
  %v174 = vld [vmem:[%s0 + $0x4b0] sm:$0xff]
  %v175 = vld [vmem:[%s0 + $0x4b8] sm:$0xff]
  %v176 = vld [vmem:[%s0 + $0x4c0] sm:$0xff]
  %v177 = vld [vmem:[%s0 + $0x4c8] sm:$0xff]
  %v178 = vld [vmem:[%s0 + $0x4d0] sm:$0xff]
  %v179 = vld [vmem:[%s0 + $0x4d8] sm:$0xff]
  %v180 = vld [vmem:[%s0 + $0x4e0] sm:$0xff]
  %v181 = vld [vmem:[%s0 + $0x4e8] sm:$0xff]
  %v182 = vld [vmem:[%s0 + $0x4f0] sm:$0xff]
  %v183 = vld [vmem:[%s0 + $0x4f8] sm:$0xff]
  %v184 = vld [vmem:[%s0 + $0x500] sm:$0xff]
  %v185 = vld [vmem:[%s0 + $0x508] sm:$0xff]
  %v186 = vld [vmem:[%s0 + $0x510] sm:$0xf]
  %v187 = vld [vmem:[%s0 + $0x514] sm:$0xff]
  %v188 = vld [vmem:[%s0 + $0x51c] sm:$0xff]
  %v189 = vld [vmem:[%s0 + $0x524] sm:$0xff]
  %v190 = vld [vmem:[%s0 + $0x52c] sm:$0xff]
  %v191 = vld [vmem:[%s0 + $0x534] sm:$0xff]
  %v192 = vld [vmem:[%s0 + $0x53c] sm:$0xff]
  %v193 = vld [vmem:[%s0 + $0x544] sm:$0xff]
  %v194 = vld [vmem:[%s0 + $0x54c] sm:$0xff]
  %v195 = vld [vmem:[%s0 + $0x554] sm:$0xff]
  %v196 = vld [vmem:[%s0 + $0x55c] sm:$0xff]
  %v197 = vld [vmem:[%s0 + $0x564] sm:$0xff]
  %v198 = vld [vmem:[%s0 + $0x56c] sm:$0xff]
  %v199 = vld [vmem:[%s0 + $0x574] sm:$0xf]
  %v200 = vld [vmem:[%s0 + $0x578] sm:$0xff]
  %v201 = vld [vmem:[%s0 + $0x580] sm:$0xff]
  %v202 = vld [vmem:[%s0 + $0x588] sm:$0xff]
  %v203 = vld [vmem:[%s0 + $0x590] sm:$0xff]
  %v204 = vld [vmem:[%s0 + $0x598] sm:$0xff]
  %v205 = vld [vmem:[%s0 + $0x5a0] sm:$0xff]
  %v206 = vld [vmem:[%s0 + $0x5a8] sm:$0xff]
  %v207 = vld [vmem:[%s0 + $0x5b0] sm:$0xff]
  %v208 = vld [vmem:[%s0 + $0x5b8] sm:$0xff]
  %v209 = vld [vmem:[%s0 + $0x5c0] sm:$0xff]
  %v210 = vld [vmem:[%s0 + $0x5c8] sm:$0xff]
  %v211 = vld [vmem:[%s0 + $0x5d0] sm:$0xff]
  %v212 = vld [vmem:[%s0 + $0x5d8] sm:$0xf]
  %v213 = vld [vmem:[%s0 + $0x5dc] sm:$0xff]
  %v214 = vld [vmem:[%s0 + $0x5e4] sm:$0xff]
  %v215 = vld [vmem:[%s0 + $0x5ec] sm:$0xff]
  %v216 = vld [vmem:[%s0 + $0x5f4] sm:$0xff]
  %v217 = vld [vmem:[%s0 + $0x5fc] sm:$0xff]
  %v218 = vld [vmem:[%s0 + $0x604] sm:$0xff]
  %v219 = vld [vmem:[%s0 + $0x60c] sm:$0xff]
  %v220 = vld [vmem:[%s0 + $0x614] sm:$0xff]
  %v221 = vld [vmem:[%s0 + $0x61c] sm:$0xff]
  %v222 = vld [vmem:[%s0 + $0x624] sm:$0xff]
  %v223 = vld [vmem:[%s0 + $0x62c] sm:$0xff]
  %v224 = vld [vmem:[%s0 + $0x634] sm:$0xff]
  %v225 = vld [vmem:[%s0 + $0x63c] sm:$0xf]
  %v226 = vld [vmem:[%s1] sm:$0xf]
  %v227 = vld [vmem:[%s1 + $0x4] sm:$0xf]
  %v228 = vld [vmem:[%s1 + $0x8] sm:$0xf]
  %v229 = vld [vmem:[%s1 + $0xc] sm:$0xf]
  %v230 = vld [vmem:[%s1 + $0x10] sm:$0xf]
  %v231 = vld [vmem:[%s1 + $0x14] sm:$0xf]
  %v232 = vld [vmem:[%s1 + $0x18] sm:$0xf]
  %v233 = vld [vmem:[%s1 + $0x1c] sm:$0xf]
  %v234 = vld [vmem:[%s1 + $0x20] sm:$0xf]
  %v235 = vld [vmem:[%s1 + $0x24] sm:$0xf]
  %v236 = vld [vmem:[%s1 + $0x28] sm:$0xf]
  %v237 = vld [vmem:[%s1 + $0x2c] sm:$0xf]
  %v238 = vld [vmem:[%s1 + $0x30] sm:$0xf]
  %v239 = vld [vmem:[%s1 + $0x34] sm:$0xf]
  %v240 = vld [vmem:[%s1 + $0x38] sm:$0xf]
  %v241 = vld [vmem:[%s1 + $0x3c] sm:$0xf]
  %v242 = vld [vmem:[%s1 + $0x40] sm:$0xf]
  %v243 = vld [vmem:[%s1 + $0x44] sm:$0xf]
  %v244 = vld [vmem:[%s1 + $0x48] sm:$0xf]
  %v245 = vld [vmem:[%s1 + $0x4c] sm:$0xf]
  %v246 = vld [vmem:[%s1 + $0x50] sm:$0xf]
  %v247 = vld [vmem:[%s1 + $0x54] sm:$0xf]
  %v248 = vld [vmem:[%s1 + $0x58] sm:$0xf]
  %v249 = vld [vmem:[%s1 + $0x5c] sm:$0xf]
  %v250 = vld [vmem:[%s1 + $0x60] sm:$0xf]
  %v251 = vld [vmem:[%s1 + $0x64] sm:$0xf]
  %v252 = vld [vmem:[%s1 + $0x68] sm:$0xf]
  %v253 = vld [vmem:[%s1 + $0x6c] sm:$0xf]
  %v254 = vld [vmem:[%s1 + $0x70] sm:$0xf]
  %v255 = vld [vmem:[%s1 + $0x74] sm:$0xf]
  %v256 = vld [vmem:[%s1 + $0x78] sm:$0xf]
  %v257 = vld [vmem:[%s1 + $0x7c] sm:$0xf]
  %v258 = vld [vmem:[%s1 + $0x80] sm:$0xf]
  %v259 = vld [vmem:[%s1 + $0x84] sm:$0xf]
  %v260 = vld [vmem:[%s1 + $0x88] sm:$0xf]
  %v261 = vld [vmem:[%s1 + $0x8c] sm:$0xf]
  %v262 = vld [vmem:[%s1 + $0x90] sm:$0xf]
  %v263 = vld [vmem:[%s1 + $0x94] sm:$0xf]
  %v264 = vld [vmem:[%s1 + $0x98] sm:$0xf]
  %v265 = vld [vmem:[%s1 + $0x9c] sm:$0xf]
  %v266 = vld [vmem:[%s1 + $0xa0] sm:$0xf]
  %v267 = vld [vmem:[%s1 + $0xa4] sm:$0xf]
  %v268 = vld [vmem:[%s1 + $0xa8] sm:$0xf]
  %v269 = vld [vmem:[%s1 + $0xac] sm:$0xf]
  %v270 = vld [vmem:[%s1 + $0xb0] sm:$0xf]
  %v271 = vld [vmem:[%s1 + $0xb4] sm:$0xf]
  %v272 = vld [vmem:[%s1 + $0xb8] sm:$0xf]
  %v273 = vld [vmem:[%s1 + $0xbc] sm:$0xf]
  %v274 = vld [vmem:[%s1 + $0xc0] sm:$0xf]
  %v275 = vld [vmem:[%s1 + $0xc4] sm:$0xf]
  %v276 = vld [vmem:[%s1 + $0xc8] sm:$0xf]
  %v277 = vld [vmem:[%s1 + $0xcc] sm:$0xf]
  %v278 = vld [vmem:[%s1 + $0xd0] sm:$0xf]
  %v279 = vld [vmem:[%s1 + $0xd4] sm:$0xf]
  %v280 = vld [vmem:[%s1 + $0xd8] sm:$0xf]
  %v281 = vld [vmem:[%s1 + $0xdc] sm:$0xf]
  %v282 = vld [vmem:[%s1 + $0xe0] sm:$0xf]
  %v283 = vld [vmem:[%s1 + $0xe4] sm:$0xf]
  %v284 = vld [vmem:[%s1 + $0xe8] sm:$0xf]
  %v285 = vld [vmem:[%s1 + $0xec] sm:$0xf]
  %v286 = vld [vmem:[%s1 + $0xf0] sm:$0xf]
  %v287 = vld [vmem:[%s1 + $0xf4] sm:$0xf]
  %v288 = vld [vmem:[%s1 + $0xf8] sm:$0xf]
  %v289 = vld [vmem:[%s1 + $0xfc] sm:$0xf]
  %v290 = vld [vmem:[%s1 + $0x100] sm:$0xf]
  %v291 = vld [vmem:[%s1 + $0x104] sm:$0xf]
  %v292 = vld [vmem:[%s1 + $0x108] sm:$0xf]
  %v293 = vld [vmem:[%s1 + $0x10c] sm:$0xf]
  %v294 = vld [vmem:[%s1 + $0x110] sm:$0xf]
  %v295 = vld [vmem:[%s1 + $0x114] sm:$0xf]
  %v296 = vld [vmem:[%s1 + $0x118] sm:$0xf]
  %v297 = vld [vmem:[%s1 + $0x11c] sm:$0xf]
  %v298 = vld [vmem:[%s1 + $0x120] sm:$0xf]
  %v299 = vld [vmem:[%s1 + $0x124] sm:$0xf]
  %v300 = vld [vmem:[%s1 + $0x128] sm:$0xf]
  %v301 = vld [vmem:[%s1 + $0x12c] sm:$0xf]
  %v302 = vld [vmem:[%s1 + $0x130] sm:$0xf]
  %v303 = vld [vmem:[%s1 + $0x134] sm:$0xf]
  %v304 = vld [vmem:[%s1 + $0x138] sm:$0xf]
  %v305 = vld [vmem:[%s1 + $0x13c] sm:$0xf]
  %v306 = vld [vmem:[%s1 + $0x140] sm:$0xf]
  %v307 = vld [vmem:[%s1 + $0x144] sm:$0xf]
  %v308 = vld [vmem:[%s1 + $0x148] sm:$0xf]
  %v309 = vld [vmem:[%s1 + $0x14c] sm:$0xf]
  %v310 = vld [vmem:[%s1 + $0x150] sm:$0xf]
  %v311 = vld [vmem:[%s1 + $0x154] sm:$0xf]
  %v312 = vld [vmem:[%s1 + $0x158] sm:$0xf]
  %v313 = vld [vmem:[%s1 + $0x15c] sm:$0xf]
  %v314 = vld [vmem:[%s1 + $0x160] sm:$0xf]
  %v315 = vld [vmem:[%s1 + $0x164] sm:$0xf]
  %v316 = vld [vmem:[%s1 + $0x168] sm:$0xf]
  %v317 = vld [vmem:[%s1 + $0x16c] sm:$0xf]
  %v318 = vld [vmem:[%s1 + $0x170] sm:$0xf]
  %v319 = vld [vmem:[%s1 + $0x174] sm:$0xf]
  %v320 = vld [vmem:[%s1 + $0x178] sm:$0xf]
  %v321 = vld [vmem:[%s1 + $0x17c] sm:$0xf]
  %v322 = vld [vmem:[%s1 + $0x180] sm:$0xf]
  %v323 = vld [vmem:[%s1 + $0x184] sm:$0xf]
  %v324 = vld [vmem:[%s1 + $0x188] sm:$0xf]
  %v325 = vld [vmem:[%s1 + $0x18c] sm:$0xf]
  %v326 = vld [vmem:[%s1 + $0x190] sm:$0xf]
  %v327 = vld [vmem:[%s1 + $0x194] sm:$0xf]
  %v328 = vld [vmem:[%s1 + $0x198] sm:$0xf]
  %v329 = vld [vmem:[%s1 + $0x19c] sm:$0xf]
  %v330 = vld [vmem:[%s1 + $0x1a0] sm:$0xf]
  %v331 = vld [vmem:[%s1 + $0x1a4] sm:$0xf]
  %v332 = vld [vmem:[%s1 + $0x1a8] sm:$0xf]
  %v333 = vld [vmem:[%s1 + $0x1ac] sm:$0xf]
  %v334 = vld [vmem:[%s1 + $0x1b0] sm:$0xf]
  %v335 = vld [vmem:[%s1 + $0x1b4] sm:$0xf]
  %v336 = vld [vmem:[%s1 + $0x1b8] sm:$0xf]
  %v337 = vld [vmem:[%s1 + $0x1bc] sm:$0xf]
  %v338 = vld [vmem:[%s1 + $0x1c0] sm:$0xf]
  %v339 = vld [vmem:[%s1 + $0x1c4] sm:$0xf]
  %v340 = vld [vmem:[%s1 + $0x1c8] sm:$0xf]
  %v341 = vld [vmem:[%s1 + $0x1cc] sm:$0xf]
  %v342 = vld [vmem:[%s1 + $0x1d0] sm:$0xf]
  %v343 = vld [vmem:[%s1 + $0x1d4] sm:$0xf]
  %v344 = vld [vmem:[%s1 + $0x1d8] sm:$0xf]
  %v345 = vld [vmem:[%s1 + $0x1dc] sm:$0xf]
  %v346 = vld [vmem:[%s1 + $0x1e0] sm:$0xf]
  %v347 = vld [vmem:[%s1 + $0x1e4] sm:$0xf]
  %v348 = vld [vmem:[%s1 + $0x1e8] sm:$0xf]
  %v349 = vld [vmem:[%s1 + $0x1ec] sm:$0xf]
  %v350 = vld [vmem:[%s1 + $0x1f0] sm:$0xf]
  %v351 = vld [vmem:[%s1 + $0x1f4] sm:$0xf]
  %v352 = vld [vmem:[%s1 + $0x1f8] sm:$0xf]
  %v353 = vld [vmem:[%s1 + $0x1fc] sm:$0xf]
  %v354 = vld [vmem:[%s1 + $0x200] sm:$0xf]
  %v355 = vld [vmem:[%s1 + $0x204] sm:$0xf]
  %v356 = vld [vmem:[%s1 + $0x208] sm:$0xf]
  %v357 = vld [vmem:[%s1 + $0x20c] sm:$0xf]
  %v358 = vld [vmem:[%s1 + $0x210] sm:$0xf]
  %v359 = vld [vmem:[%s1 + $0x214] sm:$0xf]
  %v360 = vld [vmem:[%s1 + $0x218] sm:$0xf]
  %v361 = vld [vmem:[%s1 + $0x21c] sm:$0xf]
  %v362 = vld [vmem:[%s1 + $0x220] sm:$0xf]
  %v363 = vld [vmem:[%s1 + $0x224] sm:$0xf]
  %v364 = vld [vmem:[%s1 + $0x228] sm:$0xf]
  %v365 = vld [vmem:[%s1 + $0x22c] sm:$0xf]
  %v366 = vld [vmem:[%s1 + $0x230] sm:$0xf]
  %v367 = vld [vmem:[%s1 + $0x234] sm:$0xf]
  %v368 = vld [vmem:[%s1 + $0x238] sm:$0xf]
  %v369 = vld [vmem:[%s1 + $0x23c] sm:$0xf]
  %v370 = vld [vmem:[%s1 + $0x240] sm:$0xf]
  %v371 = vld [vmem:[%s1 + $0x244] sm:$0xf]
  %v372 = vld [vmem:[%s1 + $0x248] sm:$0xf]
  %v373 = vld [vmem:[%s1 + $0x24c] sm:$0xf]
  %v374 = vld [vmem:[%s1 + $0x250] sm:$0xf]
  %v375 = vld [vmem:[%s1 + $0x254] sm:$0xf]
  %v376 = vld [vmem:[%s1 + $0x258] sm:$0xf]
  %v377 = vld [vmem:[%s1 + $0x25c] sm:$0xf]
  %v378 = vld [vmem:[%s1 + $0x260] sm:$0xf]
  %v379 = vld [vmem:[%s1 + $0x264] sm:$0xf]
  %v380 = vld [vmem:[%s1 + $0x268] sm:$0xf]
  %v381 = vld [vmem:[%s1 + $0x26c] sm:$0xf]
  %v382 = vld [vmem:[%s1 + $0x270] sm:$0xf]
  %v383 = vld [vmem:[%s1 + $0x274] sm:$0xf]
  %v384 = vld [vmem:[%s1 + $0x278] sm:$0xf]
  %v385 = vld [vmem:[%s1 + $0x27c] sm:$0xf]
  %v386 = vld [vmem:[%s1 + $0x280] sm:$0xf]
  %v387 = vld [vmem:[%s1 + $0x284] sm:$0xf]
  %v388 = vld [vmem:[%s1 + $0x288] sm:$0xf]
  %v389 = vld [vmem:[%s1 + $0x28c] sm:$0xf]
  %v390 = vld [vmem:[%s1 + $0x290] sm:$0xf]
  %v391 = vld [vmem:[%s1 + $0x294] sm:$0xf]
  %v392 = vld [vmem:[%s1 + $0x298] sm:$0xf]
  %v393 = vld [vmem:[%s1 + $0x29c] sm:$0xf]
  %v394 = vld [vmem:[%s1 + $0x2a0] sm:$0xf]
  %v395 = vld [vmem:[%s1 + $0x2a4] sm:$0xf]
  %v396 = vld [vmem:[%s1 + $0x2a8] sm:$0xf]
  %v397 = vld [vmem:[%s1 + $0x2ac] sm:$0xf]
  %v398 = vld [vmem:[%s1 + $0x2b0] sm:$0xf]
  %v399 = vld [vmem:[%s1 + $0x2b4] sm:$0xf]
  %v400 = vld [vmem:[%s1 + $0x2b8] sm:$0xf]
  %v401 = vld [vmem:[%s1 + $0x2bc] sm:$0xf]
  %v402 = vld [vmem:[%s1 + $0x2c0] sm:$0xf]
  %v403 = vld [vmem:[%s1 + $0x2c4] sm:$0xf]
  %v404 = vld [vmem:[%s1 + $0x2c8] sm:$0xf]
  %v405 = vld [vmem:[%s1 + $0x2cc] sm:$0xf]
  %v406 = vld [vmem:[%s1 + $0x2d0] sm:$0xf]
  %v407 = vld [vmem:[%s1 + $0x2d4] sm:$0xf]
  %v408 = vld [vmem:[%s1 + $0x2d8] sm:$0xf]
  %v409 = vld [vmem:[%s1 + $0x2dc] sm:$0xf]
  %v410 = vld [vmem:[%s1 + $0x2e0] sm:$0xf]
  %v411 = vld [vmem:[%s1 + $0x2e4] sm:$0xf]
  %v412 = vld [vmem:[%s1 + $0x2e8] sm:$0xf]
  %v413 = vld [vmem:[%s1 + $0x2ec] sm:$0xf]
  %v414 = vld [vmem:[%s1 + $0x2f0] sm:$0xf]
  %v415 = vld [vmem:[%s1 + $0x2f4] sm:$0xf]
  %v416 = vld [vmem:[%s1 + $0x2f8] sm:$0xf]
  %v417 = vld [vmem:[%s1 + $0x2fc] sm:$0xf]
  %v418 = vld [vmem:[%s1 + $0x300] sm:$0xf]
  %v419 = vld [vmem:[%s1 + $0x304] sm:$0xf]
  %v420 = vld [vmem:[%s1 + $0x308] sm:$0xf]
  %v421 = vld [vmem:[%s1 + $0x30c] sm:$0xf]
  %v422 = vld [vmem:[%s1 + $0x310] sm:$0xf]
  %v423 = vld [vmem:[%s1 + $0x314] sm:$0xf]
  %v424 = vld [vmem:[%s1 + $0x318] sm:$0xf]
  %v425 = vld [vmem:[%s1 + $0x31c] sm:$0xf]
  %v426 = vld [vmem:[%s1 + $0x320] sm:$0xf]
  %v427 = vld [vmem:[%s1 + $0x324] sm:$0xf]
  %v428 = vld [vmem:[%s1 + $0x328] sm:$0xf]
  %v429 = vld [vmem:[%s1 + $0x32c] sm:$0xf]
  %v430 = vld [vmem:[%s1 + $0x330] sm:$0xf]
  %v431 = vld [vmem:[%s1 + $0x334] sm:$0xf]
  %v432 = vld [vmem:[%s1 + $0x338] sm:$0xf]
  %v433 = vld [vmem:[%s1 + $0x33c] sm:$0xf]
  %v434 = vld [vmem:[%s1 + $0x340] sm:$0xf]
  %v435 = vld [vmem:[%s1 + $0x344] sm:$0xf]
  %v436 = vld [vmem:[%s1 + $0x348] sm:$0xf]
  %v437 = vld [vmem:[%s1 + $0x34c] sm:$0xf]
  %v438 = vld [vmem:[%s1 + $0x350] sm:$0xf]
  %v439 = vld [vmem:[%s1 + $0x354] sm:$0xf]
  %v440 = vld [vmem:[%s1 + $0x358] sm:$0xf]
  %v441 = vld [vmem:[%s1 + $0x35c] sm:$0xf]
  %v442 = vld [vmem:[%s1 + $0x360] sm:$0xf]
  %v443 = vld [vmem:[%s1 + $0x364] sm:$0xf]
  %v444 = vld [vmem:[%s1 + $0x368] sm:$0xf]
  %v445 = vld [vmem:[%s1 + $0x36c] sm:$0xf]
  %v446 = vld [vmem:[%s1 + $0x370] sm:$0xf]
  %v447 = vld [vmem:[%s1 + $0x374] sm:$0xf]
  %v448 = vld [vmem:[%s1 + $0x378] sm:$0xf]
  %v449 = vld [vmem:[%s1 + $0x37c] sm:$0xf]
  %v450 = vld [vmem:[%s1 + $0x380] sm:$0xf]
  %v451 = vld [vmem:[%s1 + $0x384] sm:$0xf]
  %v452 = vld [vmem:[%s1 + $0x388] sm:$0xf]
  %v453 = vld [vmem:[%s1 + $0x38c] sm:$0xf]
  %v454 = vld [vmem:[%s1 + $0x390] sm:$0xf]
  %v455 = vld [vmem:[%s1 + $0x394] sm:$0xf]
  %v456 = vld [vmem:[%s1 + $0x398] sm:$0xf]
  %v457 = vld [vmem:[%s1 + $0x39c] sm:$0xf]
  %v458 = vld [vmem:[%s1 + $0x3a0] sm:$0xf]
  %v459 = vld [vmem:[%s1 + $0x3a4] sm:$0xf]
  %v460 = vld [vmem:[%s1 + $0x3a8] sm:$0xf]
  %v461 = vld [vmem:[%s1 + $0x3ac] sm:$0xf]
  %v462 = vld [vmem:[%s1 + $0x3b0] sm:$0xf]
  %v463 = vld [vmem:[%s1 + $0x3b4] sm:$0xf]
  %v464 = vld [vmem:[%s1 + $0x3b8] sm:$0xf]
  %v465 = vld [vmem:[%s1 + $0x3bc] sm:$0xf]
  %v466 = vld [vmem:[%s1 + $0x3c0] sm:$0xf]
  %v467 = vld [vmem:[%s1 + $0x3c4] sm:$0xf]
  %v468 = vld [vmem:[%s1 + $0x3c8] sm:$0xf]
  %v469 = vld [vmem:[%s1 + $0x3cc] sm:$0xf]
  %v470 = vld [vmem:[%s1 + $0x3d0] sm:$0xf]
  %v471 = vld [vmem:[%s1 + $0x3d4] sm:$0xf]
  %v472 = vld [vmem:[%s1 + $0x3d8] sm:$0xf]
  %v473 = vld [vmem:[%s1 + $0x3dc] sm:$0xf]
  %v474 = vld [vmem:[%s1 + $0x3e0] sm:$0xf]
  %v475 = vld [vmem:[%s1 + $0x3e4] sm:$0xf]
  %v476 = vld [vmem:[%s1 + $0x3e8] sm:$0xf]
  %v477 = vld [vmem:[%s1 + $0x3ec] sm:$0xf]
  %v478 = vld [vmem:[%s1 + $0x3f0] sm:$0xf]
  %v479 = vld [vmem:[%s1 + $0x3f4] sm:$0xf]
  %v480 = vld [vmem:[%s1 + $0x3f8] sm:$0xf]
  %v481 = vld [vmem:[%s1 + $0x3fc] sm:$0xf]
  %v482 = vld [vmem:[%s1 + $0x400] sm:$0xf]
  %v483 = vld [vmem:[%s1 + $0x404] sm:$0xf]
  %v484 = vld [vmem:[%s1 + $0x408] sm:$0xf]
  %v485 = vld [vmem:[%s1 + $0x40c] sm:$0xf]
  %v486 = vld [vmem:[%s1 + $0x410] sm:$0xf]
  %v487 = vld [vmem:[%s1 + $0x414] sm:$0xf]
  %v488 = vld [vmem:[%s1 + $0x418] sm:$0xf]
  %v489 = vld [vmem:[%s1 + $0x41c] sm:$0xf]
  %v490 = vld [vmem:[%s1 + $0x420] sm:$0xf]
  %v491 = vld [vmem:[%s1 + $0x424] sm:$0xf]
  %v492 = vld [vmem:[%s1 + $0x428] sm:$0xf]
  %v493 = vld [vmem:[%s1 + $0x42c] sm:$0xf]
  %v494 = vld [vmem:[%s1 + $0x430] sm:$0xf]
  %v495 = vld [vmem:[%s1 + $0x434] sm:$0xf]
  %v496 = vld [vmem:[%s1 + $0x438] sm:$0xf]
  %v497 = vld [vmem:[%s1 + $0x43c] sm:$0xf]
  %v498 = vld [vmem:[%s1 + $0x440] sm:$0xf]
  %v499 = vld [vmem:[%s1 + $0x444] sm:$0xf]
  %v500 = vld [vmem:[%s1 + $0x448] sm:$0xf]
  %v501 = vld [vmem:[%s1 + $0x44c] sm:$0xf]
  %v502 = vld [vmem:[%s1 + $0x450] sm:$0xf]
  %v503 = vld [vmem:[%s1 + $0x454] sm:$0xf]
  %v504 = vld [vmem:[%s1 + $0x458] sm:$0xf]
  %v505 = vld [vmem:[%s1 + $0x45c] sm:$0xf]
  %v506 = vld [vmem:[%s1 + $0x460] sm:$0xf]
  %v507 = vld [vmem:[%s1 + $0x464] sm:$0xf]
  %v508 = vld [vmem:[%s1 + $0x468] sm:$0xf]
  %v509 = vld [vmem:[%s1 + $0x46c] sm:$0xf]
  %v510 = vld [vmem:[%s1 + $0x470] sm:$0xf]
  %v511 = vld [vmem:[%s1 + $0x474] sm:$0xf]
  %v512 = vld [vmem:[%s1 + $0x478] sm:$0xf]
  %v513 = vld [vmem:[%s1 + $0x47c] sm:$0xf]
  %v514 = vld [vmem:[%s1 + $0x480] sm:$0xf]
  %v515 = vld [vmem:[%s1 + $0x484] sm:$0xf]
  %v516 = vld [vmem:[%s1 + $0x488] sm:$0xf]
  %v517 = vld [vmem:[%s1 + $0x48c] sm:$0xf]
  %v518 = vld [vmem:[%s1 + $0x490] sm:$0xf]
  %v519 = vld [vmem:[%s1 + $0x494] sm:$0xf]
  %v520 = vld [vmem:[%s1 + $0x498] sm:$0xf]
  %v521 = vld [vmem:[%s1 + $0x49c] sm:$0xf]
  %v522 = vld [vmem:[%s1 + $0x4a0] sm:$0xf]
  %v523 = vld [vmem:[%s1 + $0x4a4] sm:$0xf]
  %v524 = vld [vmem:[%s1 + $0x4a8] sm:$0xf]
  %v525 = vld [vmem:[%s1 + $0x4ac] sm:$0xf]
  %v526 = vld [vmem:[%s1 + $0x4b0] sm:$0xf]
  %v527 = vld [vmem:[%s1 + $0x4b4] sm:$0xf]
  %v528 = vld [vmem:[%s1 + $0x4b8] sm:$0xf]
  %v529 = vld [vmem:[%s1 + $0x4bc] sm:$0xf]
  %v530 = vld [vmem:[%s1 + $0x4c0] sm:$0xf]
  %v531 = vld [vmem:[%s1 + $0x4c4] sm:$0xf]
  %v532 = vld [vmem:[%s1 + $0x4c8] sm:$0xf]
  %v533 = vld [vmem:[%s1 + $0x4cc] sm:$0xf]
  %v534 = vld [vmem:[%s1 + $0x4d0] sm:$0xf]
  %v535 = vld [vmem:[%s1 + $0x4d4] sm:$0xf]
  %v536 = vld [vmem:[%s1 + $0x4d8] sm:$0xf]
  %v537 = vld [vmem:[%s1 + $0x4dc] sm:$0xf]
  %v538 = vld [vmem:[%s1 + $0x4e0] sm:$0xf]
  %v539 = vld [vmem:[%s1 + $0x4e4] sm:$0xf]
  %v540 = vld [vmem:[%s1 + $0x4e8] sm:$0xf]
  %v541 = vld [vmem:[%s1 + $0x4ec] sm:$0xf]
  %v542 = vld [vmem:[%s1 + $0x4f0] sm:$0xf]
  %v543 = vld [vmem:[%s1 + $0x4f4] sm:$0xf]
  %v544 = vld [vmem:[%s1 + $0x4f8] sm:$0xf]
  %v545 = vld [vmem:[%s1 + $0x4fc] sm:$0xf]
  %v546 = vld [vmem:[%s1 + $0x500] sm:$0xf]
  %v547 = vld [vmem:[%s1 + $0x504] sm:$0xf]
  %v548 = vld [vmem:[%s1 + $0x508] sm:$0xf]
  %v549 = vld [vmem:[%s1 + $0x50c] sm:$0xf]
  %v550 = vld [vmem:[%s1 + $0x510] sm:$0xf]
  %v551 = vld [vmem:[%s1 + $0x514] sm:$0xf]
  %v552 = vld [vmem:[%s1 + $0x518] sm:$0xf]
  %v553 = vld [vmem:[%s1 + $0x51c] sm:$0xf]
  %v554 = vld [vmem:[%s1 + $0x520] sm:$0xf]
  %v555 = vld [vmem:[%s1 + $0x524] sm:$0xf]
  %v556 = vld [vmem:[%s1 + $0x528] sm:$0xf]
  %v557 = vld [vmem:[%s1 + $0x52c] sm:$0xf]
  %v558 = vld [vmem:[%s1 + $0x530] sm:$0xf]
  %v559 = vld [vmem:[%s1 + $0x534] sm:$0xf]
  %v560 = vld [vmem:[%s1 + $0x538] sm:$0xf]
  %v561 = vld [vmem:[%s1 + $0x53c] sm:$0xf]
  %v562 = vld [vmem:[%s1 + $0x540] sm:$0xf]
  %v563 = vld [vmem:[%s1 + $0x544] sm:$0xf]
  %v564 = vld [vmem:[%s1 + $0x548] sm:$0xf]
  %v565 = vld [vmem:[%s1 + $0x54c] sm:$0xf]
  %v566 = vld [vmem:[%s1 + $0x550] sm:$0xf]
  %v567 = vld [vmem:[%s1 + $0x554] sm:$0xf]
  %v568 = vld [vmem:[%s1 + $0x558] sm:$0xf]
  %v569 = vld [vmem:[%s1 + $0x55c] sm:$0xf]
  %v570 = vld [vmem:[%s1 + $0x560] sm:$0xf]
  %v571 = vld [vmem:[%s1 + $0x564] sm:$0xf]
  %v572 = vld [vmem:[%s1 + $0x568] sm:$0xf]
  %v573 = vld [vmem:[%s1 + $0x56c] sm:$0xf]
  %v574 = vld [vmem:[%s1 + $0x570] sm:$0xf]
  %v575 = vld [vmem:[%s1 + $0x574] sm:$0xf]
  %v576 = vld [vmem:[%s1 + $0x578] sm:$0xf]
  %v577 = vld [vmem:[%s1 + $0x57c] sm:$0xf]
  %v578 = vld [vmem:[%s1 + $0x580] sm:$0xf]
  %v579 = vld [vmem:[%s1 + $0x584] sm:$0xf]
  %v580 = vld [vmem:[%s1 + $0x588] sm:$0xf]
  %v581 = vld [vmem:[%s1 + $0x58c] sm:$0xf]
  %v582 = vld [vmem:[%s1 + $0x590] sm:$0xf]
  %v583 = vld [vmem:[%s1 + $0x594] sm:$0xf]
  %v584 = vld [vmem:[%s1 + $0x598] sm:$0xf]
  %v585 = vld [vmem:[%s1 + $0x59c] sm:$0xf]
  %v586 = vld [vmem:[%s1 + $0x5a0] sm:$0xf]
  %v587 = vld [vmem:[%s1 + $0x5a4] sm:$0xf]
  %v588 = vld [vmem:[%s1 + $0x5a8] sm:$0xf]
  %v589 = vld [vmem:[%s1 + $0x5ac] sm:$0xf]
  %v590 = vld [vmem:[%s1 + $0x5b0] sm:$0xf]
  %v591 = vld [vmem:[%s1 + $0x5b4] sm:$0xf]
  %v592 = vld [vmem:[%s1 + $0x5b8] sm:$0xf]
  %v593 = vld [vmem:[%s1 + $0x5bc] sm:$0xf]
  %v594 = vld [vmem:[%s1 + $0x5c0] sm:$0xf]
  %v595 = vld [vmem:[%s1 + $0x5c4] sm:$0xf]
  %v596 = vld [vmem:[%s1 + $0x5c8] sm:$0xf]
  %v597 = vld [vmem:[%s1 + $0x5cc] sm:$0xf]
  %v598 = vld [vmem:[%s1 + $0x5d0] sm:$0xf]
  %v599 = vld [vmem:[%s1 + $0x5d4] sm:$0xf]
  %v600 = vld [vmem:[%s1 + $0x5d8] sm:$0xf]
  %v601 = vld [vmem:[%s1 + $0x5dc] sm:$0xf]
  %v602 = vld [vmem:[%s1 + $0x5e0] sm:$0xf]
  %v603 = vld [vmem:[%s1 + $0x5e4] sm:$0xf]
  %v604 = vld [vmem:[%s1 + $0x5e8] sm:$0xf]
  %v605 = vld [vmem:[%s1 + $0x5ec] sm:$0xf]
  %v606 = vld [vmem:[%s1 + $0x5f0] sm:$0xf]
  %v607 = vld [vmem:[%s1 + $0x5f4] sm:$0xf]
  %v608 = vld [vmem:[%s1 + $0x5f8] sm:$0xf]
  %v609 = vld [vmem:[%s1 + $0x5fc] sm:$0xf]
  %v610 = vld [vmem:[%s1 + $0x600] sm:$0xf]
  %v611 = vld [vmem:[%s1 + $0x604] sm:$0xf]
  %v612 = vld [vmem:[%s1 + $0x608] sm:$0xf]
  %v613 = vld [vmem:[%s1 + $0x60c] sm:$0xf]
  %v614 = vld [vmem:[%s1 + $0x610] sm:$0xf]
  %v615 = vld [vmem:[%s1 + $0x614] sm:$0xf]
  %v616 = vld [vmem:[%s1 + $0x618] sm:$0xf]
  %v617 = vld [vmem:[%s1 + $0x61c] sm:$0xf]
  %v618 = vld [vmem:[%s1 + $0x620] sm:$0xf]
  %v619 = vld [vmem:[%s1 + $0x624] sm:$0xf]
  %v620 = vld [vmem:[%s1 + $0x628] sm:$0xf]
  %v621 = vld [vmem:[%s1 + $0x62c] sm:$0xf]
  %v622 = vld [vmem:[%s1 + $0x630] sm:$0xf]
  %v623 = vld [vmem:[%s1 + $0x634] sm:$0xf]
  %v624 = vld [vmem:[%s1 + $0x638] sm:$0xf]
  %v625 = vld [vmem:[%s1 + $0x63c] sm:$0xf]
  %v834 = vunpack.c.l.b16 %v18
  %v835 = vunpack.c.h.b16 %v18
  %v836 = vunpack.c.l.b16 %v19
  %v837 = vunpack.c.h.b16 %v19
  %v838 = vunpack.c.l.b16 %v20
  %v839 = vunpack.c.h.b16 %v20
  %v840 = vunpack.c.l.b16 %v21
  %v841 = vunpack.c.h.b16 %v21
  %v842 = vunpack.c.l.b16 %v22
  %v843 = vunpack.c.h.b16 %v22
  %v844 = vunpack.c.l.b16 %v23
  %v845 = vunpack.c.h.b16 %v23
  %v846 = vunpack.c.l.b16 %v24
  %v847 = vunpack.c.h.b16 %v24
  %v848 = vunpack.c.l.b16 %v25
  %v849 = vunpack.c.h.b16 %v25
  %v850 = vunpack.c.l.b16 %v26
  %v851 = vunpack.c.h.b16 %v26
  %v852 = vunpack.c.l.b16 %v27
  %v853 = vunpack.c.h.b16 %v27
  %v854 = vunpack.c.l.b16 %v28
  %v855 = vunpack.c.h.b16 %v28
  %v856 = vunpack.c.l.b16 %v29
  %v857 = vunpack.c.h.b16 %v29
  %v858 = vunpack.c.l.b16 %v30
  %v859 = vunpack.c.l.b16 %v31
  %v860 = vunpack.c.h.b16 %v31
  %v861 = vunpack.c.l.b16 %v32
  %v862 = vunpack.c.h.b16 %v32
  %v863 = vunpack.c.l.b16 %v33
  %v864 = vunpack.c.h.b16 %v33
  %v865 = vunpack.c.l.b16 %v34
  %v866 = vunpack.c.h.b16 %v34
  %v867 = vunpack.c.l.b16 %v35
  %v868 = vunpack.c.h.b16 %v35
  %v869 = vunpack.c.l.b16 %v36
  %v870 = vunpack.c.h.b16 %v36
  %v871 = vunpack.c.l.b16 %v37
  %v872 = vunpack.c.h.b16 %v37
  %v873 = vunpack.c.l.b16 %v38
  %v874 = vunpack.c.h.b16 %v38
  %v875 = vunpack.c.l.b16 %v39
  %v876 = vunpack.c.h.b16 %v39
  %v877 = vunpack.c.l.b16 %v40
  %v878 = vunpack.c.h.b16 %v40
  %v879 = vunpack.c.l.b16 %v41
  %v880 = vunpack.c.h.b16 %v41
  %v881 = vunpack.c.l.b16 %v42
  %v882 = vunpack.c.h.b16 %v42
  %v883 = vunpack.c.l.b16 %v43
  %v884 = vunpack.c.l.b16 %v44
  %v885 = vunpack.c.h.b16 %v44
  %v886 = vunpack.c.l.b16 %v45
  %v887 = vunpack.c.h.b16 %v45
  %v888 = vunpack.c.l.b16 %v46
  %v889 = vunpack.c.h.b16 %v46
  %v890 = vunpack.c.l.b16 %v47
  %v891 = vunpack.c.h.b16 %v47
  %v892 = vunpack.c.l.b16 %v48
  %v893 = vunpack.c.h.b16 %v48
  %v894 = vunpack.c.l.b16 %v49
  %v895 = vunpack.c.h.b16 %v49
  %v896 = vunpack.c.l.b16 %v50
  %v897 = vunpack.c.h.b16 %v50
  %v898 = vunpack.c.l.b16 %v51
  %v899 = vunpack.c.h.b16 %v51
  %v900 = vunpack.c.l.b16 %v52
  %v901 = vunpack.c.h.b16 %v52
  %v902 = vunpack.c.l.b16 %v53
  %v903 = vunpack.c.h.b16 %v53
  %v904 = vunpack.c.l.b16 %v54
  %v905 = vunpack.c.h.b16 %v54
  %v906 = vunpack.c.l.b16 %v55
  %v907 = vunpack.c.h.b16 %v55
  %v908 = vunpack.c.l.b16 %v56
  %v909 = vunpack.c.l.b16 %v57
  %v910 = vunpack.c.h.b16 %v57
  %v911 = vunpack.c.l.b16 %v58
  %v912 = vunpack.c.h.b16 %v58
  %v913 = vunpack.c.l.b16 %v59
  %v914 = vunpack.c.h.b16 %v59
  %v915 = vunpack.c.l.b16 %v60
  %v916 = vunpack.c.h.b16 %v60
  %v917 = vunpack.c.l.b16 %v61
  %v918 = vunpack.c.h.b16 %v61
  %v919 = vunpack.c.l.b16 %v62
  %v920 = vunpack.c.h.b16 %v62
  %v921 = vunpack.c.l.b16 %v63
  %v922 = vunpack.c.h.b16 %v63
  %v923 = vunpack.c.l.b16 %v64
  %v924 = vunpack.c.h.b16 %v64
  %v925 = vunpack.c.l.b16 %v65
  %v926 = vunpack.c.h.b16 %v65
  %v927 = vunpack.c.l.b16 %v66
  %v928 = vunpack.c.h.b16 %v66
  %v929 = vunpack.c.l.b16 %v67
  %v930 = vunpack.c.h.b16 %v67
  %v931 = vunpack.c.l.b16 %v68
  %v932 = vunpack.c.h.b16 %v68
  %v933 = vunpack.c.l.b16 %v69
  %v934 = vunpack.c.l.b16 %v70
  %v935 = vunpack.c.h.b16 %v70
  %v936 = vunpack.c.l.b16 %v71
  %v937 = vunpack.c.h.b16 %v71
  %v938 = vunpack.c.l.b16 %v72
  %v939 = vunpack.c.h.b16 %v72
  %v940 = vunpack.c.l.b16 %v73
  %v941 = vunpack.c.h.b16 %v73
  %v942 = vunpack.c.l.b16 %v74
  %v943 = vunpack.c.h.b16 %v74
  %v944 = vunpack.c.l.b16 %v75
  %v945 = vunpack.c.h.b16 %v75
  %v946 = vunpack.c.l.b16 %v76
  %v947 = vunpack.c.h.b16 %v76
  %v948 = vunpack.c.l.b16 %v77
  %v949 = vunpack.c.h.b16 %v77
  %v950 = vunpack.c.l.b16 %v78
  %v951 = vunpack.c.h.b16 %v78
  %v952 = vunpack.c.l.b16 %v79
  %v953 = vunpack.c.h.b16 %v79
  %v954 = vunpack.c.l.b16 %v80
  %v955 = vunpack.c.h.b16 %v80
  %v956 = vunpack.c.l.b16 %v81
  %v957 = vunpack.c.h.b16 %v81
  %v958 = vunpack.c.l.b16 %v82
  %v959 = vunpack.c.l.b16 %v83
  %v960 = vunpack.c.h.b16 %v83
  %v961 = vunpack.c.l.b16 %v84
  %v962 = vunpack.c.h.b16 %v84
  %v963 = vunpack.c.l.b16 %v85
  %v964 = vunpack.c.h.b16 %v85
  %v965 = vunpack.c.l.b16 %v86
  %v966 = vunpack.c.h.b16 %v86
  %v967 = vunpack.c.l.b16 %v87
  %v968 = vunpack.c.h.b16 %v87
  %v969 = vunpack.c.l.b16 %v88
  %v970 = vunpack.c.h.b16 %v88
  %v971 = vunpack.c.l.b16 %v89
  %v972 = vunpack.c.h.b16 %v89
  %v973 = vunpack.c.l.b16 %v90
  %v974 = vunpack.c.h.b16 %v90
  %v975 = vunpack.c.l.b16 %v91
  %v976 = vunpack.c.h.b16 %v91
  %v977 = vunpack.c.l.b16 %v92
  %v978 = vunpack.c.h.b16 %v92
  %v979 = vunpack.c.l.b16 %v93
  %v980 = vunpack.c.h.b16 %v93
  %v981 = vunpack.c.l.b16 %v94
  %v982 = vunpack.c.h.b16 %v94
  %v983 = vunpack.c.l.b16 %v95
  %v984 = vunpack.c.l.b16 %v96
  %v985 = vunpack.c.h.b16 %v96
  %v986 = vunpack.c.l.b16 %v97
  %v987 = vunpack.c.h.b16 %v97
  %v988 = vunpack.c.l.b16 %v98
  %v989 = vunpack.c.h.b16 %v98
  %v990 = vunpack.c.l.b16 %v99
  %v991 = vunpack.c.h.b16 %v99
  %v992 = vunpack.c.l.b16 %v100
  %v993 = vunpack.c.h.b16 %v100
  %v994 = vunpack.c.l.b16 %v101
  %v995 = vunpack.c.h.b16 %v101
  %v996 = vunpack.c.l.b16 %v102
  %v997 = vunpack.c.h.b16 %v102
  %v998 = vunpack.c.l.b16 %v103
  %v999 = vunpack.c.h.b16 %v103
  %v1000 = vunpack.c.l.b16 %v104
  %v1001 = vunpack.c.h.b16 %v104
  %v1002 = vunpack.c.l.b16 %v105
  %v1003 = vunpack.c.h.b16 %v105
  %v1004 = vunpack.c.l.b16 %v106
  %v1005 = vunpack.c.h.b16 %v106
  %v1006 = vunpack.c.l.b16 %v107
  %v1007 = vunpack.c.h.b16 %v107
  %v1008 = vunpack.c.l.b16 %v108
  %v1009 = vunpack.c.l.b16 %v109
  %v1010 = vunpack.c.h.b16 %v109
  %v1011 = vunpack.c.l.b16 %v110
  %v1012 = vunpack.c.h.b16 %v110
  %v1013 = vunpack.c.l.b16 %v111
  %v1014 = vunpack.c.h.b16 %v111
  %v1015 = vunpack.c.l.b16 %v112
  %v1016 = vunpack.c.h.b16 %v112
  %v1017 = vunpack.c.l.b16 %v113
  %v1018 = vunpack.c.h.b16 %v113
  %v1019 = vunpack.c.l.b16 %v114
  %v1020 = vunpack.c.h.b16 %v114
  %v1021 = vunpack.c.l.b16 %v115
  %v1022 = vunpack.c.h.b16 %v115
  %v1023 = vunpack.c.l.b16 %v116
  %v1024 = vunpack.c.h.b16 %v116
  %v1025 = vunpack.c.l.b16 %v117
  %v1026 = vunpack.c.h.b16 %v117
  %v1027 = vunpack.c.l.b16 %v118
  %v1028 = vunpack.c.h.b16 %v118
  %v1029 = vunpack.c.l.b16 %v119
  %v1030 = vunpack.c.h.b16 %v119
  %v1031 = vunpack.c.l.b16 %v120
  %v1032 = vunpack.c.h.b16 %v120
  %v1033 = vunpack.c.l.b16 %v121
  %v1034 = vunpack.c.l.b16 %v122
  %v1035 = vunpack.c.h.b16 %v122
  %v1036 = vunpack.c.l.b16 %v123
  %v1037 = vunpack.c.h.b16 %v123
  %v1038 = vunpack.c.l.b16 %v124
  %v1039 = vunpack.c.h.b16 %v124
  %v1040 = vunpack.c.l.b16 %v125
  %v1041 = vunpack.c.h.b16 %v125
  %v1042 = vunpack.c.l.b16 %v126
  %v1043 = vunpack.c.h.b16 %v126
  %v1044 = vunpack.c.l.b16 %v127
  %v1045 = vunpack.c.h.b16 %v127
  %v1046 = vunpack.c.l.b16 %v128
  %v1047 = vunpack.c.h.b16 %v128
  %v1048 = vunpack.c.l.b16 %v129
  %v1049 = vunpack.c.h.b16 %v129
  %v1050 = vunpack.c.l.b16 %v130
  %v1051 = vunpack.c.h.b16 %v130
  %v1052 = vunpack.c.l.b16 %v131
  %v1053 = vunpack.c.h.b16 %v131
  %v1054 = vunpack.c.l.b16 %v132
  %v1055 = vunpack.c.h.b16 %v132
  %v1056 = vunpack.c.l.b16 %v133
  %v1057 = vunpack.c.h.b16 %v133
  %v1058 = vunpack.c.l.b16 %v134
  %v1059 = vunpack.c.l.b16 %v135
  %v1060 = vunpack.c.h.b16 %v135
  %v1061 = vunpack.c.l.b16 %v136
  %v1062 = vunpack.c.h.b16 %v136
  %v1063 = vunpack.c.l.b16 %v137
  %v1064 = vunpack.c.h.b16 %v137
  %v1065 = vunpack.c.l.b16 %v138
  %v1066 = vunpack.c.h.b16 %v138
  %v1067 = vunpack.c.l.b16 %v139
  %v1068 = vunpack.c.h.b16 %v139
  %v1069 = vunpack.c.l.b16 %v140
  %v1070 = vunpack.c.h.b16 %v140
  %v1071 = vunpack.c.l.b16 %v141
  %v1072 = vunpack.c.h.b16 %v141
  %v1073 = vunpack.c.l.b16 %v142
  %v1074 = vunpack.c.h.b16 %v142
  %v1075 = vunpack.c.l.b16 %v143
  %v1076 = vunpack.c.h.b16 %v143
  %v1077 = vunpack.c.l.b16 %v144
  %v1078 = vunpack.c.h.b16 %v144
  %v1079 = vunpack.c.l.b16 %v145
  %v1080 = vunpack.c.h.b16 %v145
  %v1081 = vunpack.c.l.b16 %v146
  %v1082 = vunpack.c.h.b16 %v146
  %v1083 = vunpack.c.l.b16 %v147
  %v1084 = vunpack.c.l.b16 %v148
  %v1085 = vunpack.c.h.b16 %v148
  %v1086 = vunpack.c.l.b16 %v149
  %v1087 = vunpack.c.h.b16 %v149
  %v1088 = vunpack.c.l.b16 %v150
  %v1089 = vunpack.c.h.b16 %v150
  %v1090 = vunpack.c.l.b16 %v151
  %v1091 = vunpack.c.h.b16 %v151
  %v1092 = vunpack.c.l.b16 %v152
  %v1093 = vunpack.c.h.b16 %v152
  %v1094 = vunpack.c.l.b16 %v153
  %v1095 = vunpack.c.h.b16 %v153
  %v1096 = vunpack.c.l.b16 %v154
  %v1097 = vunpack.c.h.b16 %v154
  %v1098 = vunpack.c.l.b16 %v155
  %v1099 = vunpack.c.h.b16 %v155
  %v1100 = vunpack.c.l.b16 %v156
  %v1101 = vunpack.c.h.b16 %v156
  %v1102 = vunpack.c.l.b16 %v157
  %v1103 = vunpack.c.h.b16 %v157
  %v1104 = vunpack.c.l.b16 %v158
  %v1105 = vunpack.c.h.b16 %v158
  %v1106 = vunpack.c.l.b16 %v159
  %v1107 = vunpack.c.h.b16 %v159
  %v1108 = vunpack.c.l.b16 %v160
  %v1109 = vunpack.c.l.b16 %v161
  %v1110 = vunpack.c.h.b16 %v161
  %v1111 = vunpack.c.l.b16 %v162
  %v1112 = vunpack.c.h.b16 %v162
  %v1113 = vunpack.c.l.b16 %v163
  %v1114 = vunpack.c.h.b16 %v163
  %v1115 = vunpack.c.l.b16 %v164
  %v1116 = vunpack.c.h.b16 %v164
  %v1117 = vunpack.c.l.b16 %v165
  %v1118 = vunpack.c.h.b16 %v165
  %v1119 = vunpack.c.l.b16 %v166
  %v1120 = vunpack.c.h.b16 %v166
  %v1121 = vunpack.c.l.b16 %v167
  %v1122 = vunpack.c.h.b16 %v167
  %v1123 = vunpack.c.l.b16 %v168
  %v1124 = vunpack.c.h.b16 %v168
  %v1125 = vunpack.c.l.b16 %v169
  %v1126 = vunpack.c.h.b16 %v169
  %v1127 = vunpack.c.l.b16 %v170
  %v1128 = vunpack.c.h.b16 %v170
  %v1129 = vunpack.c.l.b16 %v171
  %v1130 = vunpack.c.h.b16 %v171
  %v1131 = vunpack.c.l.b16 %v172
  %v1132 = vunpack.c.h.b16 %v172
  %v1133 = vunpack.c.l.b16 %v173
  %v1134 = vunpack.c.l.b16 %v174
  %v1135 = vunpack.c.h.b16 %v174
  %v1136 = vunpack.c.l.b16 %v175
  %v1137 = vunpack.c.h.b16 %v175
  %v1138 = vunpack.c.l.b16 %v176
  %v1139 = vunpack.c.h.b16 %v176
  %v1140 = vunpack.c.l.b16 %v177
  %v1141 = vunpack.c.h.b16 %v177
  %v1142 = vunpack.c.l.b16 %v178
  %v1143 = vunpack.c.h.b16 %v178
  %v1144 = vunpack.c.l.b16 %v179
  %v1145 = vunpack.c.h.b16 %v179
  %v1146 = vunpack.c.l.b16 %v180
  %v1147 = vunpack.c.h.b16 %v180
  %v1148 = vunpack.c.l.b16 %v181
  %v1149 = vunpack.c.h.b16 %v181
  %v1150 = vunpack.c.l.b16 %v182
  %v1151 = vunpack.c.h.b16 %v182
  %v1152 = vunpack.c.l.b16 %v183
  %v1153 = vunpack.c.h.b16 %v183
  %v1154 = vunpack.c.l.b16 %v184
  %v1155 = vunpack.c.h.b16 %v184
  %v1156 = vunpack.c.l.b16 %v185
  %v1157 = vunpack.c.h.b16 %v185
  %v1158 = vunpack.c.l.b16 %v186
  %v1159 = vunpack.c.l.b16 %v187
  %v1160 = vunpack.c.h.b16 %v187
  %v1161 = vunpack.c.l.b16 %v188
  %v1162 = vunpack.c.h.b16 %v188
  %v1163 = vunpack.c.l.b16 %v189
  %v1164 = vunpack.c.h.b16 %v189
  %v1165 = vunpack.c.l.b16 %v190
  %v1166 = vunpack.c.h.b16 %v190
  %v1167 = vunpack.c.l.b16 %v191
  %v1168 = vunpack.c.h.b16 %v191
  %v1169 = vunpack.c.l.b16 %v192
  %v1170 = vunpack.c.h.b16 %v192
  %v1171 = vunpack.c.l.b16 %v193
  %v1172 = vunpack.c.h.b16 %v193
  %v1173 = vunpack.c.l.b16 %v194
  %v1174 = vunpack.c.h.b16 %v194
  %v1175 = vunpack.c.l.b16 %v195
  %v1176 = vunpack.c.h.b16 %v195
  %v1177 = vunpack.c.l.b16 %v196
  %v1178 = vunpack.c.h.b16 %v196
  %v1179 = vunpack.c.l.b16 %v197
  %v1180 = vunpack.c.h.b16 %v197
  %v1181 = vunpack.c.l.b16 %v198
  %v1182 = vunpack.c.h.b16 %v198
  %v1183 = vunpack.c.l.b16 %v199
  %v1184 = vunpack.c.l.b16 %v200
  %v1185 = vunpack.c.h.b16 %v200
  %v1186 = vunpack.c.l.b16 %v201
  %v1187 = vunpack.c.h.b16 %v201
  %v1188 = vunpack.c.l.b16 %v202
  %v1189 = vunpack.c.h.b16 %v202
  %v1190 = vunpack.c.l.b16 %v203
  %v1191 = vunpack.c.h.b16 %v203
  %v1192 = vunpack.c.l.b16 %v204
  %v1193 = vunpack.c.h.b16 %v204
  %v1194 = vunpack.c.l.b16 %v205
  %v1195 = vunpack.c.h.b16 %v205
  %v1196 = vunpack.c.l.b16 %v206
  %v1197 = vunpack.c.h.b16 %v206
  %v1198 = vunpack.c.l.b16 %v207
  %v1199 = vunpack.c.h.b16 %v207
  %v1200 = vunpack.c.l.b16 %v208
  %v1201 = vunpack.c.h.b16 %v208
  %v1202 = vunpack.c.l.b16 %v209
  %v1203 = vunpack.c.h.b16 %v209
  %v1204 = vunpack.c.l.b16 %v210
  %v1205 = vunpack.c.h.b16 %v210
  %v1206 = vunpack.c.l.b16 %v211
  %v1207 = vunpack.c.h.b16 %v211
  %v1208 = vunpack.c.l.b16 %v212
  %v1209 = vunpack.c.l.b16 %v213
  %v1210 = vunpack.c.h.b16 %v213
  %v1211 = vunpack.c.l.b16 %v214
  %v1212 = vunpack.c.h.b16 %v214
  %v1213 = vunpack.c.l.b16 %v215
  %v1214 = vunpack.c.h.b16 %v215
  %v1215 = vunpack.c.l.b16 %v216
  %v1216 = vunpack.c.h.b16 %v216
  %v1217 = vunpack.c.l.b16 %v217
  %v1218 = vunpack.c.h.b16 %v217
  %v1219 = vunpack.c.l.b16 %v218
  %v1220 = vunpack.c.h.b16 %v218
  %v1221 = vunpack.c.l.b16 %v219
  %v1222 = vunpack.c.h.b16 %v219
  %v1223 = vunpack.c.l.b16 %v220
  %v1224 = vunpack.c.h.b16 %v220
  %v1225 = vunpack.c.l.b16 %v221
  %v1226 = vunpack.c.h.b16 %v221
  %v1227 = vunpack.c.l.b16 %v222
  %v1228 = vunpack.c.h.b16 %v222
  %v1229 = vunpack.c.l.b16 %v223
  %v1230 = vunpack.c.h.b16 %v223
  %v1231 = vunpack.c.l.b16 %v224
  %v1232 = vunpack.c.h.b16 %v224
  %v1233 = vunpack.c.l.b16 %v225
  %v1234 = vpack.c.b16 %v859, %v834
  %v1235 = vpack.c.b16 %v860, %v835
  %v1236 = vpack.c.b16 %v861, %v836
  %v1237 = vpack.c.b16 %v862, %v837
  %v1238 = vpack.c.b16 %v863, %v838
  %v1239 = vpack.c.b16 %v864, %v839
  %v1240 = vpack.c.b16 %v865, %v840
  %v1241 = vpack.c.b16 %v866, %v841
  %v1242 = vpack.c.b16 %v867, %v842
  %v1243 = vpack.c.b16 %v868, %v843
  %v1244 = vpack.c.b16 %v869, %v844
  %v1245 = vpack.c.b16 %v870, %v845
  %v1246 = vpack.c.b16 %v871, %v846
  %v1247 = vpack.c.b16 %v872, %v847
  %v1248 = vpack.c.b16 %v873, %v848
  %v1249 = vpack.c.b16 %v874, %v849
  %v1250 = vpack.c.b16 %v875, %v850
  %v1251 = vpack.c.b16 %v876, %v851
  %v1252 = vpack.c.b16 %v877, %v852
  %v1253 = vpack.c.b16 %v878, %v853
  %v1254 = vpack.c.b16 %v879, %v854
  %v1255 = vpack.c.b16 %v880, %v855
  %v1256 = vpack.c.b16 %v881, %v856
  %v1257 = vpack.c.b16 %v882, %v857
  %v1258 = vpack.c.b16 %v883, %v858
  %v1259 = vpack.c.b16 %v909, %v884
  %v1260 = vpack.c.b16 %v910, %v885
  %v1261 = vpack.c.b16 %v911, %v886
  %v1262 = vpack.c.b16 %v912, %v887
  %v1263 = vpack.c.b16 %v913, %v888
  %v1264 = vpack.c.b16 %v914, %v889
  %v1265 = vpack.c.b16 %v915, %v890
  %v1266 = vpack.c.b16 %v916, %v891
  %v1267 = vpack.c.b16 %v917, %v892
  %v1268 = vpack.c.b16 %v918, %v893
  %v1269 = vpack.c.b16 %v919, %v894
  %v1270 = vpack.c.b16 %v920, %v895
  %v1271 = vpack.c.b16 %v921, %v896
  %v1272 = vpack.c.b16 %v922, %v897
  %v1273 = vpack.c.b16 %v923, %v898
  %v1274 = vpack.c.b16 %v924, %v899
  %v1275 = vpack.c.b16 %v925, %v900
  %v1276 = vpack.c.b16 %v926, %v901
  %v1277 = vpack.c.b16 %v927, %v902
  %v1278 = vpack.c.b16 %v928, %v903
  %v1279 = vpack.c.b16 %v929, %v904
  %v1280 = vpack.c.b16 %v930, %v905
  %v1281 = vpack.c.b16 %v931, %v906
  %v1282 = vpack.c.b16 %v932, %v907
  %v1283 = vpack.c.b16 %v933, %v908
  %v1284 = vpack.c.b16 %v959, %v934
  %v1285 = vpack.c.b16 %v960, %v935
  %v1286 = vpack.c.b16 %v961, %v936
  %v1287 = vpack.c.b16 %v962, %v937
  %v1288 = vpack.c.b16 %v963, %v938
  %v1289 = vpack.c.b16 %v964, %v939
  %v1290 = vpack.c.b16 %v965, %v940
  %v1291 = vpack.c.b16 %v966, %v941
  %v1292 = vpack.c.b16 %v967, %v942
  %v1293 = vpack.c.b16 %v968, %v943
  %v1294 = vpack.c.b16 %v969, %v944
  %v1295 = vpack.c.b16 %v970, %v945
  %v1296 = vpack.c.b16 %v971, %v946
  %v1297 = vpack.c.b16 %v972, %v947
  %v1298 = vpack.c.b16 %v973, %v948
  %v1299 = vpack.c.b16 %v974, %v949
  %v1300 = vpack.c.b16 %v975, %v950
  %v1301 = vpack.c.b16 %v976, %v951
  %v1302 = vpack.c.b16 %v977, %v952
  %v1303 = vpack.c.b16 %v978, %v953
  %v1304 = vpack.c.b16 %v979, %v954
  %v1305 = vpack.c.b16 %v980, %v955
  %v1306 = vpack.c.b16 %v981, %v956
  %v1307 = vpack.c.b16 %v982, %v957
  %v1308 = vpack.c.b16 %v983, %v958
  %v1309 = vpack.c.b16 %v1009, %v984
  %v1310 = vpack.c.b16 %v1010, %v985
  %v1311 = vpack.c.b16 %v1011, %v986
  %v1312 = vpack.c.b16 %v1012, %v987
  %v1313 = vpack.c.b16 %v1013, %v988
  %v1314 = vpack.c.b16 %v1014, %v989
  %v1315 = vpack.c.b16 %v1015, %v990
  %v1316 = vpack.c.b16 %v1016, %v991
  %v1317 = vpack.c.b16 %v1017, %v992
  %v1318 = vpack.c.b16 %v1018, %v993
  %v1319 = vpack.c.b16 %v1019, %v994
  %v1320 = vpack.c.b16 %v1020, %v995
  %v1321 = vpack.c.b16 %v1021, %v996
  %v1322 = vpack.c.b16 %v1022, %v997
  %v1323 = vpack.c.b16 %v1023, %v998
  %v1324 = vpack.c.b16 %v1024, %v999
  %v1325 = vpack.c.b16 %v1025, %v1000
  %v1326 = vpack.c.b16 %v1026, %v1001
  %v1327 = vpack.c.b16 %v1027, %v1002
  %v1328 = vpack.c.b16 %v1028, %v1003
  %v1329 = vpack.c.b16 %v1029, %v1004
  %v1330 = vpack.c.b16 %v1030, %v1005
  %v1331 = vpack.c.b16 %v1031, %v1006
  %v1332 = vpack.c.b16 %v1032, %v1007
  %v1333 = vpack.c.b16 %v1033, %v1008
  %v1334 = vpack.c.b16 %v1059, %v1034
  %v1335 = vpack.c.b16 %v1060, %v1035
  %v1336 = vpack.c.b16 %v1061, %v1036
  %v1337 = vpack.c.b16 %v1062, %v1037
  %v1338 = vpack.c.b16 %v1063, %v1038
  %v1339 = vpack.c.b16 %v1064, %v1039
  %v1340 = vpack.c.b16 %v1065, %v1040
  %v1341 = vpack.c.b16 %v1066, %v1041
  %v1342 = vpack.c.b16 %v1067, %v1042
  %v1343 = vpack.c.b16 %v1068, %v1043
  %v1344 = vpack.c.b16 %v1069, %v1044
  %v1345 = vpack.c.b16 %v1070, %v1045
  %v1346 = vpack.c.b16 %v1071, %v1046
  %v1347 = vpack.c.b16 %v1072, %v1047
  %v1348 = vpack.c.b16 %v1073, %v1048
  %v1349 = vpack.c.b16 %v1074, %v1049
  %v1350 = vpack.c.b16 %v1075, %v1050
  %v1351 = vpack.c.b16 %v1076, %v1051
  %v1352 = vpack.c.b16 %v1077, %v1052
  %v1353 = vpack.c.b16 %v1078, %v1053
  %v1354 = vpack.c.b16 %v1079, %v1054
  %v1355 = vpack.c.b16 %v1080, %v1055
  %v1356 = vpack.c.b16 %v1081, %v1056
  %v1357 = vpack.c.b16 %v1082, %v1057
  %v1358 = vpack.c.b16 %v1083, %v1058
  %v1359 = vpack.c.b16 %v1109, %v1084
  %v1360 = vpack.c.b16 %v1110, %v1085
  %v1361 = vpack.c.b16 %v1111, %v1086
  %v1362 = vpack.c.b16 %v1112, %v1087
  %v1363 = vpack.c.b16 %v1113, %v1088
  %v1364 = vpack.c.b16 %v1114, %v1089
  %v1365 = vpack.c.b16 %v1115, %v1090
  %v1366 = vpack.c.b16 %v1116, %v1091
  %v1367 = vpack.c.b16 %v1117, %v1092
  %v1368 = vpack.c.b16 %v1118, %v1093
  %v1369 = vpack.c.b16 %v1119, %v1094
  %v1370 = vpack.c.b16 %v1120, %v1095
  %v1371 = vpack.c.b16 %v1121, %v1096
  %v1372 = vpack.c.b16 %v1122, %v1097
  %v1373 = vpack.c.b16 %v1123, %v1098
  %v1374 = vpack.c.b16 %v1124, %v1099
  %v1375 = vpack.c.b16 %v1125, %v1100
  %v1376 = vpack.c.b16 %v1126, %v1101
  %v1377 = vpack.c.b16 %v1127, %v1102
  %v1378 = vpack.c.b16 %v1128, %v1103
  %v1379 = vpack.c.b16 %v1129, %v1104
  %v1380 = vpack.c.b16 %v1130, %v1105
  %v1381 = vpack.c.b16 %v1131, %v1106
  %v1382 = vpack.c.b16 %v1132, %v1107
  %v1383 = vpack.c.b16 %v1133, %v1108
  %v1384 = vpack.c.b16 %v1159, %v1134
  %v1385 = vpack.c.b16 %v1160, %v1135
  %v1386 = vpack.c.b16 %v1161, %v1136
  %v1387 = vpack.c.b16 %v1162, %v1137
  %v1388 = vpack.c.b16 %v1163, %v1138
  %v1389 = vpack.c.b16 %v1164, %v1139
  %v1390 = vpack.c.b16 %v1165, %v1140
  %v1391 = vpack.c.b16 %v1166, %v1141
  %v1392 = vpack.c.b16 %v1167, %v1142
  %v1393 = vpack.c.b16 %v1168, %v1143
  %v1394 = vpack.c.b16 %v1169, %v1144
  %v1395 = vpack.c.b16 %v1170, %v1145
  %v1396 = vpack.c.b16 %v1171, %v1146
  %v1397 = vpack.c.b16 %v1172, %v1147
  %v1398 = vpack.c.b16 %v1173, %v1148
  %v1399 = vpack.c.b16 %v1174, %v1149
  %v1400 = vpack.c.b16 %v1175, %v1150
  %v1401 = vpack.c.b16 %v1176, %v1151
  %v1402 = vpack.c.b16 %v1177, %v1152
  %v1403 = vpack.c.b16 %v1178, %v1153
  %v1404 = vpack.c.b16 %v1179, %v1154
  %v1405 = vpack.c.b16 %v1180, %v1155
  %v1406 = vpack.c.b16 %v1181, %v1156
  %v1407 = vpack.c.b16 %v1182, %v1157
  %v1408 = vpack.c.b16 %v1183, %v1158
  %v1409 = vpack.c.b16 %v1209, %v1184
  %v1410 = vpack.c.b16 %v1210, %v1185
  %v1411 = vpack.c.b16 %v1211, %v1186
  %v1412 = vpack.c.b16 %v1212, %v1187
  %v1413 = vpack.c.b16 %v1213, %v1188
  %v1414 = vpack.c.b16 %v1214, %v1189
  %v1415 = vpack.c.b16 %v1215, %v1190
  %v1416 = vpack.c.b16 %v1216, %v1191
  %v1417 = vpack.c.b16 %v1217, %v1192
  %v1418 = vpack.c.b16 %v1218, %v1193
  %v1419 = vpack.c.b16 %v1219, %v1194
  %v1420 = vpack.c.b16 %v1220, %v1195
  %v1421 = vpack.c.b16 %v1221, %v1196
  %v1422 = vpack.c.b16 %v1222, %v1197
  %v1423 = vpack.c.b16 %v1223, %v1198
  %v1424 = vpack.c.b16 %v1224, %v1199
  %v1425 = vpack.c.b16 %v1225, %v1200
  %v1426 = vpack.c.b16 %v1226, %v1201
  %v1427 = vpack.c.b16 %v1227, %v1202
  %v1428 = vpack.c.b16 %v1228, %v1203
  %v1429 = vpack.c.b16 %v1229, %v1204
  %v1430 = vpack.c.b16 %v1230, %v1205
  %v1431 = vpack.c.b16 %v1231, %v1206
  %v1432 = vpack.c.b16 %v1232, %v1207
  %v1433 = vpack.c.b16 %v1233, %v1208
  %v2034 = vunpack.c.l.b16 %v226
  %v2035 = vunpack.c.l.b16 %v227
  %v2036 = vunpack.c.l.b16 %v228
  %v2037 = vunpack.c.l.b16 %v229
  %v2038 = vunpack.c.l.b16 %v230
  %v2039 = vunpack.c.l.b16 %v231
  %v2040 = vunpack.c.l.b16 %v232
  %v2041 = vunpack.c.l.b16 %v233
  %v2042 = vunpack.c.l.b16 %v234
  %v2043 = vunpack.c.l.b16 %v235
  %v2044 = vunpack.c.l.b16 %v236
  %v2045 = vunpack.c.l.b16 %v237
  %v2046 = vunpack.c.l.b16 %v238
  %v2047 = vunpack.c.l.b16 %v239
  %v2048 = vunpack.c.l.b16 %v240
  %v2049 = vunpack.c.l.b16 %v241
  %v2050 = vunpack.c.l.b16 %v242
  %v2051 = vunpack.c.l.b16 %v243
  %v2052 = vunpack.c.l.b16 %v244
  %v2053 = vunpack.c.l.b16 %v245
  %v2054 = vunpack.c.l.b16 %v246
  %v2055 = vunpack.c.l.b16 %v247
  %v2056 = vunpack.c.l.b16 %v248
  %v2057 = vunpack.c.l.b16 %v249
  %v2058 = vunpack.c.l.b16 %v250
  %v2059 = vunpack.c.l.b16 %v251
  %v2060 = vunpack.c.l.b16 %v252
  %v2061 = vunpack.c.l.b16 %v253
  %v2062 = vunpack.c.l.b16 %v254
  %v2063 = vunpack.c.l.b16 %v255
  %v2064 = vunpack.c.l.b16 %v256
  %v2065 = vunpack.c.l.b16 %v257
  %v2066 = vunpack.c.l.b16 %v258
  %v2067 = vunpack.c.l.b16 %v259
  %v2068 = vunpack.c.l.b16 %v260
  %v2069 = vunpack.c.l.b16 %v261
  %v2070 = vunpack.c.l.b16 %v262
  %v2071 = vunpack.c.l.b16 %v263
  %v2072 = vunpack.c.l.b16 %v264
  %v2073 = vunpack.c.l.b16 %v265
  %v2074 = vunpack.c.l.b16 %v266
  %v2075 = vunpack.c.l.b16 %v267
  %v2076 = vunpack.c.l.b16 %v268
  %v2077 = vunpack.c.l.b16 %v269
  %v2078 = vunpack.c.l.b16 %v270
  %v2079 = vunpack.c.l.b16 %v271
  %v2080 = vunpack.c.l.b16 %v272
  %v2081 = vunpack.c.l.b16 %v273
  %v2082 = vunpack.c.l.b16 %v274
  %v2083 = vunpack.c.l.b16 %v275
  %v2084 = vunpack.c.l.b16 %v276
  %v2085 = vunpack.c.l.b16 %v277
  %v2086 = vunpack.c.l.b16 %v278
  %v2087 = vunpack.c.l.b16 %v279
  %v2088 = vunpack.c.l.b16 %v280
  %v2089 = vunpack.c.l.b16 %v281
  %v2090 = vunpack.c.l.b16 %v282
  %v2091 = vunpack.c.l.b16 %v283
  %v2092 = vunpack.c.l.b16 %v284
  %v2093 = vunpack.c.l.b16 %v285
  %v2094 = vunpack.c.l.b16 %v286
  %v2095 = vunpack.c.l.b16 %v287
  %v2096 = vunpack.c.l.b16 %v288
  %v2097 = vunpack.c.l.b16 %v289
  %v2098 = vunpack.c.l.b16 %v290
  %v2099 = vunpack.c.l.b16 %v291
  %v2100 = vunpack.c.l.b16 %v292
  %v2101 = vunpack.c.l.b16 %v293
  %v2102 = vunpack.c.l.b16 %v294
  %v2103 = vunpack.c.l.b16 %v295
  %v2104 = vunpack.c.l.b16 %v296
  %v2105 = vunpack.c.l.b16 %v297
  %v2106 = vunpack.c.l.b16 %v298
  %v2107 = vunpack.c.l.b16 %v299
  %v2108 = vunpack.c.l.b16 %v300
  %v2109 = vunpack.c.l.b16 %v301
  %v2110 = vunpack.c.l.b16 %v302
  %v2111 = vunpack.c.l.b16 %v303
  %v2112 = vunpack.c.l.b16 %v304
  %v2113 = vunpack.c.l.b16 %v305
  %v2114 = vunpack.c.l.b16 %v306
  %v2115 = vunpack.c.l.b16 %v307
  %v2116 = vunpack.c.l.b16 %v308
  %v2117 = vunpack.c.l.b16 %v309
  %v2118 = vunpack.c.l.b16 %v310
  %v2119 = vunpack.c.l.b16 %v311
  %v2120 = vunpack.c.l.b16 %v312
  %v2121 = vunpack.c.l.b16 %v313
  %v2122 = vunpack.c.l.b16 %v314
  %v2123 = vunpack.c.l.b16 %v315
  %v2124 = vunpack.c.l.b16 %v316
  %v2125 = vunpack.c.l.b16 %v317
  %v2126 = vunpack.c.l.b16 %v318
  %v2127 = vunpack.c.l.b16 %v319
  %v2128 = vunpack.c.l.b16 %v320
  %v2129 = vunpack.c.l.b16 %v321
  %v2130 = vunpack.c.l.b16 %v322
  %v2131 = vunpack.c.l.b16 %v323
  %v2132 = vunpack.c.l.b16 %v324
  %v2133 = vunpack.c.l.b16 %v325
  %v2134 = vunpack.c.l.b16 %v326
  %v2135 = vunpack.c.l.b16 %v327
  %v2136 = vunpack.c.l.b16 %v328
  %v2137 = vunpack.c.l.b16 %v329
  %v2138 = vunpack.c.l.b16 %v330
  %v2139 = vunpack.c.l.b16 %v331
  %v2140 = vunpack.c.l.b16 %v332
  %v2141 = vunpack.c.l.b16 %v333
  %v2142 = vunpack.c.l.b16 %v334
  %v2143 = vunpack.c.l.b16 %v335
  %v2144 = vunpack.c.l.b16 %v336
  %v2145 = vunpack.c.l.b16 %v337
  %v2146 = vunpack.c.l.b16 %v338
  %v2147 = vunpack.c.l.b16 %v339
  %v2148 = vunpack.c.l.b16 %v340
  %v2149 = vunpack.c.l.b16 %v341
  %v2150 = vunpack.c.l.b16 %v342
  %v2151 = vunpack.c.l.b16 %v343
  %v2152 = vunpack.c.l.b16 %v344
  %v2153 = vunpack.c.l.b16 %v345
  %v2154 = vunpack.c.l.b16 %v346
  %v2155 = vunpack.c.l.b16 %v347
  %v2156 = vunpack.c.l.b16 %v348
  %v2157 = vunpack.c.l.b16 %v349
  %v2158 = vunpack.c.l.b16 %v350
  %v2159 = vunpack.c.l.b16 %v351
  %v2160 = vunpack.c.l.b16 %v352
  %v2161 = vunpack.c.l.b16 %v353
  %v2162 = vunpack.c.l.b16 %v354
  %v2163 = vunpack.c.l.b16 %v355
  %v2164 = vunpack.c.l.b16 %v356
  %v2165 = vunpack.c.l.b16 %v357
  %v2166 = vunpack.c.l.b16 %v358
  %v2167 = vunpack.c.l.b16 %v359
  %v2168 = vunpack.c.l.b16 %v360
  %v2169 = vunpack.c.l.b16 %v361
  %v2170 = vunpack.c.l.b16 %v362
  %v2171 = vunpack.c.l.b16 %v363
  %v2172 = vunpack.c.l.b16 %v364
  %v2173 = vunpack.c.l.b16 %v365
  %v2174 = vunpack.c.l.b16 %v366
  %v2175 = vunpack.c.l.b16 %v367
  %v2176 = vunpack.c.l.b16 %v368
  %v2177 = vunpack.c.l.b16 %v369
  %v2178 = vunpack.c.l.b16 %v370
  %v2179 = vunpack.c.l.b16 %v371
  %v2180 = vunpack.c.l.b16 %v372
  %v2181 = vunpack.c.l.b16 %v373
  %v2182 = vunpack.c.l.b16 %v374
  %v2183 = vunpack.c.l.b16 %v375
  %v2184 = vunpack.c.l.b16 %v376
  %v2185 = vunpack.c.l.b16 %v377
  %v2186 = vunpack.c.l.b16 %v378
  %v2187 = vunpack.c.l.b16 %v379
  %v2188 = vunpack.c.l.b16 %v380
  %v2189 = vunpack.c.l.b16 %v381
  %v2190 = vunpack.c.l.b16 %v382
  %v2191 = vunpack.c.l.b16 %v383
  %v2192 = vunpack.c.l.b16 %v384
  %v2193 = vunpack.c.l.b16 %v385
  %v2194 = vunpack.c.l.b16 %v386
  %v2195 = vunpack.c.l.b16 %v387
  %v2196 = vunpack.c.l.b16 %v388
  %v2197 = vunpack.c.l.b16 %v389
  %v2198 = vunpack.c.l.b16 %v390
  %v2199 = vunpack.c.l.b16 %v391
  %v2200 = vunpack.c.l.b16 %v392
  %v2201 = vunpack.c.l.b16 %v393
  %v2202 = vunpack.c.l.b16 %v394
  %v2203 = vunpack.c.l.b16 %v395
  %v2204 = vunpack.c.l.b16 %v396
  %v2205 = vunpack.c.l.b16 %v397
  %v2206 = vunpack.c.l.b16 %v398
  %v2207 = vunpack.c.l.b16 %v399
  %v2208 = vunpack.c.l.b16 %v400
  %v2209 = vunpack.c.l.b16 %v401
  %v2210 = vunpack.c.l.b16 %v402
  %v2211 = vunpack.c.l.b16 %v403
  %v2212 = vunpack.c.l.b16 %v404
  %v2213 = vunpack.c.l.b16 %v405
  %v2214 = vunpack.c.l.b16 %v406
  %v2215 = vunpack.c.l.b16 %v407
  %v2216 = vunpack.c.l.b16 %v408
  %v2217 = vunpack.c.l.b16 %v409
  %v2218 = vunpack.c.l.b16 %v410
  %v2219 = vunpack.c.l.b16 %v411
  %v2220 = vunpack.c.l.b16 %v412
  %v2221 = vunpack.c.l.b16 %v413
  %v2222 = vunpack.c.l.b16 %v414
  %v2223 = vunpack.c.l.b16 %v415
  %v2224 = vunpack.c.l.b16 %v416
  %v2225 = vunpack.c.l.b16 %v417
  %v2226 = vunpack.c.l.b16 %v418
  %v2227 = vunpack.c.l.b16 %v419
  %v2228 = vunpack.c.l.b16 %v420
  %v2229 = vunpack.c.l.b16 %v421
  %v2230 = vunpack.c.l.b16 %v422
  %v2231 = vunpack.c.l.b16 %v423
  %v2232 = vunpack.c.l.b16 %v424
  %v2233 = vunpack.c.l.b16 %v425
  %v2234 = vunpack.c.l.b16 %v426
  %v2235 = vunpack.c.l.b16 %v427
  %v2236 = vunpack.c.l.b16 %v428
  %v2237 = vunpack.c.l.b16 %v429
  %v2238 = vunpack.c.l.b16 %v430
  %v2239 = vunpack.c.l.b16 %v431
  %v2240 = vunpack.c.l.b16 %v432
  %v2241 = vunpack.c.l.b16 %v433
  %v2242 = vunpack.c.l.b16 %v434
  %v2243 = vunpack.c.l.b16 %v435
  %v2244 = vunpack.c.l.b16 %v436
  %v2245 = vunpack.c.l.b16 %v437
  %v2246 = vunpack.c.l.b16 %v438
  %v2247 = vunpack.c.l.b16 %v439
  %v2248 = vunpack.c.l.b16 %v440
  %v2249 = vunpack.c.l.b16 %v441
  %v2250 = vunpack.c.l.b16 %v442
  %v2251 = vunpack.c.l.b16 %v443
  %v2252 = vunpack.c.l.b16 %v444
  %v2253 = vunpack.c.l.b16 %v445
  %v2254 = vunpack.c.l.b16 %v446
  %v2255 = vunpack.c.l.b16 %v447
  %v2256 = vunpack.c.l.b16 %v448
  %v2257 = vunpack.c.l.b16 %v449
  %v2258 = vunpack.c.l.b16 %v450
  %v2259 = vunpack.c.l.b16 %v451
  %v2260 = vunpack.c.l.b16 %v452
  %v2261 = vunpack.c.l.b16 %v453
  %v2262 = vunpack.c.l.b16 %v454
  %v2263 = vunpack.c.l.b16 %v455
  %v2264 = vunpack.c.l.b16 %v456
  %v2265 = vunpack.c.l.b16 %v457
  %v2266 = vunpack.c.l.b16 %v458
  %v2267 = vunpack.c.l.b16 %v459
  %v2268 = vunpack.c.l.b16 %v460
  %v2269 = vunpack.c.l.b16 %v461
  %v2270 = vunpack.c.l.b16 %v462
  %v2271 = vunpack.c.l.b16 %v463
  %v2272 = vunpack.c.l.b16 %v464
  %v2273 = vunpack.c.l.b16 %v465
  %v2274 = vunpack.c.l.b16 %v466
  %v2275 = vunpack.c.l.b16 %v467
  %v2276 = vunpack.c.l.b16 %v468
  %v2277 = vunpack.c.l.b16 %v469
  %v2278 = vunpack.c.l.b16 %v470
  %v2279 = vunpack.c.l.b16 %v471
  %v2280 = vunpack.c.l.b16 %v472
  %v2281 = vunpack.c.l.b16 %v473
  %v2282 = vunpack.c.l.b16 %v474
  %v2283 = vunpack.c.l.b16 %v475
  %v2284 = vunpack.c.l.b16 %v476
  %v2285 = vunpack.c.l.b16 %v477
  %v2286 = vunpack.c.l.b16 %v478
  %v2287 = vunpack.c.l.b16 %v479
  %v2288 = vunpack.c.l.b16 %v480
  %v2289 = vunpack.c.l.b16 %v481
  %v2290 = vunpack.c.l.b16 %v482
  %v2291 = vunpack.c.l.b16 %v483
  %v2292 = vunpack.c.l.b16 %v484
  %v2293 = vunpack.c.l.b16 %v485
  %v2294 = vunpack.c.l.b16 %v486
  %v2295 = vunpack.c.l.b16 %v487
  %v2296 = vunpack.c.l.b16 %v488
  %v2297 = vunpack.c.l.b16 %v489
  %v2298 = vunpack.c.l.b16 %v490
  %v2299 = vunpack.c.l.b16 %v491
  %v2300 = vunpack.c.l.b16 %v492
  %v2301 = vunpack.c.l.b16 %v493
  %v2302 = vunpack.c.l.b16 %v494
  %v2303 = vunpack.c.l.b16 %v495
  %v2304 = vunpack.c.l.b16 %v496
  %v2305 = vunpack.c.l.b16 %v497
  %v2306 = vunpack.c.l.b16 %v498
  %v2307 = vunpack.c.l.b16 %v499
  %v2308 = vunpack.c.l.b16 %v500
  %v2309 = vunpack.c.l.b16 %v501
  %v2310 = vunpack.c.l.b16 %v502
  %v2311 = vunpack.c.l.b16 %v503
  %v2312 = vunpack.c.l.b16 %v504
  %v2313 = vunpack.c.l.b16 %v505
  %v2314 = vunpack.c.l.b16 %v506
  %v2315 = vunpack.c.l.b16 %v507
  %v2316 = vunpack.c.l.b16 %v508
  %v2317 = vunpack.c.l.b16 %v509
  %v2318 = vunpack.c.l.b16 %v510
  %v2319 = vunpack.c.l.b16 %v511
  %v2320 = vunpack.c.l.b16 %v512
  %v2321 = vunpack.c.l.b16 %v513
  %v2322 = vunpack.c.l.b16 %v514
  %v2323 = vunpack.c.l.b16 %v515
  %v2324 = vunpack.c.l.b16 %v516
  %v2325 = vunpack.c.l.b16 %v517
  %v2326 = vunpack.c.l.b16 %v518
  %v2327 = vunpack.c.l.b16 %v519
  %v2328 = vunpack.c.l.b16 %v520
  %v2329 = vunpack.c.l.b16 %v521
  %v2330 = vunpack.c.l.b16 %v522
  %v2331 = vunpack.c.l.b16 %v523
  %v2332 = vunpack.c.l.b16 %v524
  %v2333 = vunpack.c.l.b16 %v525
  %v2334 = vunpack.c.l.b16 %v526
  %v2335 = vunpack.c.l.b16 %v527
  %v2336 = vunpack.c.l.b16 %v528
  %v2337 = vunpack.c.l.b16 %v529
  %v2338 = vunpack.c.l.b16 %v530
  %v2339 = vunpack.c.l.b16 %v531
  %v2340 = vunpack.c.l.b16 %v532
  %v2341 = vunpack.c.l.b16 %v533
  %v2342 = vunpack.c.l.b16 %v534
  %v2343 = vunpack.c.l.b16 %v535
  %v2344 = vunpack.c.l.b16 %v536
  %v2345 = vunpack.c.l.b16 %v537
  %v2346 = vunpack.c.l.b16 %v538
  %v2347 = vunpack.c.l.b16 %v539
  %v2348 = vunpack.c.l.b16 %v540
  %v2349 = vunpack.c.l.b16 %v541
  %v2350 = vunpack.c.l.b16 %v542
  %v2351 = vunpack.c.l.b16 %v543
  %v2352 = vunpack.c.l.b16 %v544
  %v2353 = vunpack.c.l.b16 %v545
  %v2354 = vunpack.c.l.b16 %v546
  %v2355 = vunpack.c.l.b16 %v547
  %v2356 = vunpack.c.l.b16 %v548
  %v2357 = vunpack.c.l.b16 %v549
  %v2358 = vunpack.c.l.b16 %v550
  %v2359 = vunpack.c.l.b16 %v551
  %v2360 = vunpack.c.l.b16 %v552
  %v2361 = vunpack.c.l.b16 %v553
  %v2362 = vunpack.c.l.b16 %v554
  %v2363 = vunpack.c.l.b16 %v555
  %v2364 = vunpack.c.l.b16 %v556
  %v2365 = vunpack.c.l.b16 %v557
  %v2366 = vunpack.c.l.b16 %v558
  %v2367 = vunpack.c.l.b16 %v559
  %v2368 = vunpack.c.l.b16 %v560
  %v2369 = vunpack.c.l.b16 %v561
  %v2370 = vunpack.c.l.b16 %v562
  %v2371 = vunpack.c.l.b16 %v563
  %v2372 = vunpack.c.l.b16 %v564
  %v2373 = vunpack.c.l.b16 %v565
  %v2374 = vunpack.c.l.b16 %v566
  %v2375 = vunpack.c.l.b16 %v567
  %v2376 = vunpack.c.l.b16 %v568
  %v2377 = vunpack.c.l.b16 %v569
  %v2378 = vunpack.c.l.b16 %v570
  %v2379 = vunpack.c.l.b16 %v571
  %v2380 = vunpack.c.l.b16 %v572
  %v2381 = vunpack.c.l.b16 %v573
  %v2382 = vunpack.c.l.b16 %v574
  %v2383 = vunpack.c.l.b16 %v575
  %v2384 = vunpack.c.l.b16 %v576
  %v2385 = vunpack.c.l.b16 %v577
  %v2386 = vunpack.c.l.b16 %v578
  %v2387 = vunpack.c.l.b16 %v579
  %v2388 = vunpack.c.l.b16 %v580
  %v2389 = vunpack.c.l.b16 %v581
  %v2390 = vunpack.c.l.b16 %v582
  %v2391 = vunpack.c.l.b16 %v583
  %v2392 = vunpack.c.l.b16 %v584
  %v2393 = vunpack.c.l.b16 %v585
  %v2394 = vunpack.c.l.b16 %v586
  %v2395 = vunpack.c.l.b16 %v587
  %v2396 = vunpack.c.l.b16 %v588
  %v2397 = vunpack.c.l.b16 %v589
  %v2398 = vunpack.c.l.b16 %v590
  %v2399 = vunpack.c.l.b16 %v591
  %v2400 = vunpack.c.l.b16 %v592
  %v2401 = vunpack.c.l.b16 %v593
  %v2402 = vunpack.c.l.b16 %v594
  %v2403 = vunpack.c.l.b16 %v595
  %v2404 = vunpack.c.l.b16 %v596
  %v2405 = vunpack.c.l.b16 %v597
  %v2406 = vunpack.c.l.b16 %v598
  %v2407 = vunpack.c.l.b16 %v599
  %v2408 = vunpack.c.l.b16 %v600
  %v2409 = vunpack.c.l.b16 %v601
  %v2410 = vunpack.c.l.b16 %v602
  %v2411 = vunpack.c.l.b16 %v603
  %v2412 = vunpack.c.l.b16 %v604
  %v2413 = vunpack.c.l.b16 %v605
  %v2414 = vunpack.c.l.b16 %v606
  %v2415 = vunpack.c.l.b16 %v607
  %v2416 = vunpack.c.l.b16 %v608
  %v2417 = vunpack.c.l.b16 %v609
  %v2418 = vunpack.c.l.b16 %v610
  %v2419 = vunpack.c.l.b16 %v611
  %v2420 = vunpack.c.l.b16 %v612
  %v2421 = vunpack.c.l.b16 %v613
  %v2422 = vunpack.c.l.b16 %v614
  %v2423 = vunpack.c.l.b16 %v615
  %v2424 = vunpack.c.l.b16 %v616
  %v2425 = vunpack.c.l.b16 %v617
  %v2426 = vunpack.c.l.b16 %v618
  %v2427 = vunpack.c.l.b16 %v619
  %v2428 = vunpack.c.l.b16 %v620
  %v2429 = vunpack.c.l.b16 %v621
  %v2430 = vunpack.c.l.b16 %v622
  %v2431 = vunpack.c.l.b16 %v623
  %v2432 = vunpack.c.l.b16 %v624
  %v2433 = vunpack.c.l.b16 %v625
  %v2434 = vpack.c.b16 %v2035, %v2034
  %v2435 = vpack.c.b16 %v2037, %v2036
  %v2436 = vpack.c.b16 %v2039, %v2038
  %v2437 = vpack.c.b16 %v2041, %v2040
  %v2438 = vpack.c.b16 %v2043, %v2042
  %v2439 = vpack.c.b16 %v2045, %v2044
  %v2440 = vpack.c.b16 %v2047, %v2046
  %v2441 = vpack.c.b16 %v2049, %v2048
  %v2442 = vpack.c.b16 %v2051, %v2050
  %v2443 = vpack.c.b16 %v2053, %v2052
  %v2444 = vpack.c.b16 %v2055, %v2054
  %v2445 = vpack.c.b16 %v2057, %v2056
  %v2446 = vpack.c.b16 %v2059, %v2058
  %v2447 = vpack.c.b16 %v2061, %v2060
  %v2448 = vpack.c.b16 %v2063, %v2062
  %v2449 = vpack.c.b16 %v2065, %v2064
  %v2450 = vpack.c.b16 %v2067, %v2066
  %v2451 = vpack.c.b16 %v2069, %v2068
  %v2452 = vpack.c.b16 %v2071, %v2070
  %v2453 = vpack.c.b16 %v2073, %v2072
  %v2454 = vpack.c.b16 %v2075, %v2074
  %v2455 = vpack.c.b16 %v2077, %v2076
  %v2456 = vpack.c.b16 %v2079, %v2078
  %v2457 = vpack.c.b16 %v2081, %v2080
  %v2458 = vpack.c.b16 %v2083, %v2082
  %v2459 = vpack.c.b16 %v2085, %v2084
  %v2460 = vpack.c.b16 %v2087, %v2086
  %v2461 = vpack.c.b16 %v2089, %v2088
  %v2462 = vpack.c.b16 %v2091, %v2090
  %v2463 = vpack.c.b16 %v2093, %v2092
  %v2464 = vpack.c.b16 %v2095, %v2094
  %v2465 = vpack.c.b16 %v2097, %v2096
  %v2466 = vpack.c.b16 %v2099, %v2098
  %v2467 = vpack.c.b16 %v2101, %v2100
  %v2468 = vpack.c.b16 %v2103, %v2102
  %v2469 = vpack.c.b16 %v2105, %v2104
  %v2470 = vpack.c.b16 %v2107, %v2106
  %v2471 = vpack.c.b16 %v2109, %v2108
  %v2472 = vpack.c.b16 %v2111, %v2110
  %v2473 = vpack.c.b16 %v2113, %v2112
  %v2474 = vpack.c.b16 %v2115, %v2114
  %v2475 = vpack.c.b16 %v2117, %v2116
  %v2476 = vpack.c.b16 %v2119, %v2118
  %v2477 = vpack.c.b16 %v2121, %v2120
  %v2478 = vpack.c.b16 %v2123, %v2122
  %v2479 = vpack.c.b16 %v2125, %v2124
  %v2480 = vpack.c.b16 %v2127, %v2126
  %v2481 = vpack.c.b16 %v2129, %v2128
  %v2482 = vpack.c.b16 %v2131, %v2130
  %v2483 = vpack.c.b16 %v2133, %v2132
  %v2484 = vpack.c.b16 %v2135, %v2134
  %v2485 = vpack.c.b16 %v2137, %v2136
  %v2486 = vpack.c.b16 %v2139, %v2138
  %v2487 = vpack.c.b16 %v2141, %v2140
  %v2488 = vpack.c.b16 %v2143, %v2142
  %v2489 = vpack.c.b16 %v2145, %v2144
  %v2490 = vpack.c.b16 %v2147, %v2146
  %v2491 = vpack.c.b16 %v2149, %v2148
  %v2492 = vpack.c.b16 %v2151, %v2150
  %v2493 = vpack.c.b16 %v2153, %v2152
  %v2494 = vpack.c.b16 %v2155, %v2154
  %v2495 = vpack.c.b16 %v2157, %v2156
  %v2496 = vpack.c.b16 %v2159, %v2158
  %v2497 = vpack.c.b16 %v2161, %v2160
  %v2498 = vpack.c.b16 %v2163, %v2162
  %v2499 = vpack.c.b16 %v2165, %v2164
  %v2500 = vpack.c.b16 %v2167, %v2166
  %v2501 = vpack.c.b16 %v2169, %v2168
  %v2502 = vpack.c.b16 %v2171, %v2170
  %v2503 = vpack.c.b16 %v2173, %v2172
  %v2504 = vpack.c.b16 %v2175, %v2174
  %v2505 = vpack.c.b16 %v2177, %v2176
  %v2506 = vpack.c.b16 %v2179, %v2178
  %v2507 = vpack.c.b16 %v2181, %v2180
  %v2508 = vpack.c.b16 %v2183, %v2182
  %v2509 = vpack.c.b16 %v2185, %v2184
  %v2510 = vpack.c.b16 %v2187, %v2186
  %v2511 = vpack.c.b16 %v2189, %v2188
  %v2512 = vpack.c.b16 %v2191, %v2190
  %v2513 = vpack.c.b16 %v2193, %v2192
  %v2514 = vpack.c.b16 %v2195, %v2194
  %v2515 = vpack.c.b16 %v2197, %v2196
  %v2516 = vpack.c.b16 %v2199, %v2198
  %v2517 = vpack.c.b16 %v2201, %v2200
  %v2518 = vpack.c.b16 %v2203, %v2202
  %v2519 = vpack.c.b16 %v2205, %v2204
  %v2520 = vpack.c.b16 %v2207, %v2206
  %v2521 = vpack.c.b16 %v2209, %v2208
  %v2522 = vpack.c.b16 %v2211, %v2210
  %v2523 = vpack.c.b16 %v2213, %v2212
  %v2524 = vpack.c.b16 %v2215, %v2214
  %v2525 = vpack.c.b16 %v2217, %v2216
  %v2526 = vpack.c.b16 %v2219, %v2218
  %v2527 = vpack.c.b16 %v2221, %v2220
  %v2528 = vpack.c.b16 %v2223, %v2222
  %v2529 = vpack.c.b16 %v2225, %v2224
  %v2530 = vpack.c.b16 %v2227, %v2226
  %v2531 = vpack.c.b16 %v2229, %v2228
  %v2532 = vpack.c.b16 %v2231, %v2230
  %v2533 = vpack.c.b16 %v2233, %v2232
  %v2534 = vpack.c.b16 %v2235, %v2234
  %v2535 = vpack.c.b16 %v2237, %v2236
  %v2536 = vpack.c.b16 %v2239, %v2238
  %v2537 = vpack.c.b16 %v2241, %v2240
  %v2538 = vpack.c.b16 %v2243, %v2242
  %v2539 = vpack.c.b16 %v2245, %v2244
  %v2540 = vpack.c.b16 %v2247, %v2246
  %v2541 = vpack.c.b16 %v2249, %v2248
  %v2542 = vpack.c.b16 %v2251, %v2250
  %v2543 = vpack.c.b16 %v2253, %v2252
  %v2544 = vpack.c.b16 %v2255, %v2254
  %v2545 = vpack.c.b16 %v2257, %v2256
  %v2546 = vpack.c.b16 %v2259, %v2258
  %v2547 = vpack.c.b16 %v2261, %v2260
  %v2548 = vpack.c.b16 %v2263, %v2262
  %v2549 = vpack.c.b16 %v2265, %v2264
  %v2550 = vpack.c.b16 %v2267, %v2266
  %v2551 = vpack.c.b16 %v2269, %v2268
  %v2552 = vpack.c.b16 %v2271, %v2270
  %v2553 = vpack.c.b16 %v2273, %v2272
  %v2554 = vpack.c.b16 %v2275, %v2274
  %v2555 = vpack.c.b16 %v2277, %v2276
  %v2556 = vpack.c.b16 %v2279, %v2278
  %v2557 = vpack.c.b16 %v2281, %v2280
  %v2558 = vpack.c.b16 %v2283, %v2282
  %v2559 = vpack.c.b16 %v2285, %v2284
  %v2560 = vpack.c.b16 %v2287, %v2286
  %v2561 = vpack.c.b16 %v2289, %v2288
  %v2562 = vpack.c.b16 %v2291, %v2290
  %v2563 = vpack.c.b16 %v2293, %v2292
  %v2564 = vpack.c.b16 %v2295, %v2294
  %v2565 = vpack.c.b16 %v2297, %v2296
  %v2566 = vpack.c.b16 %v2299, %v2298
  %v2567 = vpack.c.b16 %v2301, %v2300
  %v2568 = vpack.c.b16 %v2303, %v2302
  %v2569 = vpack.c.b16 %v2305, %v2304
  %v2570 = vpack.c.b16 %v2307, %v2306
  %v2571 = vpack.c.b16 %v2309, %v2308
  %v2572 = vpack.c.b16 %v2311, %v2310
  %v2573 = vpack.c.b16 %v2313, %v2312
  %v2574 = vpack.c.b16 %v2315, %v2314
  %v2575 = vpack.c.b16 %v2317, %v2316
  %v2576 = vpack.c.b16 %v2319, %v2318
  %v2577 = vpack.c.b16 %v2321, %v2320
  %v2578 = vpack.c.b16 %v2323, %v2322
  %v2579 = vpack.c.b16 %v2325, %v2324
  %v2580 = vpack.c.b16 %v2327, %v2326
  %v2581 = vpack.c.b16 %v2329, %v2328
  %v2582 = vpack.c.b16 %v2331, %v2330
  %v2583 = vpack.c.b16 %v2333, %v2332
  %v2584 = vpack.c.b16 %v2335, %v2334
  %v2585 = vpack.c.b16 %v2337, %v2336
  %v2586 = vpack.c.b16 %v2339, %v2338
  %v2587 = vpack.c.b16 %v2341, %v2340
  %v2588 = vpack.c.b16 %v2343, %v2342
  %v2589 = vpack.c.b16 %v2345, %v2344
  %v2590 = vpack.c.b16 %v2347, %v2346
  %v2591 = vpack.c.b16 %v2349, %v2348
  %v2592 = vpack.c.b16 %v2351, %v2350
  %v2593 = vpack.c.b16 %v2353, %v2352
  %v2594 = vpack.c.b16 %v2355, %v2354
  %v2595 = vpack.c.b16 %v2357, %v2356
  %v2596 = vpack.c.b16 %v2359, %v2358
  %v2597 = vpack.c.b16 %v2361, %v2360
  %v2598 = vpack.c.b16 %v2363, %v2362
  %v2599 = vpack.c.b16 %v2365, %v2364
  %v2600 = vpack.c.b16 %v2367, %v2366
  %v2601 = vpack.c.b16 %v2369, %v2368
  %v2602 = vpack.c.b16 %v2371, %v2370
  %v2603 = vpack.c.b16 %v2373, %v2372
  %v2604 = vpack.c.b16 %v2375, %v2374
  %v2605 = vpack.c.b16 %v2377, %v2376
  %v2606 = vpack.c.b16 %v2379, %v2378
  %v2607 = vpack.c.b16 %v2381, %v2380
  %v2608 = vpack.c.b16 %v2383, %v2382
  %v2609 = vpack.c.b16 %v2385, %v2384
  %v2610 = vpack.c.b16 %v2387, %v2386
  %v2611 = vpack.c.b16 %v2389, %v2388
  %v2612 = vpack.c.b16 %v2391, %v2390
  %v2613 = vpack.c.b16 %v2393, %v2392
  %v2614 = vpack.c.b16 %v2395, %v2394
  %v2615 = vpack.c.b16 %v2397, %v2396
  %v2616 = vpack.c.b16 %v2399, %v2398
  %v2617 = vpack.c.b16 %v2401, %v2400
  %v2618 = vpack.c.b16 %v2403, %v2402
  %v2619 = vpack.c.b16 %v2405, %v2404
  %v2620 = vpack.c.b16 %v2407, %v2406
  %v2621 = vpack.c.b16 %v2409, %v2408
  %v2622 = vpack.c.b16 %v2411, %v2410
  %v2623 = vpack.c.b16 %v2413, %v2412
  %v2624 = vpack.c.b16 %v2415, %v2414
  %v2625 = vpack.c.b16 %v2417, %v2416
  %v2626 = vpack.c.b16 %v2419, %v2418
  %v2627 = vpack.c.b16 %v2421, %v2420
  %v2628 = vpack.c.b16 %v2423, %v2422
  %v2629 = vpack.c.b16 %v2425, %v2424
  %v2630 = vpack.c.b16 %v2427, %v2426
  %v2631 = vpack.c.b16 %v2429, %v2428
  %v2632 = vpack.c.b16 %v2431, %v2430
  %v2633 = vpack.c.b16 %v2433, %v2432
  %2834 = vmatprep.subr.bf16.mxu0 0
  %2835 = vmatpush1.bf16.msra.mxu0 %v2434
  %2836 = vmatprep.subr.bf16.mxu0 0
  %2837 = vmatpush1.bf16.msra.mxu0 %v2435
  %2838 = vmatprep.subr.bf16.mxu0 0
  %2839 = vmatpush1.bf16.msra.mxu0 %v2436
  %2840 = vmatprep.subr.bf16.mxu0 0
  %2841 = vmatpush1.bf16.msra.mxu0 %v2437
  %2842 = vmatprep.subr.bf16.mxu0 0
  %2843 = vmatpush1.bf16.msra.mxu0 %v2438
  %2844 = vmatprep.subr.bf16.mxu0 0
  %2845 = vmatpush1.bf16.msra.mxu0 %v2439
  %2846 = vmatprep.subr.bf16.mxu0 0
  %2847 = vmatpush1.bf16.msra.mxu0 %v2440
  %2848 = vmatprep.subr.bf16.mxu0 0
  %2849 = vmatpush1.bf16.msra.mxu0 %v2441
  %2850 = vmatprep.subr.bf16.mxu0 0
  %2851 = vmatpush1.bf16.msra.mxu0 %v2442
  %2852 = vmatprep.subr.bf16.mxu0 0
  %2853 = vmatpush1.bf16.msra.mxu0 %v2443
  %2854 = vmatprep.subr.bf16.mxu0 0
  %2855 = vmatpush1.bf16.msra.mxu0 %v2444
  %2856 = vmatprep.subr.bf16.mxu0 0
  %2857 = vmatpush1.bf16.msra.mxu0 %v2445
  %2858 = vmatprep.subr.bf16.mxu0 0
  %2859 = vmatpush1.bf16.msra.mxu0 %v2446
  %2860 = vmatprep.subr.bf16.mxu0 0
  %2861 = vmatpush1.bf16.msra.mxu0 %v2447
  %2862 = vmatprep.subr.bf16.mxu0 0
  %2863 = vmatpush1.bf16.msra.mxu0 %v2448
  %2864 = vmatprep.subr.bf16.mxu0 0
  %2865 = vmatpush1.bf16.msra.mxu0 %v2449
  %2866 = vmatprep.mubr.bf16.mxu0 %v1235
  %2867 = vmatmul.mubr.bf16.gmra.mrb[0].mxu0 %v1234
  %v2868 = vpop.f32.mrb[0].mxu0
  %v2869 = vadd.f32 0.0, %v2868
  %v2870 = vpop.f32.mrb[0].mxu0
  %v2871 = vpop.f32.mrb[0].mxu0
  %v2872 = vadd.f32 0.0, %v2871
  %v2873 = vpop.f32.mrb[0].mxu0
  %2874 = vmatprep.mubr.bf16.mxu0 %v1260
  %2875 = vmatmul.mubr.bf16.gmra.mrb[0].mxu0 %v1259
  %v2876 = vpop.f32.mrb[0].mxu0
  %v2877 = vadd.f32 0.0, %v2876
  %v2878 = vpop.f32.mrb[0].mxu0
  %v2879 = vpop.f32.mrb[0].mxu0
  %v2880 = vadd.f32 0.0, %v2879
  %v2881 = vpop.f32.mrb[0].mxu0
  %2882 = vmatprep.mubr.bf16.mxu0 %v1285
  %2883 = vmatmul.mubr.bf16.gmra.mrb[0].mxu0 %v1284
  %v2884 = vpop.f32.mrb[0].mxu0
  %v2885 = vadd.f32 0.0, %v2884
  %v2886 = vpop.f32.mrb[0].mxu0
  %v2887 = vpop.f32.mrb[0].mxu0
  %v2888 = vadd.f32 0.0, %v2887
  %v2889 = vpop.f32.mrb[0].mxu0
  %2890 = vmatprep.mubr.bf16.mxu0 %v1310
  %2891 = vmatmul.mubr.bf16.gmra.mrb[0].mxu0 %v1309
  %v2892 = vpop.f32.mrb[0].mxu0
  %v2893 = vadd.f32 0.0, %v2892
  %v2894 = vpop.f32.mrb[0].mxu0
  %v2895 = vpop.f32.mrb[0].mxu0
  %v2896 = vadd.f32 0.0, %v2895
  %v2897 = vpop.f32.mrb[0].mxu0
  %2898 = vmatprep.mubr.bf16.mxu0 %v1335
  %2899 = vmatmul.mubr.bf16.gmra.mrb[0].mxu0 %v1334
  %v2900 = vpop.f32.mrb[0].mxu0
  %v2901 = vadd.f32 0.0, %v2900
  %v2902 = vpop.f32.mrb[0].mxu0
  %v2903 = vpop.f32.mrb[0].mxu0
  %v2904 = vadd.f32 0.0, %v2903
  %v2905 = vpop.f32.mrb[0].mxu0
  %2906 = vmatprep.mubr.bf16.mxu0 %v1360
  %2907 = vmatmul.mubr.bf16.gmra.mrb[0].mxu0 %v1359
  %v2908 = vpop.f32.mrb[0].mxu0
  %v2909 = vadd.f32 0.0, %v2908
  %v2910 = vpop.f32.mrb[0].mxu0
  %v2911 = vpop.f32.mrb[0].mxu0
  %v2912 = vadd.f32 0.0, %v2911
  %v2913 = vpop.f32.mrb[0].mxu0
  %2914 = vmatprep.mubr.bf16.mxu0 %v1385
  %2915 = vmatmul.mubr.bf16.gmra.mrb[0].mxu0 %v1384
  %v2916 = vpop.f32.mrb[0].mxu0
  %v2917 = vadd.f32 0.0, %v2916
  %v2918 = vpop.f32.mrb[0].mxu0
  %v2919 = vpop.f32.mrb[0].mxu0
  %v2920 = vadd.f32 0.0, %v2919
  %v2921 = vpop.f32.mrb[0].mxu0
  %2922 = vmatprep.mubr.bf16.mxu0 %v1410
  %2923 = vmatmul.mubr.bf16.gmra.mrb[0].mxu0 %v1409
  %v2924 = vpop.f32.mrb[0].mxu0
  %v2925 = vadd.f32 0.0, %v2924
  %v2926 = vpop.f32.mrb[0].mxu0
  %v2927 = vpop.f32.mrb[0].mxu0
  %v2928 = vadd.f32 0.0, %v2927
  %v2929 = vpop.f32.mrb[0].mxu0
  %2930 = vdwg.mxu0
  %2931 = vmatprep.subr.bf16.mxu0 0
  %2932 = vmatpush1.bf16.msra.mxu0 %v2450
  %2933 = vmatprep.subr.bf16.mxu0 0
  %2934 = vmatpush1.bf16.msra.mxu0 %v2451
  %2935 = vmatprep.subr.bf16.mxu0 0
  %2936 = vmatpush1.bf16.msra.mxu0 %v2452
  %2937 = vmatprep.subr.bf16.mxu0 0
  %2938 = vmatpush1.bf16.msra.mxu0 %v2453
  %2939 = vmatprep.subr.bf16.mxu0 0
  %2940 = vmatpush1.bf16.msra.mxu0 %v2454
  %2941 = vmatprep.subr.bf16.mxu0 0
  %2942 = vmatpush1.bf16.msra.mxu0 %v2455
  %2943 = vmatprep.subr.bf16.mxu0 0
  %2944 = vmatpush1.bf16.msra.mxu0 %v2456
  %2945 = vmatprep.subr.bf16.mxu0 0
  %2946 = vmatpush1.bf16.msra.mxu0 %v2457
  %2947 = vmatprep.subr.bf16.mxu0 0
  %2948 = vmatpush1.bf16.msra.mxu0 %v2458
  %2949 = vmatprep.subr.bf16.mxu0 0
  %2950 = vmatpush1.bf16.msra.mxu0 %v2459
  %2951 = vmatprep.subr.bf16.mxu0 0
  %2952 = vmatpush1.bf16.msra.mxu0 %v2460
  %2953 = vmatprep.subr.bf16.mxu0 0
  %2954 = vmatpush1.bf16.msra.mxu0 %v2461
  %2955 = vmatprep.subr.bf16.mxu0 0
  %2956 = vmatpush1.bf16.msra.mxu0 %v2462
  %2957 = vmatprep.subr.bf16.mxu0 0
  %2958 = vmatpush1.bf16.msra.mxu0 %v2463
  %2959 = vmatprep.subr.bf16.mxu0 0
  %2960 = vmatpush1.bf16.msra.mxu0 %v2464
  %2961 = vmatprep.subr.bf16.mxu0 0
  %2962 = vmatpush1.bf16.msra.mxu0 %v2465
  %2963 = vmatprep.mubr.bf16.mxu0 %v1237
  %2964 = vmatmul.mubr.bf16.gmra.mrb[0].mxu0 %v1236
  %v2965 = vpop.f32.mrb[0].mxu0
  %v2966 = vadd.f32 %v2869, %v2965
  %v2967 = vpop.f32.mrb[0].mxu0
  %v2968 = vpop.f32.mrb[0].mxu0
  %v2969 = vadd.f32 %v2872, %v2968
  %v2970 = vpop.f32.mrb[0].mxu0
  %2971 = vmatprep.mubr.bf16.mxu0 %v1262
  %2972 = vmatmul.mubr.bf16.gmra.mrb[0].mxu0 %v1261
  %v2973 = vpop.f32.mrb[0].mxu0
  %v2974 = vadd.f32 %v2877, %v2973
  %v2975 = vpop.f32.mrb[0].mxu0
  %v2976 = vpop.f32.mrb[0].mxu0
  %v2977 = vadd.f32 %v2880, %v2976
  %v2978 = vpop.f32.mrb[0].mxu0
  %2979 = vmatprep.mubr.bf16.mxu0 %v1287
  %2980 = vmatmul.mubr.bf16.gmra.mrb[0].mxu0 %v1286
  %v2981 = vpop.f32.mrb[0].mxu0
  %v2982 = vadd.f32 %v2885, %v2981
  %v2983 = vpop.f32.mrb[0].mxu0
  %v2984 = vpop.f32.mrb[0].mxu0
  %v2985 = vadd.f32 %v2888, %v2984
  %v2986 = vpop.f32.mrb[0].mxu0
  %2987 = vmatprep.mubr.bf16.mxu0 %v1312
  %2988 = vmatmul.mubr.bf16.gmra.mrb[0].mxu0 %v1311
  %v2989 = vpop.f32.mrb[0].mxu0
  %v2990 = vadd.f32 %v2893, %v2989
  %v2991 = vpop.f32.mrb[0].mxu0
  %v2992 = vpop.f32.mrb[0].mxu0
  %v2993 = vadd.f32 %v2896, %v2992
  %v2994 = vpop.f32.mrb[0].mxu0
  %2995 = vmatprep.mubr.bf16.mxu0 %v1337
  %2996 = vmatmul.mubr.bf16.gmra.mrb[0].mxu0 %v1336
  %v2997 = vpop.f32.mrb[0].mxu0
  %v2998 = vadd.f32 %v2901, %v2997
  %v2999 = vpop.f32.mrb[0].mxu0
  %v3000 = vpop.f32.mrb[0].mxu0
  %v3001 = vadd.f32 %v2904, %v3000
  %v3002 = vpop.f32.mrb[0].mxu0
  %3003 = vmatprep.mubr.bf16.mxu0 %v1362
  %3004 = vmatmul.mubr.bf16.gmra.mrb[0].mxu0 %v1361
  %v3005 = vpop.f32.mrb[0].mxu0
  %v3006 = vadd.f32 %v2909, %v3005
  %v3007 = vpop.f32.mrb[0].mxu0
  %v3008 = vpop.f32.mrb[0].mxu0
  %v3009 = vadd.f32 %v2912, %v3008
  %v3010 = vpop.f32.mrb[0].mxu0
  %3011 = vmatprep.mubr.bf16.mxu0 %v1387
  %3012 = vmatmul.mubr.bf16.gmra.mrb[0].mxu0 %v1386
  %v3013 = vpop.f32.mrb[0].mxu0
  %v3014 = vadd.f32 %v2917, %v3013
  %v3015 = vpop.f32.mrb[0].mxu0
  %v3016 = vpop.f32.mrb[0].mxu0
  %v3017 = vadd.f32 %v2920, %v3016
  %v3018 = vpop.f32.mrb[0].mxu0
  %3019 = vmatprep.mubr.bf16.mxu0 %v1412
  %3020 = vmatmul.mubr.bf16.gmra.mrb[0].mxu0 %v1411
  %v3021 = vpop.f32.mrb[0].mxu0
  %v3022 = vadd.f32 %v2925, %v3021
  %v3023 = vpop.f32.mrb[0].mxu0
  %v3024 = vpop.f32.mrb[0].mxu0
  %v3025 = vadd.f32 %v2928, %v3024
  %v3026 = vpop.f32.mrb[0].mxu0
  %3027 = vdwg.mxu0
  %3028 = vmatprep.subr.bf16.mxu0 0
  %3029 = vmatpush1.bf16.msra.mxu0 %v2466
  %3030 = vmatprep.subr.bf16.mxu0 0
  %3031 = vmatpush1.bf16.msra.mxu0 %v2467
  %3032 = vmatprep.subr.bf16.mxu0 0
  %3033 = vmatpush1.bf16.msra.mxu0 %v2468
  %3034 = vmatprep.subr.bf16.mxu0 0
  %3035 = vmatpush1.bf16.msra.mxu0 %v2469
  %3036 = vmatprep.subr.bf16.mxu0 0
  %3037 = vmatpush1.bf16.msra.mxu0 %v2470
  %3038 = vmatprep.subr.bf16.mxu0 0
  %3039 = vmatpush1.bf16.msra.mxu0 %v2471
  %3040 = vmatprep.subr.bf16.mxu0 0
  %3041 = vmatpush1.bf16.msra.mxu0 %v2472
  %3042 = vmatprep.subr.bf16.mxu0 0
  %3043 = vmatpush1.bf16.msra.mxu0 %v2473
  %3044 = vmatprep.subr.bf16.mxu0 0
  %3045 = vmatpush1.bf16.msra.mxu0 %v2474
  %3046 = vmatprep.subr.bf16.mxu0 0
  %3047 = vmatpush1.bf16.msra.mxu0 %v2475
  %3048 = vmatprep.subr.bf16.mxu0 0
  %3049 = vmatpush1.bf16.msra.mxu0 %v2476
  %3050 = vmatprep.subr.bf16.mxu0 0
  %3051 = vmatpush1.bf16.msra.mxu0 %v2477
  %3052 = vmatprep.subr.bf16.mxu0 0
  %3053 = vmatpush1.bf16.msra.mxu0 %v2478
  %3054 = vmatprep.subr.bf16.mxu0 0
  %3055 = vmatpush1.bf16.msra.mxu0 %v2479
  %3056 = vmatprep.subr.bf16.mxu0 0
  %3057 = vmatpush1.bf16.msra.mxu0 %v2480
  %3058 = vmatprep.subr.bf16.mxu0 0
  %3059 = vmatpush1.bf16.msra.mxu0 %v2481
  %3060 = vmatprep.mubr.bf16.mxu0 %v1239
  %3061 = vmatmul.mubr.bf16.gmra.mrb[0].mxu0 %v1238
  %v3062 = vpop.f32.mrb[0].mxu0
  %v3063 = vadd.f32 %v2966, %v3062
  %v3064 = vpop.f32.mrb[0].mxu0
  %v3065 = vpop.f32.mrb[0].mxu0
  %v3066 = vadd.f32 %v2969, %v3065
  %v3067 = vpop.f32.mrb[0].mxu0
  %3068 = vmatprep.mubr.bf16.mxu0 %v1264
  %3069 = vmatmul.mubr.bf16.gmra.mrb[0].mxu0 %v1263
  %v3070 = vpop.f32.mrb[0].mxu0
  %v3071 = vadd.f32 %v2974, %v3070
  %v3072 = vpop.f32.mrb[0].mxu0
  %v3073 = vpop.f32.mrb[0].mxu0
  %v3074 = vadd.f32 %v2977, %v3073
  %v3075 = vpop.f32.mrb[0].mxu0
  %3076 = vmatprep.mubr.bf16.mxu0 %v1289
  %3077 = vmatmul.mubr.bf16.gmra.mrb[0].mxu0 %v1288
  %v3078 = vpop.f32.mrb[0].mxu0
  %v3079 = vadd.f32 %v2982, %v3078
  %v3080 = vpop.f32.mrb[0].mxu0
  %v3081 = vpop.f32.mrb[0].mxu0
  %v3082 = vadd.f32 %v2985, %v3081
  %v3083 = vpop.f32.mrb[0].mxu0
  %3084 = vmatprep.mubr.bf16.mxu0 %v1314
  %3085 = vmatmul.mubr.bf16.gmra.mrb[0].mxu0 %v1313
  %v3086 = vpop.f32.mrb[0].mxu0
  %v3087 = vadd.f32 %v2990, %v3086
  %v3088 = vpop.f32.mrb[0].mxu0
  %v3089 = vpop.f32.mrb[0].mxu0
  %v3090 = vadd.f32 %v2993, %v3089
  %v3091 = vpop.f32.mrb[0].mxu0
  %3092 = vmatprep.mubr.bf16.mxu0 %v1339
  %3093 = vmatmul.mubr.bf16.gmra.mrb[0].mxu0 %v1338
  %v3094 = vpop.f32.mrb[0].mxu0
  %v3095 = vadd.f32 %v2998, %v3094
  %v3096 = vpop.f32.mrb[0].mxu0
  %v3097 = vpop.f32.mrb[0].mxu0
  %v3098 = vadd.f32 %v3001, %v3097
  %v3099 = vpop.f32.mrb[0].mxu0
  %3100 = vmatprep.mubr.bf16.mxu0 %v1364
  %3101 = vmatmul.mubr.bf16.gmra.mrb[0].mxu0 %v1363
  %v3102 = vpop.f32.mrb[0].mxu0
  %v3103 = vadd.f32 %v3006, %v3102
  %v3104 = vpop.f32.mrb[0].mxu0
  %v3105 = vpop.f32.mrb[0].mxu0
  %v3106 = vadd.f32 %v3009, %v3105
  %v3107 = vpop.f32.mrb[0].mxu0
  %3108 = vmatprep.mubr.bf16.mxu0 %v1389
  %3109 = vmatmul.mubr.bf16.gmra.mrb[0].mxu0 %v1388
  %v3110 = vpop.f32.mrb[0].mxu0
  %v3111 = vadd.f32 %v3014, %v3110
  %v3112 = vpop.f32.mrb[0].mxu0
  %v3113 = vpop.f32.mrb[0].mxu0
  %v3114 = vadd.f32 %v3017, %v3113
  %v3115 = vpop.f32.mrb[0].mxu0
  %3116 = vmatprep.mubr.bf16.mxu0 %v1414
  %3117 = vmatmul.mubr.bf16.gmra.mrb[0].mxu0 %v1413
  %v3118 = vpop.f32.mrb[0].mxu0
  %v3119 = vadd.f32 %v3022, %v3118
  %v3120 = vpop.f32.mrb[0].mxu0
  %v3121 = vpop.f32.mrb[0].mxu0
  %v3122 = vadd.f32 %v3025, %v3121
  %v3123 = vpop.f32.mrb[0].mxu0
  %3124 = vdwg.mxu0
  %3125 = vmatprep.subr.bf16.mxu0 0
  %3126 = vmatpush1.bf16.msra.mxu0 %v2482
  %3127 = vmatprep.subr.bf16.mxu0 0
  %3128 = vmatpush1.bf16.msra.mxu0 %v2483
  %3129 = vmatprep.subr.bf16.mxu0 0
  %3130 = vmatpush1.bf16.msra.mxu0 %v2484
  %3131 = vmatprep.subr.bf16.mxu0 0
  %3132 = vmatpush1.bf16.msra.mxu0 %v2485
  %3133 = vmatprep.subr.bf16.mxu0 0
  %3134 = vmatpush1.bf16.msra.mxu0 %v2486
  %3135 = vmatprep.subr.bf16.mxu0 0
  %3136 = vmatpush1.bf16.msra.mxu0 %v2487
  %3137 = vmatprep.subr.bf16.mxu0 0
  %3138 = vmatpush1.bf16.msra.mxu0 %v2488
  %3139 = vmatprep.subr.bf16.mxu0 0
  %3140 = vmatpush1.bf16.msra.mxu0 %v2489
  %3141 = vmatprep.subr.bf16.mxu0 0
  %3142 = vmatpush1.bf16.msra.mxu0 %v2490
  %3143 = vmatprep.subr.bf16.mxu0 0
  %3144 = vmatpush1.bf16.msra.mxu0 %v2491
  %3145 = vmatprep.subr.bf16.mxu0 0
  %3146 = vmatpush1.bf16.msra.mxu0 %v2492
  %3147 = vmatprep.subr.bf16.mxu0 0
  %3148 = vmatpush1.bf16.msra.mxu0 %v2493
  %3149 = vmatprep.subr.bf16.mxu0 0
  %3150 = vmatpush1.bf16.msra.mxu0 %v2494
  %3151 = vmatprep.subr.bf16.mxu0 0
  %3152 = vmatpush1.bf16.msra.mxu0 %v2495
  %3153 = vmatprep.subr.bf16.mxu0 0
  %3154 = vmatpush1.bf16.msra.mxu0 %v2496
  %3155 = vmatprep.subr.bf16.mxu0 0
  %3156 = vmatpush1.bf16.msra.mxu0 %v2497
  %3157 = vmatprep.mubr.bf16.mxu0 %v1241
  %3158 = vmatmul.mubr.bf16.gmra.mrb[0].mxu0 %v1240
  %v3159 = vpop.f32.mrb[0].mxu0
  %v3160 = vadd.f32 %v3063, %v3159
  %v3161 = vpop.f32.mrb[0].mxu0
  %v3162 = vpop.f32.mrb[0].mxu0
  %v3163 = vadd.f32 %v3066, %v3162
  %v3164 = vpop.f32.mrb[0].mxu0
  %3165 = vmatprep.mubr.bf16.mxu0 %v1266
  %3166 = vmatmul.mubr.bf16.gmra.mrb[0].mxu0 %v1265
  %v3167 = vpop.f32.mrb[0].mxu0
  %v3168 = vadd.f32 %v3071, %v3167
  %v3169 = vpop.f32.mrb[0].mxu0
  %v3170 = vpop.f32.mrb[0].mxu0
  %v3171 = vadd.f32 %v3074, %v3170
  %v3172 = vpop.f32.mrb[0].mxu0
  %3173 = vmatprep.mubr.bf16.mxu0 %v1291
  %3174 = vmatmul.mubr.bf16.gmra.mrb[0].mxu0 %v1290
  %v3175 = vpop.f32.mrb[0].mxu0
  %v3176 = vadd.f32 %v3079, %v3175
  %v3177 = vpop.f32.mrb[0].mxu0
  %v3178 = vpop.f32.mrb[0].mxu0
  %v3179 = vadd.f32 %v3082, %v3178
  %v3180 = vpop.f32.mrb[0].mxu0
  %3181 = vmatprep.mubr.bf16.mxu0 %v1316
  %3182 = vmatmul.mubr.bf16.gmra.mrb[0].mxu0 %v1315
  %v3183 = vpop.f32.mrb[0].mxu0
  %v3184 = vadd.f32 %v3087, %v3183
  %v3185 = vpop.f32.mrb[0].mxu0
  %v3186 = vpop.f32.mrb[0].mxu0
  %v3187 = vadd.f32 %v3090, %v3186
  %v3188 = vpop.f32.mrb[0].mxu0
  %3189 = vmatprep.mubr.bf16.mxu0 %v1341
  %3190 = vmatmul.mubr.bf16.gmra.mrb[0].mxu0 %v1340
  %v3191 = vpop.f32.mrb[0].mxu0
  %v3192 = vadd.f32 %v3095, %v3191
  %v3193 = vpop.f32.mrb[0].mxu0
  %v3194 = vpop.f32.mrb[0].mxu0
  %v3195 = vadd.f32 %v3098, %v3194
  %v3196 = vpop.f32.mrb[0].mxu0
  %3197 = vmatprep.mubr.bf16.mxu0 %v1366
  %3198 = vmatmul.mubr.bf16.gmra.mrb[0].mxu0 %v1365
  %v3199 = vpop.f32.mrb[0].mxu0
  %v3200 = vadd.f32 %v3103, %v3199
  %v3201 = vpop.f32.mrb[0].mxu0
  %v3202 = vpop.f32.mrb[0].mxu0
  %v3203 = vadd.f32 %v3106, %v3202
  %v3204 = vpop.f32.mrb[0].mxu0
  %3205 = vmatprep.mubr.bf16.mxu0 %v1391
  %3206 = vmatmul.mubr.bf16.gmra.mrb[0].mxu0 %v1390
  %v3207 = vpop.f32.mrb[0].mxu0
  %v3208 = vadd.f32 %v3111, %v3207
  %v3209 = vpop.f32.mrb[0].mxu0
  %v3210 = vpop.f32.mrb[0].mxu0
  %v3211 = vadd.f32 %v3114, %v3210
  %v3212 = vpop.f32.mrb[0].mxu0
  %3213 = vmatprep.mubr.bf16.mxu0 %v1416
  %3214 = vmatmul.mubr.bf16.gmra.mrb[0].mxu0 %v1415
  %v3215 = vpop.f32.mrb[0].mxu0
  %v3216 = vadd.f32 %v3119, %v3215
  %v3217 = vpop.f32.mrb[0].mxu0
  %v3218 = vpop.f32.mrb[0].mxu0
  %v3219 = vadd.f32 %v3122, %v3218
  %v3220 = vpop.f32.mrb[0].mxu0
  %3221 = vdwg.mxu0
  %3222 = vmatprep.subr.bf16.mxu0 0
  %3223 = vmatpush1.bf16.msra.mxu0 %v2498
  %3224 = vmatprep.subr.bf16.mxu0 0
  %3225 = vmatpush1.bf16.msra.mxu0 %v2499
  %3226 = vmatprep.subr.bf16.mxu0 0
  %3227 = vmatpush1.bf16.msra.mxu0 %v2500
  %3228 = vmatprep.subr.bf16.mxu0 0
  %3229 = vmatpush1.bf16.msra.mxu0 %v2501
  %3230 = vmatprep.subr.bf16.mxu0 0
  %3231 = vmatpush1.bf16.msra.mxu0 %v2502
  %3232 = vmatprep.subr.bf16.mxu0 0
  %3233 = vmatpush1.bf16.msra.mxu0 %v2503
  %3234 = vmatprep.subr.bf16.mxu0 0
  %3235 = vmatpush1.bf16.msra.mxu0 %v2504
  %3236 = vmatprep.subr.bf16.mxu0 0
  %3237 = vmatpush1.bf16.msra.mxu0 %v2505
  %3238 = vmatprep.subr.bf16.mxu0 0
  %3239 = vmatpush1.bf16.msra.mxu0 %v2506
  %3240 = vmatprep.subr.bf16.mxu0 0
  %3241 = vmatpush1.bf16.msra.mxu0 %v2507
  %3242 = vmatprep.subr.bf16.mxu0 0
  %3243 = vmatpush1.bf16.msra.mxu0 %v2508
  %3244 = vmatprep.subr.bf16.mxu0 0
  %3245 = vmatpush1.bf16.msra.mxu0 %v2509
  %3246 = vmatprep.subr.bf16.mxu0 0
  %3247 = vmatpush1.bf16.msra.mxu0 %v2510
  %3248 = vmatprep.subr.bf16.mxu0 0
  %3249 = vmatpush1.bf16.msra.mxu0 %v2511
  %3250 = vmatprep.subr.bf16.mxu0 0
  %3251 = vmatpush1.bf16.msra.mxu0 %v2512
  %3252 = vmatprep.subr.bf16.mxu0 0
  %3253 = vmatpush1.bf16.msra.mxu0 %v2513
  %3254 = vmatprep.mubr.bf16.mxu0 %v1243
  %3255 = vmatmul.mubr.bf16.gmra.mrb[0].mxu0 %v1242
  %v3256 = vpop.f32.mrb[0].mxu0
  %v3257 = vadd.f32 %v3160, %v3256
  %v3258 = vpop.f32.mrb[0].mxu0
  %v3259 = vpop.f32.mrb[0].mxu0
  %v3260 = vadd.f32 %v3163, %v3259
  %v3261 = vpop.f32.mrb[0].mxu0
  %3262 = vmatprep.mubr.bf16.mxu0 %v1268
  %3263 = vmatmul.mubr.bf16.gmra.mrb[0].mxu0 %v1267
  %v3264 = vpop.f32.mrb[0].mxu0
  %v3265 = vadd.f32 %v3168, %v3264
  %v3266 = vpop.f32.mrb[0].mxu0
  %v3267 = vpop.f32.mrb[0].mxu0
  %v3268 = vadd.f32 %v3171, %v3267
  %v3269 = vpop.f32.mrb[0].mxu0
  %3270 = vmatprep.mubr.bf16.mxu0 %v1293
  %3271 = vmatmul.mubr.bf16.gmra.mrb[0].mxu0 %v1292
  %v3272 = vpop.f32.mrb[0].mxu0
  %v3273 = vadd.f32 %v3176, %v3272
  %v3274 = vpop.f32.mrb[0].mxu0
  %v3275 = vpop.f32.mrb[0].mxu0
  %v3276 = vadd.f32 %v3179, %v3275
  %v3277 = vpop.f32.mrb[0].mxu0
  %3278 = vmatprep.mubr.bf16.mxu0 %v1318
  %3279 = vmatmul.mubr.bf16.gmra.mrb[0].mxu0 %v1317
  %v3280 = vpop.f32.mrb[0].mxu0
  %v3281 = vadd.f32 %v3184, %v3280
  %v3282 = vpop.f32.mrb[0].mxu0
  %v3283 = vpop.f32.mrb[0].mxu0
  %v3284 = vadd.f32 %v3187, %v3283
  %v3285 = vpop.f32.mrb[0].mxu0
  %3286 = vmatprep.mubr.bf16.mxu0 %v1343
  %3287 = vmatmul.mubr.bf16.gmra.mrb[0].mxu0 %v1342
  %v3288 = vpop.f32.mrb[0].mxu0
  %v3289 = vadd.f32 %v3192, %v3288
  %v3290 = vpop.f32.mrb[0].mxu0
  %v3291 = vpop.f32.mrb[0].mxu0
  %v3292 = vadd.f32 %v3195, %v3291
  %v3293 = vpop.f32.mrb[0].mxu0
  %3294 = vmatprep.mubr.bf16.mxu0 %v1368
  %3295 = vmatmul.mubr.bf16.gmra.mrb[0].mxu0 %v1367
  %v3296 = vpop.f32.mrb[0].mxu0
  %v3297 = vadd.f32 %v3200, %v3296
  %v3298 = vpop.f32.mrb[0].mxu0
  %v3299 = vpop.f32.mrb[0].mxu0
  %v3300 = vadd.f32 %v3203, %v3299
  %v3301 = vpop.f32.mrb[0].mxu0
  %3302 = vmatprep.mubr.bf16.mxu0 %v1393
  %3303 = vmatmul.mubr.bf16.gmra.mrb[0].mxu0 %v1392
  %v3304 = vpop.f32.mrb[0].mxu0
  %v3305 = vadd.f32 %v3208, %v3304
  %v3306 = vpop.f32.mrb[0].mxu0
  %v3307 = vpop.f32.mrb[0].mxu0
  %v3308 = vadd.f32 %v3211, %v3307
  %v3309 = vpop.f32.mrb[0].mxu0
  %3310 = vmatprep.mubr.bf16.mxu0 %v1418
  %3311 = vmatmul.mubr.bf16.gmra.mrb[0].mxu0 %v1417
  %v3312 = vpop.f32.mrb[0].mxu0
  %v3313 = vadd.f32 %v3216, %v3312
  %v3314 = vpop.f32.mrb[0].mxu0
  %v3315 = vpop.f32.mrb[0].mxu0
  %v3316 = vadd.f32 %v3219, %v3315
  %v3317 = vpop.f32.mrb[0].mxu0
  %3318 = vdwg.mxu0
  %3319 = vmatprep.subr.bf16.mxu0 0
  %3320 = vmatpush1.bf16.msra.mxu0 %v2514
  %3321 = vmatprep.subr.bf16.mxu0 0
  %3322 = vmatpush1.bf16.msra.mxu0 %v2515
  %3323 = vmatprep.subr.bf16.mxu0 0
  %3324 = vmatpush1.bf16.msra.mxu0 %v2516
  %3325 = vmatprep.subr.bf16.mxu0 0
  %3326 = vmatpush1.bf16.msra.mxu0 %v2517
  %3327 = vmatprep.subr.bf16.mxu0 0
  %3328 = vmatpush1.bf16.msra.mxu0 %v2518
  %3329 = vmatprep.subr.bf16.mxu0 0
  %3330 = vmatpush1.bf16.msra.mxu0 %v2519
  %3331 = vmatprep.subr.bf16.mxu0 0
  %3332 = vmatpush1.bf16.msra.mxu0 %v2520
  %3333 = vmatprep.subr.bf16.mxu0 0
  %3334 = vmatpush1.bf16.msra.mxu0 %v2521
  %3335 = vmatprep.subr.bf16.mxu0 0
  %3336 = vmatpush1.bf16.msra.mxu0 %v2522
  %3337 = vmatprep.subr.bf16.mxu0 0
  %3338 = vmatpush1.bf16.msra.mxu0 %v2523
  %3339 = vmatprep.subr.bf16.mxu0 0
  %3340 = vmatpush1.bf16.msra.mxu0 %v2524
  %3341 = vmatprep.subr.bf16.mxu0 0
  %3342 = vmatpush1.bf16.msra.mxu0 %v2525
  %3343 = vmatprep.subr.bf16.mxu0 0
  %3344 = vmatpush1.bf16.msra.mxu0 %v2526
  %3345 = vmatprep.subr.bf16.mxu0 0
  %3346 = vmatpush1.bf16.msra.mxu0 %v2527
  %3347 = vmatprep.subr.bf16.mxu0 0
  %3348 = vmatpush1.bf16.msra.mxu0 %v2528
  %3349 = vmatprep.subr.bf16.mxu0 0
  %3350 = vmatpush1.bf16.msra.mxu0 %v2529
  %3351 = vmatprep.mubr.bf16.mxu0 %v1245
  %3352 = vmatmul.mubr.bf16.gmra.mrb[0].mxu0 %v1244
  %v3353 = vpop.f32.mrb[0].mxu0
  %v3354 = vadd.f32 %v3257, %v3353
  %v3355 = vpop.f32.mrb[0].mxu0
  %v3356 = vpop.f32.mrb[0].mxu0
  %v3357 = vadd.f32 %v3260, %v3356
  %v3358 = vpop.f32.mrb[0].mxu0
  %3359 = vmatprep.mubr.bf16.mxu0 %v1270
  %3360 = vmatmul.mubr.bf16.gmra.mrb[0].mxu0 %v1269
  %v3361 = vpop.f32.mrb[0].mxu0
  %v3362 = vadd.f32 %v3265, %v3361
  %v3363 = vpop.f32.mrb[0].mxu0
  %v3364 = vpop.f32.mrb[0].mxu0
  %v3365 = vadd.f32 %v3268, %v3364
  %v3366 = vpop.f32.mrb[0].mxu0
  %3367 = vmatprep.mubr.bf16.mxu0 %v1295
  %3368 = vmatmul.mubr.bf16.gmra.mrb[0].mxu0 %v1294
  %v3369 = vpop.f32.mrb[0].mxu0
  %v3370 = vadd.f32 %v3273, %v3369
  %v3371 = vpop.f32.mrb[0].mxu0
  %v3372 = vpop.f32.mrb[0].mxu0
  %v3373 = vadd.f32 %v3276, %v3372
  %v3374 = vpop.f32.mrb[0].mxu0
  %3375 = vmatprep.mubr.bf16.mxu0 %v1320
  %3376 = vmatmul.mubr.bf16.gmra.mrb[0].mxu0 %v1319
  %v3377 = vpop.f32.mrb[0].mxu0
  %v3378 = vadd.f32 %v3281, %v3377
  %v3379 = vpop.f32.mrb[0].mxu0
  %v3380 = vpop.f32.mrb[0].mxu0
  %v3381 = vadd.f32 %v3284, %v3380
  %v3382 = vpop.f32.mrb[0].mxu0
  %3383 = vmatprep.mubr.bf16.mxu0 %v1345
  %3384 = vmatmul.mubr.bf16.gmra.mrb[0].mxu0 %v1344
  %v3385 = vpop.f32.mrb[0].mxu0
  %v3386 = vadd.f32 %v3289, %v3385
  %v3387 = vpop.f32.mrb[0].mxu0
  %v3388 = vpop.f32.mrb[0].mxu0
  %v3389 = vadd.f32 %v3292, %v3388
  %v3390 = vpop.f32.mrb[0].mxu0
  %3391 = vmatprep.mubr.bf16.mxu0 %v1370
  %3392 = vmatmul.mubr.bf16.gmra.mrb[0].mxu0 %v1369
  %v3393 = vpop.f32.mrb[0].mxu0
  %v3394 = vadd.f32 %v3297, %v3393
  %v3395 = vpop.f32.mrb[0].mxu0
  %v3396 = vpop.f32.mrb[0].mxu0
  %v3397 = vadd.f32 %v3300, %v3396
  %v3398 = vpop.f32.mrb[0].mxu0
  %3399 = vmatprep.mubr.bf16.mxu0 %v1395
  %3400 = vmatmul.mubr.bf16.gmra.mrb[0].mxu0 %v1394
  %v3401 = vpop.f32.mrb[0].mxu0
  %v3402 = vadd.f32 %v3305, %v3401
  %v3403 = vpop.f32.mrb[0].mxu0
  %v3404 = vpop.f32.mrb[0].mxu0
  %v3405 = vadd.f32 %v3308, %v3404
  %v3406 = vpop.f32.mrb[0].mxu0
  %3407 = vmatprep.mubr.bf16.mxu0 %v1420
  %3408 = vmatmul.mubr.bf16.gmra.mrb[0].mxu0 %v1419
  %v3409 = vpop.f32.mrb[0].mxu0
  %v3410 = vadd.f32 %v3313, %v3409
  %v3411 = vpop.f32.mrb[0].mxu0
  %v3412 = vpop.f32.mrb[0].mxu0
  %v3413 = vadd.f32 %v3316, %v3412
  %v3414 = vpop.f32.mrb[0].mxu0
  %3415 = vdwg.mxu0
  %3416 = vmatprep.subr.bf16.mxu0 0
  %3417 = vmatpush1.bf16.msra.mxu0 %v2530
  %3418 = vmatprep.subr.bf16.mxu0 0
  %3419 = vmatpush1.bf16.msra.mxu0 %v2531
  %3420 = vmatprep.subr.bf16.mxu0 0
  %3421 = vmatpush1.bf16.msra.mxu0 %v2532
  %3422 = vmatprep.subr.bf16.mxu0 0
  %3423 = vmatpush1.bf16.msra.mxu0 %v2533
  %3424 = vmatprep.subr.bf16.mxu0 0
  %3425 = vmatpush1.bf16.msra.mxu0 %v2534
  %3426 = vmatprep.subr.bf16.mxu0 0
  %3427 = vmatpush1.bf16.msra.mxu0 %v2535
  %3428 = vmatprep.subr.bf16.mxu0 0
  %3429 = vmatpush1.bf16.msra.mxu0 %v2536
  %3430 = vmatprep.subr.bf16.mxu0 0
  %3431 = vmatpush1.bf16.msra.mxu0 %v2537
  %3432 = vmatprep.subr.bf16.mxu0 0
  %3433 = vmatpush1.bf16.msra.mxu0 %v2538
  %3434 = vmatprep.subr.bf16.mxu0 0
  %3435 = vmatpush1.bf16.msra.mxu0 %v2539
  %3436 = vmatprep.subr.bf16.mxu0 0
  %3437 = vmatpush1.bf16.msra.mxu0 %v2540
  %3438 = vmatprep.subr.bf16.mxu0 0
  %3439 = vmatpush1.bf16.msra.mxu0 %v2541
  %3440 = vmatprep.subr.bf16.mxu0 0
  %3441 = vmatpush1.bf16.msra.mxu0 %v2542
  %3442 = vmatprep.subr.bf16.mxu0 0
  %3443 = vmatpush1.bf16.msra.mxu0 %v2543
  %3444 = vmatprep.subr.bf16.mxu0 0
  %3445 = vmatpush1.bf16.msra.mxu0 %v2544
  %3446 = vmatprep.subr.bf16.mxu0 0
  %3447 = vmatpush1.bf16.msra.mxu0 %v2545
  %3448 = vmatprep.mubr.bf16.mxu0 %v1247
  %3449 = vmatmul.mubr.bf16.gmra.mrb[0].mxu0 %v1246
  %v3450 = vpop.f32.mrb[0].mxu0
  %v3451 = vadd.f32 %v3354, %v3450
  %v3452 = vpop.f32.mrb[0].mxu0
  %v3453 = vpop.f32.mrb[0].mxu0
  %v3454 = vadd.f32 %v3357, %v3453
  %v3455 = vpop.f32.mrb[0].mxu0
  %3456 = vmatprep.mubr.bf16.mxu0 %v1272
  %3457 = vmatmul.mubr.bf16.gmra.mrb[0].mxu0 %v1271
  %v3458 = vpop.f32.mrb[0].mxu0
  %v3459 = vadd.f32 %v3362, %v3458
  %v3460 = vpop.f32.mrb[0].mxu0
  %v3461 = vpop.f32.mrb[0].mxu0
  %v3462 = vadd.f32 %v3365, %v3461
  %v3463 = vpop.f32.mrb[0].mxu0
  %3464 = vmatprep.mubr.bf16.mxu0 %v1297
  %3465 = vmatmul.mubr.bf16.gmra.mrb[0].mxu0 %v1296
  %v3466 = vpop.f32.mrb[0].mxu0
  %v3467 = vadd.f32 %v3370, %v3466
  %v3468 = vpop.f32.mrb[0].mxu0
  %v3469 = vpop.f32.mrb[0].mxu0
  %v3470 = vadd.f32 %v3373, %v3469
  %v3471 = vpop.f32.mrb[0].mxu0
  %3472 = vmatprep.mubr.bf16.mxu0 %v1322
  %3473 = vmatmul.mubr.bf16.gmra.mrb[0].mxu0 %v1321
  %v3474 = vpop.f32.mrb[0].mxu0
  %v3475 = vadd.f32 %v3378, %v3474
  %v3476 = vpop.f32.mrb[0].mxu0
  %v3477 = vpop.f32.mrb[0].mxu0
  %v3478 = vadd.f32 %v3381, %v3477
  %v3479 = vpop.f32.mrb[0].mxu0
  %3480 = vmatprep.mubr.bf16.mxu0 %v1347
  %3481 = vmatmul.mubr.bf16.gmra.mrb[0].mxu0 %v1346
  %v3482 = vpop.f32.mrb[0].mxu0
  %v3483 = vadd.f32 %v3386, %v3482
  %v3484 = vpop.f32.mrb[0].mxu0
  %v3485 = vpop.f32.mrb[0].mxu0
  %v3486 = vadd.f32 %v3389, %v3485
  %v3487 = vpop.f32.mrb[0].mxu0
  %3488 = vmatprep.mubr.bf16.mxu0 %v1372
  %3489 = vmatmul.mubr.bf16.gmra.mrb[0].mxu0 %v1371
  %v3490 = vpop.f32.mrb[0].mxu0
  %v3491 = vadd.f32 %v3394, %v3490
  %v3492 = vpop.f32.mrb[0].mxu0
  %v3493 = vpop.f32.mrb[0].mxu0
  %v3494 = vadd.f32 %v3397, %v3493
  %v3495 = vpop.f32.mrb[0].mxu0
  %3496 = vmatprep.mubr.bf16.mxu0 %v1397
  %3497 = vmatmul.mubr.bf16.gmra.mrb[0].mxu0 %v1396
  %v3498 = vpop.f32.mrb[0].mxu0
  %v3499 = vadd.f32 %v3402, %v3498
  %v3500 = vpop.f32.mrb[0].mxu0
  %v3501 = vpop.f32.mrb[0].mxu0
  %v3502 = vadd.f32 %v3405, %v3501
  %v3503 = vpop.f32.mrb[0].mxu0
  %3504 = vmatprep.mubr.bf16.mxu0 %v1422
  %3505 = vmatmul.mubr.bf16.gmra.mrb[0].mxu0 %v1421
  %v3506 = vpop.f32.mrb[0].mxu0
  %v3507 = vadd.f32 %v3410, %v3506
  %v3508 = vpop.f32.mrb[0].mxu0
  %v3509 = vpop.f32.mrb[0].mxu0
  %v3510 = vadd.f32 %v3413, %v3509
  %v3511 = vpop.f32.mrb[0].mxu0
  %3512 = vdwg.mxu0
  %3513 = vmatprep.subr.bf16.mxu0 0
  %3514 = vmatpush1.bf16.msra.mxu0 %v2546
  %3515 = vmatprep.subr.bf16.mxu0 0
  %3516 = vmatpush1.bf16.msra.mxu0 %v2547
  %3517 = vmatprep.subr.bf16.mxu0 0
  %3518 = vmatpush1.bf16.msra.mxu0 %v2548
  %3519 = vmatprep.subr.bf16.mxu0 0
  %3520 = vmatpush1.bf16.msra.mxu0 %v2549
  %3521 = vmatprep.subr.bf16.mxu0 0
  %3522 = vmatpush1.bf16.msra.mxu0 %v2550
  %3523 = vmatprep.subr.bf16.mxu0 0
  %3524 = vmatpush1.bf16.msra.mxu0 %v2551
  %3525 = vmatprep.subr.bf16.mxu0 0
  %3526 = vmatpush1.bf16.msra.mxu0 %v2552
  %3527 = vmatprep.subr.bf16.mxu0 0
  %3528 = vmatpush1.bf16.msra.mxu0 %v2553
  %3529 = vmatprep.subr.bf16.mxu0 0
  %3530 = vmatpush1.bf16.msra.mxu0 %v2554
  %3531 = vmatprep.subr.bf16.mxu0 0
  %3532 = vmatpush1.bf16.msra.mxu0 %v2555
  %3533 = vmatprep.subr.bf16.mxu0 0
  %3534 = vmatpush1.bf16.msra.mxu0 %v2556
  %3535 = vmatprep.subr.bf16.mxu0 0
  %3536 = vmatpush1.bf16.msra.mxu0 %v2557
  %3537 = vmatprep.subr.bf16.mxu0 0
  %3538 = vmatpush1.bf16.msra.mxu0 %v2558
  %3539 = vmatprep.subr.bf16.mxu0 0
  %3540 = vmatpush1.bf16.msra.mxu0 %v2559
  %3541 = vmatprep.subr.bf16.mxu0 0
  %3542 = vmatpush1.bf16.msra.mxu0 %v2560
  %3543 = vmatprep.subr.bf16.mxu0 0
  %3544 = vmatpush1.bf16.msra.mxu0 %v2561
  %3545 = vmatprep.mubr.bf16.mxu0 %v1249
  %3546 = vmatmul.mubr.bf16.gmra.mrb[0].mxu0 %v1248
  %v3547 = vpop.f32.mrb[0].mxu0
  %v3548 = vadd.f32 %v3451, %v3547
  %v3549 = vpop.f32.mrb[0].mxu0
  %v3550 = vpop.f32.mrb[0].mxu0
  %v3551 = vadd.f32 %v3454, %v3550
  %v3552 = vpop.f32.mrb[0].mxu0
  %3553 = vmatprep.mubr.bf16.mxu0 %v1274
  %3554 = vmatmul.mubr.bf16.gmra.mrb[0].mxu0 %v1273
  %v3555 = vpop.f32.mrb[0].mxu0
  %v3556 = vadd.f32 %v3459, %v3555
  %v3557 = vpop.f32.mrb[0].mxu0
  %v3558 = vpop.f32.mrb[0].mxu0
  %v3559 = vadd.f32 %v3462, %v3558
  %v3560 = vpop.f32.mrb[0].mxu0
  %3561 = vmatprep.mubr.bf16.mxu0 %v1299
  %3562 = vmatmul.mubr.bf16.gmra.mrb[0].mxu0 %v1298
  %v3563 = vpop.f32.mrb[0].mxu0
  %v3564 = vadd.f32 %v3467, %v3563
  %v3565 = vpop.f32.mrb[0].mxu0
  %v3566 = vpop.f32.mrb[0].mxu0
  %v3567 = vadd.f32 %v3470, %v3566
  %v3568 = vpop.f32.mrb[0].mxu0
  %3569 = vmatprep.mubr.bf16.mxu0 %v1324
  %3570 = vmatmul.mubr.bf16.gmra.mrb[0].mxu0 %v1323
  %v3571 = vpop.f32.mrb[0].mxu0
  %v3572 = vadd.f32 %v3475, %v3571
  %v3573 = vpop.f32.mrb[0].mxu0
  %v3574 = vpop.f32.mrb[0].mxu0
  %v3575 = vadd.f32 %v3478, %v3574
  %v3576 = vpop.f32.mrb[0].mxu0
  %3577 = vmatprep.mubr.bf16.mxu0 %v1349
  %3578 = vmatmul.mubr.bf16.gmra.mrb[0].mxu0 %v1348
  %v3579 = vpop.f32.mrb[0].mxu0
  %v3580 = vadd.f32 %v3483, %v3579
  %v3581 = vpop.f32.mrb[0].mxu0
  %v3582 = vpop.f32.mrb[0].mxu0
  %v3583 = vadd.f32 %v3486, %v3582
  %v3584 = vpop.f32.mrb[0].mxu0
  %3585 = vmatprep.mubr.bf16.mxu0 %v1374
  %3586 = vmatmul.mubr.bf16.gmra.mrb[0].mxu0 %v1373
  %v3587 = vpop.f32.mrb[0].mxu0
  %v3588 = vadd.f32 %v3491, %v3587
  %v3589 = vpop.f32.mrb[0].mxu0
  %v3590 = vpop.f32.mrb[0].mxu0
  %v3591 = vadd.f32 %v3494, %v3590
  %v3592 = vpop.f32.mrb[0].mxu0
  %3593 = vmatprep.mubr.bf16.mxu0 %v1399
  %3594 = vmatmul.mubr.bf16.gmra.mrb[0].mxu0 %v1398
  %v3595 = vpop.f32.mrb[0].mxu0
  %v3596 = vadd.f32 %v3499, %v3595
  %v3597 = vpop.f32.mrb[0].mxu0
  %v3598 = vpop.f32.mrb[0].mxu0
  %v3599 = vadd.f32 %v3502, %v3598
  %v3600 = vpop.f32.mrb[0].mxu0
  %3601 = vmatprep.mubr.bf16.mxu0 %v1424
  %3602 = vmatmul.mubr.bf16.gmra.mrb[0].mxu0 %v1423
  %v3603 = vpop.f32.mrb[0].mxu0
  %v3604 = vadd.f32 %v3507, %v3603
  %v3605 = vpop.f32.mrb[0].mxu0
  %v3606 = vpop.f32.mrb[0].mxu0
  %v3607 = vadd.f32 %v3510, %v3606
  %v3608 = vpop.f32.mrb[0].mxu0
  %3609 = vdwg.mxu0
  %3610 = vmatprep.subr.bf16.mxu0 0
  %3611 = vmatpush1.bf16.msra.mxu0 %v2562
  %3612 = vmatprep.subr.bf16.mxu0 0
  %3613 = vmatpush1.bf16.msra.mxu0 %v2563
  %3614 = vmatprep.subr.bf16.mxu0 0
  %3615 = vmatpush1.bf16.msra.mxu0 %v2564
  %3616 = vmatprep.subr.bf16.mxu0 0
  %3617 = vmatpush1.bf16.msra.mxu0 %v2565
  %3618 = vmatprep.subr.bf16.mxu0 0
  %3619 = vmatpush1.bf16.msra.mxu0 %v2566
  %3620 = vmatprep.subr.bf16.mxu0 0
  %3621 = vmatpush1.bf16.msra.mxu0 %v2567
  %3622 = vmatprep.subr.bf16.mxu0 0
  %3623 = vmatpush1.bf16.msra.mxu0 %v2568
  %3624 = vmatprep.subr.bf16.mxu0 0
  %3625 = vmatpush1.bf16.msra.mxu0 %v2569
  %3626 = vmatprep.subr.bf16.mxu0 0
  %3627 = vmatpush1.bf16.msra.mxu0 %v2570
  %3628 = vmatprep.subr.bf16.mxu0 0
  %3629 = vmatpush1.bf16.msra.mxu0 %v2571
  %3630 = vmatprep.subr.bf16.mxu0 0
  %3631 = vmatpush1.bf16.msra.mxu0 %v2572
  %3632 = vmatprep.subr.bf16.mxu0 0
  %3633 = vmatpush1.bf16.msra.mxu0 %v2573
  %3634 = vmatprep.subr.bf16.mxu0 0
  %3635 = vmatpush1.bf16.msra.mxu0 %v2574
  %3636 = vmatprep.subr.bf16.mxu0 0
  %3637 = vmatpush1.bf16.msra.mxu0 %v2575
  %3638 = vmatprep.subr.bf16.mxu0 0
  %3639 = vmatpush1.bf16.msra.mxu0 %v2576
  %3640 = vmatprep.subr.bf16.mxu0 0
  %3641 = vmatpush1.bf16.msra.mxu0 %v2577
  %3642 = vmatprep.mubr.bf16.mxu0 %v1251
  %3643 = vmatmul.mubr.bf16.gmra.mrb[0].mxu0 %v1250
  %v3644 = vpop.f32.mrb[0].mxu0
  %v3645 = vadd.f32 %v3548, %v3644
  %v3646 = vpop.f32.mrb[0].mxu0
  %v3647 = vpop.f32.mrb[0].mxu0
  %v3648 = vadd.f32 %v3551, %v3647
  %v3649 = vpop.f32.mrb[0].mxu0
  %3650 = vmatprep.mubr.bf16.mxu0 %v1276
  %3651 = vmatmul.mubr.bf16.gmra.mrb[0].mxu0 %v1275
  %v3652 = vpop.f32.mrb[0].mxu0
  %v3653 = vadd.f32 %v3556, %v3652
  %v3654 = vpop.f32.mrb[0].mxu0
  %v3655 = vpop.f32.mrb[0].mxu0
  %v3656 = vadd.f32 %v3559, %v3655
  %v3657 = vpop.f32.mrb[0].mxu0
  %3658 = vmatprep.mubr.bf16.mxu0 %v1301
  %3659 = vmatmul.mubr.bf16.gmra.mrb[0].mxu0 %v1300
  %v3660 = vpop.f32.mrb[0].mxu0
  %v3661 = vadd.f32 %v3564, %v3660
  %v3662 = vpop.f32.mrb[0].mxu0
  %v3663 = vpop.f32.mrb[0].mxu0
  %v3664 = vadd.f32 %v3567, %v3663
  %v3665 = vpop.f32.mrb[0].mxu0
  %3666 = vmatprep.mubr.bf16.mxu0 %v1326
  %3667 = vmatmul.mubr.bf16.gmra.mrb[0].mxu0 %v1325
  %v3668 = vpop.f32.mrb[0].mxu0
  %v3669 = vadd.f32 %v3572, %v3668
  %v3670 = vpop.f32.mrb[0].mxu0
  %v3671 = vpop.f32.mrb[0].mxu0
  %v3672 = vadd.f32 %v3575, %v3671
  %v3673 = vpop.f32.mrb[0].mxu0
  %3674 = vmatprep.mubr.bf16.mxu0 %v1351
  %3675 = vmatmul.mubr.bf16.gmra.mrb[0].mxu0 %v1350
  %v3676 = vpop.f32.mrb[0].mxu0
  %v3677 = vadd.f32 %v3580, %v3676
  %v3678 = vpop.f32.mrb[0].mxu0
  %v3679 = vpop.f32.mrb[0].mxu0
  %v3680 = vadd.f32 %v3583, %v3679
  %v3681 = vpop.f32.mrb[0].mxu0
  %3682 = vmatprep.mubr.bf16.mxu0 %v1376
  %3683 = vmatmul.mubr.bf16.gmra.mrb[0].mxu0 %v1375
  %v3684 = vpop.f32.mrb[0].mxu0
  %v3685 = vadd.f32 %v3588, %v3684
  %v3686 = vpop.f32.mrb[0].mxu0
  %v3687 = vpop.f32.mrb[0].mxu0
  %v3688 = vadd.f32 %v3591, %v3687
  %v3689 = vpop.f32.mrb[0].mxu0
  %3690 = vmatprep.mubr.bf16.mxu0 %v1401
  %3691 = vmatmul.mubr.bf16.gmra.mrb[0].mxu0 %v1400
  %v3692 = vpop.f32.mrb[0].mxu0
  %v3693 = vadd.f32 %v3596, %v3692
  %v3694 = vpop.f32.mrb[0].mxu0
  %v3695 = vpop.f32.mrb[0].mxu0
  %v3696 = vadd.f32 %v3599, %v3695
  %v3697 = vpop.f32.mrb[0].mxu0
  %3698 = vmatprep.mubr.bf16.mxu0 %v1426
  %3699 = vmatmul.mubr.bf16.gmra.mrb[0].mxu0 %v1425
  %v3700 = vpop.f32.mrb[0].mxu0
  %v3701 = vadd.f32 %v3604, %v3700
  %v3702 = vpop.f32.mrb[0].mxu0
  %v3703 = vpop.f32.mrb[0].mxu0
  %v3704 = vadd.f32 %v3607, %v3703
  %v3705 = vpop.f32.mrb[0].mxu0
  %3706 = vdwg.mxu0
  %3707 = vmatprep.subr.bf16.mxu0 0
  %3708 = vmatpush1.bf16.msra.mxu0 %v2578
  %3709 = vmatprep.subr.bf16.mxu0 0
  %3710 = vmatpush1.bf16.msra.mxu0 %v2579
  %3711 = vmatprep.subr.bf16.mxu0 0
  %3712 = vmatpush1.bf16.msra.mxu0 %v2580
  %3713 = vmatprep.subr.bf16.mxu0 0
  %3714 = vmatpush1.bf16.msra.mxu0 %v2581
  %3715 = vmatprep.subr.bf16.mxu0 0
  %3716 = vmatpush1.bf16.msra.mxu0 %v2582
  %3717 = vmatprep.subr.bf16.mxu0 0
  %3718 = vmatpush1.bf16.msra.mxu0 %v2583
  %3719 = vmatprep.subr.bf16.mxu0 0
  %3720 = vmatpush1.bf16.msra.mxu0 %v2584
  %3721 = vmatprep.subr.bf16.mxu0 0
  %3722 = vmatpush1.bf16.msra.mxu0 %v2585
  %3723 = vmatprep.subr.bf16.mxu0 0
  %3724 = vmatpush1.bf16.msra.mxu0 %v2586
  %3725 = vmatprep.subr.bf16.mxu0 0
  %3726 = vmatpush1.bf16.msra.mxu0 %v2587
  %3727 = vmatprep.subr.bf16.mxu0 0
  %3728 = vmatpush1.bf16.msra.mxu0 %v2588
  %3729 = vmatprep.subr.bf16.mxu0 0
  %3730 = vmatpush1.bf16.msra.mxu0 %v2589
  %3731 = vmatprep.subr.bf16.mxu0 0
  %3732 = vmatpush1.bf16.msra.mxu0 %v2590
  %3733 = vmatprep.subr.bf16.mxu0 0
  %3734 = vmatpush1.bf16.msra.mxu0 %v2591
  %3735 = vmatprep.subr.bf16.mxu0 0
  %3736 = vmatpush1.bf16.msra.mxu0 %v2592
  %3737 = vmatprep.subr.bf16.mxu0 0
  %3738 = vmatpush1.bf16.msra.mxu0 %v2593
  %3739 = vmatprep.mubr.bf16.mxu0 %v1253
  %3740 = vmatmul.mubr.bf16.gmra.mrb[0].mxu0 %v1252
  %v3741 = vpop.f32.mrb[0].mxu0
  %v3742 = vadd.f32 %v3645, %v3741
  %v3743 = vpop.f32.mrb[0].mxu0
  %v3744 = vpop.f32.mrb[0].mxu0
  %v3745 = vadd.f32 %v3648, %v3744
  %v3746 = vpop.f32.mrb[0].mxu0
  %3747 = vmatprep.mubr.bf16.mxu0 %v1278
  %3748 = vmatmul.mubr.bf16.gmra.mrb[0].mxu0 %v1277
  %v3749 = vpop.f32.mrb[0].mxu0
  %v3750 = vadd.f32 %v3653, %v3749
  %v3751 = vpop.f32.mrb[0].mxu0
  %v3752 = vpop.f32.mrb[0].mxu0
  %v3753 = vadd.f32 %v3656, %v3752
  %v3754 = vpop.f32.mrb[0].mxu0
  %3755 = vmatprep.mubr.bf16.mxu0 %v1303
  %3756 = vmatmul.mubr.bf16.gmra.mrb[0].mxu0 %v1302
  %v3757 = vpop.f32.mrb[0].mxu0
  %v3758 = vadd.f32 %v3661, %v3757
  %v3759 = vpop.f32.mrb[0].mxu0
  %v3760 = vpop.f32.mrb[0].mxu0
  %v3761 = vadd.f32 %v3664, %v3760
  %v3762 = vpop.f32.mrb[0].mxu0
  %3763 = vmatprep.mubr.bf16.mxu0 %v1328
  %3764 = vmatmul.mubr.bf16.gmra.mrb[0].mxu0 %v1327
  %v3765 = vpop.f32.mrb[0].mxu0
  %v3766 = vadd.f32 %v3669, %v3765
  %v3767 = vpop.f32.mrb[0].mxu0
  %v3768 = vpop.f32.mrb[0].mxu0
  %v3769 = vadd.f32 %v3672, %v3768
  %v3770 = vpop.f32.mrb[0].mxu0
  %3771 = vmatprep.mubr.bf16.mxu0 %v1353
  %3772 = vmatmul.mubr.bf16.gmra.mrb[0].mxu0 %v1352
  %v3773 = vpop.f32.mrb[0].mxu0
  %v3774 = vadd.f32 %v3677, %v3773
  %v3775 = vpop.f32.mrb[0].mxu0
  %v3776 = vpop.f32.mrb[0].mxu0
  %v3777 = vadd.f32 %v3680, %v3776
  %v3778 = vpop.f32.mrb[0].mxu0
  %3779 = vmatprep.mubr.bf16.mxu0 %v1378
  %3780 = vmatmul.mubr.bf16.gmra.mrb[0].mxu0 %v1377
  %v3781 = vpop.f32.mrb[0].mxu0
  %v3782 = vadd.f32 %v3685, %v3781
  %v3783 = vpop.f32.mrb[0].mxu0
  %v3784 = vpop.f32.mrb[0].mxu0
  %v3785 = vadd.f32 %v3688, %v3784
  %v3786 = vpop.f32.mrb[0].mxu0
  %3787 = vmatprep.mubr.bf16.mxu0 %v1403
  %3788 = vmatmul.mubr.bf16.gmra.mrb[0].mxu0 %v1402
  %v3789 = vpop.f32.mrb[0].mxu0
  %v3790 = vadd.f32 %v3693, %v3789
  %v3791 = vpop.f32.mrb[0].mxu0
  %v3792 = vpop.f32.mrb[0].mxu0
  %v3793 = vadd.f32 %v3696, %v3792
  %v3794 = vpop.f32.mrb[0].mxu0
  %3795 = vmatprep.mubr.bf16.mxu0 %v1428
  %3796 = vmatmul.mubr.bf16.gmra.mrb[0].mxu0 %v1427
  %v3797 = vpop.f32.mrb[0].mxu0
  %v3798 = vadd.f32 %v3701, %v3797
  %v3799 = vpop.f32.mrb[0].mxu0
  %v3800 = vpop.f32.mrb[0].mxu0
  %v3801 = vadd.f32 %v3704, %v3800
  %v3802 = vpop.f32.mrb[0].mxu0
  %3803 = vdwg.mxu0
  %3804 = vmatprep.subr.bf16.mxu0 0
  %3805 = vmatpush1.bf16.msra.mxu0 %v2594
  %3806 = vmatprep.subr.bf16.mxu0 0
  %3807 = vmatpush1.bf16.msra.mxu0 %v2595
  %3808 = vmatprep.subr.bf16.mxu0 0
  %3809 = vmatpush1.bf16.msra.mxu0 %v2596
  %3810 = vmatprep.subr.bf16.mxu0 0
  %3811 = vmatpush1.bf16.msra.mxu0 %v2597
  %3812 = vmatprep.subr.bf16.mxu0 0
  %3813 = vmatpush1.bf16.msra.mxu0 %v2598
  %3814 = vmatprep.subr.bf16.mxu0 0
  %3815 = vmatpush1.bf16.msra.mxu0 %v2599
  %3816 = vmatprep.subr.bf16.mxu0 0
  %3817 = vmatpush1.bf16.msra.mxu0 %v2600
  %3818 = vmatprep.subr.bf16.mxu0 0
  %3819 = vmatpush1.bf16.msra.mxu0 %v2601
  %3820 = vmatprep.subr.bf16.mxu0 0
  %3821 = vmatpush1.bf16.msra.mxu0 %v2602
  %3822 = vmatprep.subr.bf16.mxu0 0
  %3823 = vmatpush1.bf16.msra.mxu0 %v2603
  %3824 = vmatprep.subr.bf16.mxu0 0
  %3825 = vmatpush1.bf16.msra.mxu0 %v2604
  %3826 = vmatprep.subr.bf16.mxu0 0
  %3827 = vmatpush1.bf16.msra.mxu0 %v2605
  %3828 = vmatprep.subr.bf16.mxu0 0
  %3829 = vmatpush1.bf16.msra.mxu0 %v2606
  %3830 = vmatprep.subr.bf16.mxu0 0
  %3831 = vmatpush1.bf16.msra.mxu0 %v2607
  %3832 = vmatprep.subr.bf16.mxu0 0
  %3833 = vmatpush1.bf16.msra.mxu0 %v2608
  %3834 = vmatprep.subr.bf16.mxu0 0
  %3835 = vmatpush1.bf16.msra.mxu0 %v2609
  %3836 = vmatprep.mubr.bf16.mxu0 %v1255
  %3837 = vmatmul.mubr.bf16.gmra.mrb[0].mxu0 %v1254
  %v3838 = vpop.f32.mrb[0].mxu0
  %v3839 = vadd.f32 %v3742, %v3838
  %v3840 = vpop.f32.mrb[0].mxu0
  %v3841 = vpop.f32.mrb[0].mxu0
  %v3842 = vadd.f32 %v3745, %v3841
  %v3843 = vpop.f32.mrb[0].mxu0
  %3844 = vmatprep.mubr.bf16.mxu0 %v1280
  %3845 = vmatmul.mubr.bf16.gmra.mrb[0].mxu0 %v1279
  %v3846 = vpop.f32.mrb[0].mxu0
  %v3847 = vadd.f32 %v3750, %v3846
  %v3848 = vpop.f32.mrb[0].mxu0
  %v3849 = vpop.f32.mrb[0].mxu0
  %v3850 = vadd.f32 %v3753, %v3849
  %v3851 = vpop.f32.mrb[0].mxu0
  %3852 = vmatprep.mubr.bf16.mxu0 %v1305
  %3853 = vmatmul.mubr.bf16.gmra.mrb[0].mxu0 %v1304
  %v3854 = vpop.f32.mrb[0].mxu0
  %v3855 = vadd.f32 %v3758, %v3854
  %v3856 = vpop.f32.mrb[0].mxu0
  %v3857 = vpop.f32.mrb[0].mxu0
  %v3858 = vadd.f32 %v3761, %v3857
  %v3859 = vpop.f32.mrb[0].mxu0
  %3860 = vmatprep.mubr.bf16.mxu0 %v1330
  %3861 = vmatmul.mubr.bf16.gmra.mrb[0].mxu0 %v1329
  %v3862 = vpop.f32.mrb[0].mxu0
  %v3863 = vadd.f32 %v3766, %v3862
  %v3864 = vpop.f32.mrb[0].mxu0
  %v3865 = vpop.f32.mrb[0].mxu0
  %v3866 = vadd.f32 %v3769, %v3865
  %v3867 = vpop.f32.mrb[0].mxu0
  %3868 = vmatprep.mubr.bf16.mxu0 %v1355
  %3869 = vmatmul.mubr.bf16.gmra.mrb[0].mxu0 %v1354
  %v3870 = vpop.f32.mrb[0].mxu0
  %v3871 = vadd.f32 %v3774, %v3870
  %v3872 = vpop.f32.mrb[0].mxu0
  %v3873 = vpop.f32.mrb[0].mxu0
  %v3874 = vadd.f32 %v3777, %v3873
  %v3875 = vpop.f32.mrb[0].mxu0
  %3876 = vmatprep.mubr.bf16.mxu0 %v1380
  %3877 = vmatmul.mubr.bf16.gmra.mrb[0].mxu0 %v1379
  %v3878 = vpop.f32.mrb[0].mxu0
  %v3879 = vadd.f32 %v3782, %v3878
  %v3880 = vpop.f32.mrb[0].mxu0
  %v3881 = vpop.f32.mrb[0].mxu0
  %v3882 = vadd.f32 %v3785, %v3881
  %v3883 = vpop.f32.mrb[0].mxu0
  %3884 = vmatprep.mubr.bf16.mxu0 %v1405
  %3885 = vmatmul.mubr.bf16.gmra.mrb[0].mxu0 %v1404
  %v3886 = vpop.f32.mrb[0].mxu0
  %v3887 = vadd.f32 %v3790, %v3886
  %v3888 = vpop.f32.mrb[0].mxu0
  %v3889 = vpop.f32.mrb[0].mxu0
  %v3890 = vadd.f32 %v3793, %v3889
  %v3891 = vpop.f32.mrb[0].mxu0
  %3892 = vmatprep.mubr.bf16.mxu0 %v1430
  %3893 = vmatmul.mubr.bf16.gmra.mrb[0].mxu0 %v1429
  %v3894 = vpop.f32.mrb[0].mxu0
  %v3895 = vadd.f32 %v3798, %v3894
  %v3896 = vpop.f32.mrb[0].mxu0
  %v3897 = vpop.f32.mrb[0].mxu0
  %v3898 = vadd.f32 %v3801, %v3897
  %v3899 = vpop.f32.mrb[0].mxu0
  %3900 = vdwg.mxu0
  %3901 = vmatprep.subr.bf16.mxu0 0
  %3902 = vmatpush1.bf16.msra.mxu0 %v2610
  %3903 = vmatprep.subr.bf16.mxu0 0
  %3904 = vmatpush1.bf16.msra.mxu0 %v2611
  %3905 = vmatprep.subr.bf16.mxu0 0
  %3906 = vmatpush1.bf16.msra.mxu0 %v2612
  %3907 = vmatprep.subr.bf16.mxu0 0
  %3908 = vmatpush1.bf16.msra.mxu0 %v2613
  %3909 = vmatprep.subr.bf16.mxu0 0
  %3910 = vmatpush1.bf16.msra.mxu0 %v2614
  %3911 = vmatprep.subr.bf16.mxu0 0
  %3912 = vmatpush1.bf16.msra.mxu0 %v2615
  %3913 = vmatprep.subr.bf16.mxu0 0
  %3914 = vmatpush1.bf16.msra.mxu0 %v2616
  %3915 = vmatprep.subr.bf16.mxu0 0
  %3916 = vmatpush1.bf16.msra.mxu0 %v2617
  %3917 = vmatprep.subr.bf16.mxu0 0
  %3918 = vmatpush1.bf16.msra.mxu0 %v2618
  %3919 = vmatprep.subr.bf16.mxu0 0
  %3920 = vmatpush1.bf16.msra.mxu0 %v2619
  %3921 = vmatprep.subr.bf16.mxu0 0
  %3922 = vmatpush1.bf16.msra.mxu0 %v2620
  %3923 = vmatprep.subr.bf16.mxu0 0
  %3924 = vmatpush1.bf16.msra.mxu0 %v2621
  %3925 = vmatprep.subr.bf16.mxu0 0
  %3926 = vmatpush1.bf16.msra.mxu0 %v2622
  %3927 = vmatprep.subr.bf16.mxu0 0
  %3928 = vmatpush1.bf16.msra.mxu0 %v2623
  %3929 = vmatprep.subr.bf16.mxu0 0
  %3930 = vmatpush1.bf16.msra.mxu0 %v2624
  %3931 = vmatprep.subr.bf16.mxu0 0
  %3932 = vmatpush1.bf16.msra.mxu0 %v2625
  %3933 = vmatprep.mubr.bf16.mxu0 %v1257
  %3934 = vmatmul.mubr.bf16.gmra.mrb[0].mxu0 %v1256
  %v3935 = vpop.f32.mrb[0].mxu0
  %v3936 = vadd.f32 %v3839, %v3935
  %v3937 = vpop.f32.mrb[0].mxu0
  %v3938 = vpop.f32.mrb[0].mxu0
  %v3939 = vadd.f32 %v3842, %v3938
  %v3940 = vpop.f32.mrb[0].mxu0
  %3941 = vmatprep.mubr.bf16.mxu0 %v1282
  %3942 = vmatmul.mubr.bf16.gmra.mrb[0].mxu0 %v1281
  %v3943 = vpop.f32.mrb[0].mxu0
  %v3944 = vadd.f32 %v3847, %v3943
  %v3945 = vpop.f32.mrb[0].mxu0
  %v3946 = vpop.f32.mrb[0].mxu0
  %v3947 = vadd.f32 %v3850, %v3946
  %v3948 = vpop.f32.mrb[0].mxu0
  %3949 = vmatprep.mubr.bf16.mxu0 %v1307
  %3950 = vmatmul.mubr.bf16.gmra.mrb[0].mxu0 %v1306
  %v3951 = vpop.f32.mrb[0].mxu0
  %v3952 = vadd.f32 %v3855, %v3951
  %v3953 = vpop.f32.mrb[0].mxu0
  %v3954 = vpop.f32.mrb[0].mxu0
  %v3955 = vadd.f32 %v3858, %v3954
  %v3956 = vpop.f32.mrb[0].mxu0
  %3957 = vmatprep.mubr.bf16.mxu0 %v1332
  %3958 = vmatmul.mubr.bf16.gmra.mrb[0].mxu0 %v1331
  %v3959 = vpop.f32.mrb[0].mxu0
  %v3960 = vadd.f32 %v3863, %v3959
  %v3961 = vpop.f32.mrb[0].mxu0
  %v3962 = vpop.f32.mrb[0].mxu0
  %v3963 = vadd.f32 %v3866, %v3962
  %v3964 = vpop.f32.mrb[0].mxu0
  %3965 = vmatprep.mubr.bf16.mxu0 %v1357
  %3966 = vmatmul.mubr.bf16.gmra.mrb[0].mxu0 %v1356
  %v3967 = vpop.f32.mrb[0].mxu0
  %v3968 = vadd.f32 %v3871, %v3967
  %v3969 = vpop.f32.mrb[0].mxu0
  %v3970 = vpop.f32.mrb[0].mxu0
  %v3971 = vadd.f32 %v3874, %v3970
  %v3972 = vpop.f32.mrb[0].mxu0
  %3973 = vmatprep.mubr.bf16.mxu0 %v1382
  %3974 = vmatmul.mubr.bf16.gmra.mrb[0].mxu0 %v1381
  %v3975 = vpop.f32.mrb[0].mxu0
  %v3976 = vadd.f32 %v3879, %v3975
  %v3977 = vpop.f32.mrb[0].mxu0
  %v3978 = vpop.f32.mrb[0].mxu0
  %v3979 = vadd.f32 %v3882, %v3978
  %v3980 = vpop.f32.mrb[0].mxu0
  %3981 = vmatprep.mubr.bf16.mxu0 %v1407
  %3982 = vmatmul.mubr.bf16.gmra.mrb[0].mxu0 %v1406
  %v3983 = vpop.f32.mrb[0].mxu0
  %v3984 = vadd.f32 %v3887, %v3983
  %v3985 = vpop.f32.mrb[0].mxu0
  %v3986 = vpop.f32.mrb[0].mxu0
  %v3987 = vadd.f32 %v3890, %v3986
  %v3988 = vpop.f32.mrb[0].mxu0
  %3989 = vmatprep.mubr.bf16.mxu0 %v1432
  %3990 = vmatmul.mubr.bf16.gmra.mrb[0].mxu0 %v1431
  %v3991 = vpop.f32.mrb[0].mxu0
  %v3992 = vadd.f32 %v3895, %v3991
  %v3993 = vpop.f32.mrb[0].mxu0
  %v3994 = vpop.f32.mrb[0].mxu0
  %v3995 = vadd.f32 %v3898, %v3994
  %v3996 = vpop.f32.mrb[0].mxu0
  %3997 = vdwg.mxu0
  %3998 = vmatprep.subr.bf16.mxu0 0
  %3999 = vmatpush1.bf16.msra.mxu0 %v2626
  %4000 = vmatprep.subr.bf16.mxu0 0
  %4001 = vmatpush1.bf16.msra.mxu0 %v2627
  %4002 = vmatprep.subr.bf16.mxu0 0
  %4003 = vmatpush1.bf16.msra.mxu0 %v2628
  %4004 = vmatprep.subr.bf16.mxu0 0
  %4005 = vmatpush1.bf16.msra.mxu0 %v2629
  %4006 = vmatprep.subr.bf16.mxu0 0
  %4007 = vmatpush1.bf16.msra.mxu0 %v2630
  %4008 = vmatprep.subr.bf16.mxu0 0
  %4009 = vmatpush1.bf16.msra.mxu0 %v2631
  %4010 = vmatprep.subr.bf16.mxu0 0
  %4011 = vmatpush1.bf16.msra.mxu0 %v2632
  %4012 = vmatprep.subr.bf16.mxu0 0
  %4013 = vmatpush1.bf16.msra.mxu0 %v2633
  %4014 = vmatprep.subr.bf16.mxu0 0
  %4015 = vmatpush1.bf16.msra.mxu0 0
  %4016 = vmatprep.subr.bf16.mxu0 0
  %4017 = vmatpush1.bf16.msra.mxu0 0
  %4018 = vmatprep.subr.bf16.mxu0 0
  %4019 = vmatpush1.bf16.msra.mxu0 0
  %4020 = vmatprep.subr.bf16.mxu0 0
  %4021 = vmatpush1.bf16.msra.mxu0 0
  %4022 = vmatprep.subr.bf16.mxu0 0
  %4023 = vmatpush1.bf16.msra.mxu0 0
  %4024 = vmatprep.subr.bf16.mxu0 0
  %4025 = vmatpush1.bf16.msra.mxu0 0
  %4026 = vmatprep.subr.bf16.mxu0 0
  %4027 = vmatpush1.bf16.msra.mxu0 0
  %4028 = vmatprep.subr.bf16.mxu0 0
  %4029 = vmatpush1.bf16.msra.mxu0 0
  %4030 = vmatprep.mubr.bf16.mxu0 0
  %4031 = vmatmul.mubr.bf16.gmra.mrb[0].mxu0 %v1258
  %v4032 = vpop.f32.mrb[0].mxu0
  %v4033 = vadd.f32 %v3936, %v4032
  %v4034 = vpop.f32.mrb[0].mxu0
  %v4035 = vpop.f32.mrb[0].mxu0
  %v4036 = vadd.f32 %v3939, %v4035
  %v4037 = vpop.f32.mrb[0].mxu0
  %4038 = vmatprep.mubr.bf16.mxu0 0
  %4039 = vmatmul.mubr.bf16.gmra.mrb[0].mxu0 %v1283
  %v4040 = vpop.f32.mrb[0].mxu0
  %v4041 = vadd.f32 %v3944, %v4040
  %v4042 = vpop.f32.mrb[0].mxu0
  %v4043 = vpop.f32.mrb[0].mxu0
  %v4044 = vadd.f32 %v3947, %v4043
  %v4045 = vpop.f32.mrb[0].mxu0
  %4046 = vmatprep.mubr.bf16.mxu0 0
  %4047 = vmatmul.mubr.bf16.gmra.mrb[0].mxu0 %v1308
  %v4048 = vpop.f32.mrb[0].mxu0
  %v4049 = vadd.f32 %v3952, %v4048
  %v4050 = vpop.f32.mrb[0].mxu0
  %v4051 = vpop.f32.mrb[0].mxu0
  %v4052 = vadd.f32 %v3955, %v4051
  %v4053 = vpop.f32.mrb[0].mxu0
  %4054 = vmatprep.mubr.bf16.mxu0 0
  %4055 = vmatmul.mubr.bf16.gmra.mrb[0].mxu0 %v1333
  %v4056 = vpop.f32.mrb[0].mxu0
  %v4057 = vadd.f32 %v3960, %v4056
  %v4058 = vpop.f32.mrb[0].mxu0
  %v4059 = vpop.f32.mrb[0].mxu0
  %v4060 = vadd.f32 %v3963, %v4059
  %v4061 = vpop.f32.mrb[0].mxu0
  %4062 = vmatprep.mubr.bf16.mxu0 0
  %4063 = vmatmul.mubr.bf16.gmra.mrb[0].mxu0 %v1358
  %v4064 = vpop.f32.mrb[0].mxu0
  %v4065 = vadd.f32 %v3968, %v4064
  %v4066 = vpop.f32.mrb[0].mxu0
  %v4067 = vpop.f32.mrb[0].mxu0
  %v4068 = vadd.f32 %v3971, %v4067
  %v4069 = vpop.f32.mrb[0].mxu0
  %4070 = vmatprep.mubr.bf16.mxu0 0
  %4071 = vmatmul.mubr.bf16.gmra.mrb[0].mxu0 %v1383
  %v4072 = vpop.f32.mrb[0].mxu0
  %v4073 = vadd.f32 %v3976, %v4072
  %v4074 = vpop.f32.mrb[0].mxu0
  %v4075 = vpop.f32.mrb[0].mxu0
  %v4076 = vadd.f32 %v3979, %v4075
  %v4077 = vpop.f32.mrb[0].mxu0
  %4078 = vmatprep.mubr.bf16.mxu0 0
  %4079 = vmatmul.mubr.bf16.gmra.mrb[0].mxu0 %v1408
  %v4080 = vpop.f32.mrb[0].mxu0
  %v4081 = vadd.f32 %v3984, %v4080
  %v4082 = vpop.f32.mrb[0].mxu0
  %v4083 = vpop.f32.mrb[0].mxu0
  %v4084 = vadd.f32 %v3987, %v4083
  %v4085 = vpop.f32.mrb[0].mxu0
  %4086 = vmatprep.mubr.bf16.mxu0 0
  %4087 = vmatmul.mubr.bf16.gmra.mrb[0].mxu0 %v1433
  %v4088 = vpop.f32.mrb[0].mxu0
  %v4089 = vadd.f32 %v3992, %v4088
  %v4090 = vpop.f32.mrb[0].mxu0
  %v4091 = vpop.f32.mrb[0].mxu0
  %v4092 = vadd.f32 %v3995, %v4091
  %v4093 = vpop.f32.mrb[0].mxu0
  %4094 = vdwg.mxu0
  %v4095 = vld [vmem:[%s2] sm:$0x1]
  %v4097 = vlaneseq
  %v4098 = vshrl.u32 %v4097, 7
  %v4099 = vsub.s32 0, %v4098
  %v4100 = vrot.slane %v4095, %v4099
  %v4102 = vmul.f32 %v4033, %v4100
  %v4103 = vmul.f32 %v4036, %v4100
  %v4104 = vmul.f32 %v4041, %v4100
  %v4105 = vmul.f32 %v4044, %v4100
  %v4106 = vmul.f32 %v4049, %v4100
  %v4107 = vmul.f32 %v4052, %v4100
  %v4108 = vmul.f32 %v4057, %v4100
  %v4109 = vmul.f32 %v4060, %v4100
  %v4110 = vmul.f32 %v4065, %v4100
  %v4111 = vmul.f32 %v4068, %v4100
  %v4112 = vmul.f32 %v4073, %v4100
  %v4113 = vmul.f32 %v4076, %v4100
  %v4114 = vmul.f32 %v4081, %v4100
  %v4115 = vmul.f32 %v4084, %v4100
  %v4116 = vmul.f32 %v4089, %v4100
  %v4117 = vmul.f32 %v4092, %v4100
  %v4118 = vld [vmem:[%s3] sm:$0x1]
  %v4120 = vlaneseq
  %v4121 = vshrl.u32 %v4120, 7
  %v4122 = vsub.s32 0, %v4121
  %v4123 = vrot.slane %v4118, %v4122
  %v4125 = vadd.f32 %v4102, %v4123
  %v4126 = vadd.f32 %v4103, %v4123
  %v4127 = vadd.f32 %v4104, %v4123
  %v4128 = vadd.f32 %v4105, %v4123
  %v4129 = vadd.f32 %v4106, %v4123
  %v4130 = vadd.f32 %v4107, %v4123
  %v4131 = vadd.f32 %v4108, %v4123
  %v4132 = vadd.f32 %v4109, %v4123
  %v4133 = vadd.f32 %v4110, %v4123
  %v4134 = vadd.f32 %v4111, %v4123
  %v4135 = vadd.f32 %v4112, %v4123
  %v4136 = vadd.f32 %v4113, %v4123
  %v4137 = vadd.f32 %v4114, %v4123
  %v4138 = vadd.f32 %v4115, %v4123
  %v4139 = vadd.f32 %v4116, %v4123
  %v4140 = vadd.f32 %v4117, %v4123
  %v4141 = vmax.f32 %v4125, 0.0
  %v4142 = vmax.f32 %v4126, 0.0
  %v4143 = vmax.f32 %v4127, 0.0
  %v4144 = vmax.f32 %v4128, 0.0
  %v4145 = vmax.f32 %v4129, 0.0
  %v4146 = vmax.f32 %v4130, 0.0
  %v4147 = vmax.f32 %v4131, 0.0
  %v4148 = vmax.f32 %v4132, 0.0
  %v4149 = vmax.f32 %v4133, 0.0
  %v4150 = vmax.f32 %v4134, 0.0
  %v4151 = vmax.f32 %v4135, 0.0
  %v4152 = vmax.f32 %v4136, 0.0
  %v4153 = vmax.f32 %v4137, 0.0
  %v4154 = vmax.f32 %v4138, 0.0
  %v4155 = vmax.f32 %v4139, 0.0
  %v4156 = vmax.f32 %v4140, 0.0
  %4157 = vst [vmem:[%s4] sm:$0xff] %v4141
  %4158 = vst [vmem:[%s4 + $0x8] sm:$0xff] %v4142
  %4159 = vst [vmem:[%s4 + $0x10] sm:$0xff] %v4143
  %4160 = vst [vmem:[%s4 + $0x18] sm:$0xff] %v4144
  %4161 = vst [vmem:[%s4 + $0x20] sm:$0xff] %v4145
  %4162 = vst [vmem:[%s4 + $0x28] sm:$0xff] %v4146
  %4163 = vst [vmem:[%s4 + $0x30] sm:$0xff] %v4147
  %4164 = vst [vmem:[%s4 + $0x38] sm:$0xff] %v4148
  %4165 = vst [vmem:[%s4 + $0x40] sm:$0xff] %v4149
  %4166 = vst [vmem:[%s4 + $0x48] sm:$0xff] %v4150
  %4167 = vst [vmem:[%s4 + $0x50] sm:$0xff] %v4151
  %4168 = vst [vmem:[%s4 + $0x58] sm:$0xff] %v4152
  %4169 = vst [vmem:[%s4 + $0x60] sm:$0xff] %v4153
  %4170 = vst [vmem:[%s4 + $0x68] sm:$0xff] %v4154
  %4171 = vst [vmem:[%s4 + $0x70] sm:$0xff] %v4155
  %4172 = vst [vmem:[%s4 + $0x78] sm:$0xff] %v4156
  // Predicated region
  $region18: #{lenet_forward_pallas.6} parent=0 // pred_check
    _
  $region19: #{lenet_forward_pallas.6} parent=0 // pred_check_branch
    %4174 = sbr.rel (0) target = $region21
  $region20: #{lenet_forward_pallas.6} parent=0 // pred_region
    _
  $region21: #{lenet_forward_pallas.6} parent=0 // pred_fallthru
    _
  // Predicated region
  $region22: #{lenet_forward_pallas.6} parent=0 // pred_check
    _
  $region23: #{lenet_forward_pallas.6} parent=0 // pred_check_branch
    %4176 = sbr.rel (0) target = $region25
  $region24: #{lenet_forward_pallas.6} parent=0 // pred_region
    _
  $region25: #{lenet_forward_pallas.6} parent=0 // pred_fallthru
    _

</llo_original>
